<compile_context>
chip_gen: v7x
topology: tpu7x:2x2x1
jax: 0.10.0
libtpu: 0.0.40
codegen_flags: <defaults>
</compile_context>

<pallas_src>
import functools

import jax
import jax.numpy as jnp
from jax import lax
from jax.experimental import pallas as pl
from jax.experimental.pallas import tpu as pltpu


def _cma_kernel(H, W, saw_ref, x1_ref, x2_ref, wf_ref, fc_ref, masks_ref,
                o_ref, stage_ref):
    # saw_ref   : SMEM (18,) f32      SpatialAttention conv1.weight (1,2,3,3) flattened
    # x1_ref    : VMEM (Nb, C, HW)    inp1 block
    # x2_ref    : VMEM (Nb, C, HW)    inp2 block
    # wf_ref    : VMEM (2, 2, C)      fusion 1x1 conv weight; [0]=inp1 half, [1]=inp2 half
    # fc_ref    : VMEM (C, 2*hidden)  packed CA MLP: [:, :hidden]=fc1^T, [:, hidden:]=fc2
    # masks_ref : VMEM (9, HW)        per-tap output-position edge masks for the 3x3 conv
    # o_ref     : VMEM (Nb, C, HW)    fused output block
    # stage_ref : VMEM (Nb, C, HW) f32  staging buffer for g1_ca (caps vreg pressure)
    HW = H * W
    Nb, C, _ = x1_ref.shape
    hidden = fc_ref.shape[1] // 2
    inv_hw = jnp.float32(1.0 / HW)
    inv_c = jnp.float32(1.0 / C)

    # f32 compute (no-op for f32 inputs; for bf16 this is where the up-cast happens).
    x1 = x1_ref[...].astype(jnp.float32)                 # (Nb, C, HW)
    x2 = x2_ref[...].astype(jnp.float32)                 # (Nb, C, HW)

    # ---- 1x1 fusion conv on the MXU: per batch elem (2,C)@(C,HW) -> (Nb,2,HW).
    wf = wf_ref[...]                                     # (2, 2, C)
    w1 = jnp.broadcast_to(wf[0][None], (Nb, 2, C))
    w2 = jnp.broadcast_to(wf[1][None], (Nb, 2, C))
    pre = (jnp.einsum('boc,bcl->bol', w1, x1,
                      preferred_element_type=jnp.float32,
                      precision=lax.Precision.HIGHEST)
           + jnp.einsum('boc,bcl->bol', w2, x2,
                        preferred_element_type=jnp.float32,
                        precision=lax.Precision.HIGHEST))           # (Nb, 2, HW)
    gates = jnp.sum(jax.nn.sigmoid(pre), axis=2, keepdims=True) * inv_hw  # (Nb, 2, 1)
    s_i = gates[:, 0:1, :]                               # (Nb, 1, 1)
    s_e = gates[:, 1:2, :]                               # (Nb, 1, 1)

    g1 = s_i * x1                                        # (Nb, C, HW)

    # ---- ChannelAttention(g1): shared MLP on HW-mean and HW-max, sigmoid, scale.
    avg_c = jnp.sum(g1, axis=2, keepdims=True) * inv_hw  # (Nb, C, 1)
    max_c = jnp.max(g1, axis=2, keepdims=True)           # (Nb, C, 1)
    fc = fc_ref[...]                                     # (C, 2*hidden)
    fc1t = fc[:, :hidden][None]                          # (1, C, hidden)
    fc2m = fc[:, hidden:][None]                          # (1, C, hidden)
    h_avg = jnp.maximum(jnp.sum(fc1t * avg_c, axis=1, keepdims=True), 0.0)  # (Nb,1,hidden)
    h_max = jnp.maximum(jnp.sum(fc1t * max_c, axis=1, keepdims=True), 0.0)
    o_avg = jnp.sum(fc2m * h_avg, axis=2, keepdims=True)  # (Nb, C, 1)
    o_max = jnp.sum(fc2m * h_max, axis=2, keepdims=True)
    ca = jax.nn.sigmoid(o_avg + o_max)                    # (Nb, C, 1)

    # Stage g1_ca in VMEM so x1/g1 vregs can retire before the SA section.
    stage_ref[...] = ca * g1                              # (Nb, C, HW) f32
    g1ca = stage_ref[...]

    # ---- SpatialAttention(g1_ca): channel mean/max -> 3x3 "same" conv via lane rolls.
    avg_s = jnp.sum(g1ca, axis=1) * inv_c                 # (Nb, HW)
    max_s = jnp.max(g1ca, axis=1)                         # (Nb, HW)
    stacked = jnp.stack([avg_s, max_s], axis=0)           # (2, Nb, HW)

    masks = masks_ref[...]                                # (9, HW)
    acc = jnp.zeros((Nb, HW), jnp.float32)
    for ky in range(3):
        for kx in range(3):
            t = ky * 3 + kx
            d = (ky - 1) * W + (kx - 1)                   # flat source offset
            rolled = stacked if d == 0 else pltpu.roll(stacked, (-d) % HW, axis=2)
            contrib = saw_ref[t] * rolled[0] + saw_ref[9 + t] * rolled[1]
            if ky != 1 or kx != 1:                        # edge taps need masking
                contrib = contrib * masks[t:t + 1, :]
            acc = acc + contrib
    sa = jax.nn.sigmoid(acc)                              # (Nb, HW)

    fuse = sa[:, None, :] * stage_ref[...] + s_e * x2_ref[...].astype(jnp.float32)
    o_ref[...] = fuse.astype(o_ref.dtype)


def _pick_batch_block(n, c, hw, dsize):
    """Largest divisor of n that keeps >=2 grid steps (v7x megacore) and keeps the
    per-step VMEM footprint (double-buffered streams + f32 staging + live f32
    temporaries) conservatively under the v5e 16 MiB scoped-VMEM default."""
    budget = 10 * 1024 * 1024
    per_elem = 6 * dsize + 24        # x1/x2/out double-buffered + stage + ~live f32 temps
    best = 1
    for nb in range(1, n + 1):
        if n % nb:
            continue
        steps = n // nb
        if nb * c * hw * per_elem > budget:
            continue
        if n >= 2 and steps < 2:
            continue                 # keep >= 2 grid steps so megacore can split work
        best = nb
    return best


def cross_modal_aggregation(inp1, inp2, conv_w, fc1_w, fc2_w, sa_conv_w, *,
                            batch_block=None):
    """inp1/inp2: (N, C, H, W).  conv_w: (2, 2C, 1, 1); fc1_w: (C//16, C, 1, 1);
    fc2_w: (C, C//16, 1, 1); sa_conv_w: (1, 2, 3, 3).  All convs bias-free."""
    n, c, h, w = inp1.shape
    hw = h * w
    hidden = fc1_w.shape[0]
    dsize = jnp.dtype(inp1.dtype).itemsize

    # Lane-dense layout: flatten spatial dims so the minor dim is H*W (>=128).
    x1 = inp1.reshape(n, c, hw)
    x2 = inp2.reshape(n, c, hw)

    # Fusion conv weight (2, 2C, 1, 1) -> (2 [inp1|inp2 half], 2 [out ch], C).
    wf2 = conv_w.reshape(2, 2 * c).astype(jnp.float32)
    wfuse = jnp.stack([wf2[:, :c], wf2[:, c:]], axis=0)                   # (2, 2, C)

    # CA MLP weights packed lane-dense: [:, :hidden] = fc1^T, [:, hidden:] = fc2.
    fc1t = jnp.transpose(fc1_w.reshape(hidden, c)).astype(jnp.float32)    # (C, hidden)
    fc2m = fc2_w.reshape(c, hidden).astype(jnp.float32)                   # (C, hidden)
    fc_pack = jnp.concatenate([fc1t, fc2m], axis=1)                       # (C, 2*hidden)

    saw = sa_conv_w.reshape(-1).astype(jnp.float32)                       # (18,)

    # Per-tap output-position edge masks for the roll-based 3x3 "same" conv.
    col = jnp.arange(hw, dtype=jnp.int32) % w
    row = jnp.arange(hw, dtype=jnp.int32) // w
    mask_rows = []
    for ky in range(3):
        for kx in range(3):
            m = jnp.ones((hw,), jnp.float32)
            if ky == 0:
                m = m * (row != 0)
            if ky == 2:
                m = m * (row != h - 1)
            if kx == 0:
                m = m * (col != 0)
            if kx == 2:
                m = m * (col != w - 1)
            mask_rows.append(m)
    masks = jnp.stack(mask_rows, axis=0).astype(jnp.float32)              # (9, HW)

    nb = batch_block if batch_block is not None else _pick_batch_block(n, c, hw, dsize)
    assert n % nb == 0, (n, nb)

    cost = pl.CostEstimate(
        flops=int(n * (8 * c * hw + 24 * c * hw + 40 * hw)),
        transcendentals=int(n * (3 * hw + 2 * c)),
        bytes_accessed=int(3 * n * c * hw * dsize),
    )

    # TODO(synk): add a channel-tile ("arbitrary") grid axis with running sum/max
    # scratch for very large C*HW where even a single-batch block exceeds the VMEM
    # budget (v5e: 16 MiB scoped default, v7x: 64 MiB physical).
    kernel = functools.partial(_cma_kernel, h, w)
    out = pl.pallas_call(
        kernel,
        out_shape=jax.ShapeDtypeStruct((n, c, hw), inp1.dtype),
        grid=(n // nb,),
        in_specs=[
            pl.BlockSpec(memory_space=pltpu.MemorySpace.SMEM),      # SA conv taps (18,)
            pl.BlockSpec((nb, c, hw), lambda i: (i, 0, 0)),         # inp1 block
            pl.BlockSpec((nb, c, hw), lambda i: (i, 0, 0)),         # inp2 block
            pl.BlockSpec((2, 2, c), lambda i: (0, 0, 0)),           # fusion conv w
            pl.BlockSpec((c, 2 * hidden), lambda i: (0, 0)),        # packed CA MLP w
            pl.BlockSpec((9, hw), lambda i: (0, 0)),                # tap edge masks
        ],
        out_specs=pl.BlockSpec((nb, c, hw), lambda i: (i, 0, 0)),
        scratch_shapes=[pltpu.VMEM((nb, c, hw), jnp.float32)],      # g1_ca staging
        compiler_params=pltpu.CompilerParams(dimension_semantics=("parallel",)),
        cost_estimate=cost,
    )(saw, x1, x2, wfuse, fc_pack, masks)
    return out.reshape(n, c, h, w)


def _reference(inp1, inp2, conv_w, fc1_w, fc2_w, sa_w):
    # Plain-JAX mirror of the PyTorch Cross_Modal_Aggregation.forward.
    dn = ("NCHW", "OIHW", "NCHW")
    x = jnp.concatenate([inp1, inp2], axis=1)
    x = lax.conv_general_dilated(x, conv_w, (1, 1), ((0, 0), (0, 0)), dimension_numbers=dn)
    x_i = jnp.mean(jax.nn.sigmoid(x[:, 0:1]), axis=(2, 3), keepdims=True)
    x_e = jnp.mean(jax.nn.sigmoid(x[:, 1:2]), axis=(2, 3), keepdims=True)
    g1 = x_i * inp1
    g2 = x_e * inp2

    avg = jnp.mean(g1, axis=(2, 3), keepdims=True)
    mx = jnp.max(g1, axis=(2, 3), keepdims=True)

    def mlp(v):
        hdn = lax.conv_general_dilated(v, fc1_w, (1, 1), ((0, 0), (0, 0)), dimension_numbers=dn)
        hdn = jax.nn.relu(hdn)
        return lax.conv_general_dilated(hdn, fc2_w, (1, 1), ((0, 0), (0, 0)), dimension_numbers=dn)

    ca = jax.nn.sigmoid(mlp(avg) + mlp(mx))
    g1_ca = ca * g1

    a = jnp.mean(g1_ca, axis=1, keepdims=True)
    m = jnp.max(g1_ca, axis=1, keepdims=True)
    cat = jnp.concatenate([a, m], axis=1)
    s = lax.conv_general_dilated(cat, sa_w, (1, 1), ((1, 1), (1, 1)), dimension_numbers=dn)
    sa = jax.nn.sigmoid(s)
    return sa * g1_ca + g2


if __name__ == "__main__":
    key = jax.random.PRNGKey(0)
    k1, k2, k3, k4, k5, k6 = jax.random.split(key, 6)
    N, C, H, W = 4, 32, 16, 16       # N=4 -> batch_block=2, grid=(2,) (megacore-friendly)
    hidden = C // 16                 # ChannelAttention hardcodes //16

    inp1 = jax.random.normal(k1, (N, C, H, W), dtype=jnp.float32)
    inp2 = jax.random.normal(k2, (N, C, H, W), dtype=jnp.float32)
    conv_w = jax.random.normal(k3, (2, 2 * C, 1, 1), dtype=jnp.float32) * 0.1
    fc1_w = jax.random.normal(k4, (hidden, C, 1, 1), dtype=jnp.float32) * 0.2
    fc2_w = jax.random.normal(k5, (C, hidden, 1, 1), dtype=jnp.float32) * 0.2
    sa_w = jax.random.normal(k6, (1, 2, 3, 3), dtype=jnp.float32) * 0.2

    out = cross_modal_aggregation(inp1, inp2, conv_w, fc1_w, fc2_w, sa_w)
    out = jax.block_until_ready(out)

    ref = _reference(inp1, inp2, conv_w, fc1_w, fc2_w, sa_w)
    assert out.shape == (N, C, H, W), out.shape
    err = float(jnp.max(jnp.abs(out - ref)))
    assert jnp.allclose(out, ref, atol=5e-5, rtol=1e-5), err
    print("KERNEL_OK")
</pallas_src>

<mosaic_0001>
module attributes {stable_mosaic.version = 11 : i64} {
  func.func @_cma_kernel(%arg0: i32, %arg1: memref<18xf32, #tpu.memory_space<smem>>, %arg2: memref<2x32x256xf32, #tpu.memory_space<vmem>>, %arg3: memref<2x32x256xf32, #tpu.memory_space<vmem>>, %arg4: memref<2x2x32xf32, #tpu.memory_space<vmem>>, %arg5: memref<32x4xf32, #tpu.memory_space<vmem>>, %arg6: memref<9x256xf32, #tpu.memory_space<vmem>>, %arg7: memref<2x32x256xf32, #tpu.memory_space<vmem>>, %arg8: memref<2x32x256xf32, #tpu.memory_space<vmem>>) attributes {dimension_semantics = [#tpu.dimension_semantics<parallel>], iteration_bounds = array<i64: 2>, scalar_prefetch = 0 : i64, scratch_operands = 1 : i64, tpu.core_type = #tpu.core_type<tc>, window_params = [{transform_indices = @transform_0, window_bounds = array<i64: 18>}, {transform_indices = @transform_1, window_bounds = array<i64: 2, 32, 256>}, {transform_indices = @transform_2, window_bounds = array<i64: 2, 32, 256>}, {pipeline_mode = #tpu.pipeline_mode<synchronous>, transform_indices = @transform_3, window_bounds = array<i64: 2, 2, 32>}, {pipeline_mode = #tpu.pipeline_mode<synchronous>, transform_indices = @transform_4, window_bounds = array<i64: 32, 4>}, {pipeline_mode = #tpu.pipeline_mode<synchronous>, transform_indices = @transform_5, window_bounds = array<i64: 9, 256>}, {transform_indices = @transform_6, window_bounds = array<i64: 2, 32, 256>}]} {
    %c0 = arith.constant 0 : index
    %c0_0 = arith.constant 0 : index
    %c0_1 = arith.constant 0 : index
    %0 = vector.load %arg2[%c0, %c0_0, %c0_1] : memref<2x32x256xf32, #tpu.memory_space<vmem>>, vector<2x32x256xf32>
    %c0_2 = arith.constant 0 : index
    %c0_3 = arith.constant 0 : index
    %c0_4 = arith.constant 0 : index
    %1 = vector.load %arg3[%c0_2, %c0_3, %c0_4] : memref<2x32x256xf32, #tpu.memory_space<vmem>>, vector<2x32x256xf32>
    %c0_5 = arith.constant 0 : index
    %c0_6 = arith.constant 0 : index
    %c0_7 = arith.constant 0 : index
    %2 = vector.load %arg4[%c0_5, %c0_6, %c0_7] : memref<2x2x32xf32, #tpu.memory_space<vmem>>, vector<2x2x32xf32>
    %3 = vector.extract_strided_slice %2 {offsets = [0, 0, 0], sizes = [1, 2, 32], strides = [1, 1, 1]} : vector<2x2x32xf32> to vector<1x2x32xf32>
    %4 = vector.shape_cast %3 : vector<1x2x32xf32> to vector<2x32xf32>
    %5 = vector.shape_cast %4 : vector<2x32xf32> to vector<1x2x32xf32>
    %6 = vector.shape_cast %5 : vector<1x2x32xf32> to vector<1x2x32xf32>
    %7 = vector.broadcast %6 : vector<1x2x32xf32> to vector<2x2x32xf32>
    %8 = vector.extract_strided_slice %2 {offsets = [1, 0, 0], sizes = [1, 2, 32], strides = [1, 1, 1]} : vector<2x2x32xf32> to vector<1x2x32xf32>
    %9 = vector.shape_cast %8 : vector<1x2x32xf32> to vector<2x32xf32>
    %10 = vector.shape_cast %9 : vector<2x32xf32> to vector<1x2x32xf32>
    %11 = vector.shape_cast %10 : vector<1x2x32xf32> to vector<1x2x32xf32>
    %12 = vector.broadcast %11 : vector<1x2x32xf32> to vector<2x2x32xf32>
    "tpu.trace_start"() <{level = 10 : i32, message = "boc,bcl->bol"}> : () -> ()
    %cst = arith.constant dense<0.000000e+00> : vector<2x2x256xf32>
    %13 = tpu.matmul %7, %0, %cst {dimension_numbers = #tpu.dot_dimension_numbers<[2], [1], [1], [2], [0, 0, 0, 1, 1, 2], [0], [0]>, precision = #tpu.contract_precision<fp32>} : vector<2x2x32xf32>, vector<2x32x256xf32>, vector<2x2x256xf32> -> vector<2x2x256xf32>
    %cst_8 = arith.constant dense<0.000000e+00> : vector<2x2x256xf32>
    %14 = tpu.matmul %12, %1, %cst_8 {dimension_numbers = #tpu.dot_dimension_numbers<[2], [1], [1], [2], [0, 0, 0, 1, 1, 2], [0], [0]>, precision = #tpu.contract_precision<fp32>} : vector<2x2x32xf32>, vector<2x32x256xf32>, vector<2x2x256xf32> -> vector<2x2x256xf32>
    "tpu.trace_stop"() : () -> ()
    %15 = arith.addf %13, %14 : vector<2x2x256xf32>
    %16 = arith.negf %15 : vector<2x2x256xf32>
    %17 = math.exp %16 : vector<2x2x256xf32>
    %cst_9 = arith.constant 1.000000e+00 : f32
    %18 = vector.broadcast %cst_9 : f32 to vector<2x2x256xf32>
    %19 = arith.addf %18, %17 : vector<2x2x256xf32>
    %20 = arith.divf %18, %19 : vector<2x2x256xf32>
    %cst_10 = arith.constant dense<0.000000e+00> : vector<2x2xf32>
    %21 = vector.multi_reduction <add>, %20, %cst_10 [2] : vector<2x2x256xf32> to vector<2x2xf32>
    %22 = vector.shape_cast %21 : vector<2x2xf32> to vector<2x2x1xf32>
    %cst_11 = arith.constant 3.906250e-03 : f32
    %23 = vector.broadcast %cst_11 : f32 to vector<2x2x1xf32>
    %24 = arith.mulf %22, %23 : vector<2x2x1xf32>
    %25 = vector.extract_strided_slice %24 {offsets = [0, 0, 0], sizes = [2, 1, 1], strides = [1, 1, 1]} : vector<2x2x1xf32> to vector<2x1x1xf32>
    %26 = vector.extract_strided_slice %24 {offsets = [0, 1, 0], sizes = [2, 1, 1], strides = [1, 1, 1]} : vector<2x2x1xf32> to vector<2x1x1xf32>
    %27 = vector.broadcast %25 : vector<2x1x1xf32> to vector<2x32x256xf32>
    %28 = arith.mulf %27, %0 : vector<2x32x256xf32>
    %cst_12 = arith.constant dense<0.000000e+00> : vector<2x32xf32>
    %29 = vector.multi_reduction <add>, %28, %cst_12 [2] : vector<2x32x256xf32> to vector<2x32xf32>
    %30 = vector.shape_cast %29 : vector<2x32xf32> to vector<2x32x1xf32>
    %cst_13 = arith.constant 3.906250e-03 : f32
    %31 = vector.broadcast %cst_13 : f32 to vector<2x32x1xf32>
    %32 = arith.mulf %30, %31 : vector<2x32x1xf32>
    %cst_14 = arith.constant dense<0xFF800000> : vector<2x32xf32>
    %33 = vector.multi_reduction <maximumf>, %28, %cst_14 [2] : vector<2x32x256xf32> to vector<2x32xf32>
    %34 = vector.shape_cast %33 : vector<2x32xf32> to vector<2x32x1xf32>
    %c0_15 = arith.constant 0 : index
    %c0_16 = arith.constant 0 : index
    %35 = vector.load %arg5[%c0_15, %c0_16] : memref<32x4xf32, #tpu.memory_space<vmem>>, vector<32x4xf32>
    %36 = vector.extract_strided_slice %35 {offsets = [0, 0], sizes = [32, 2], strides = [1, 1]} : vector<32x4xf32> to vector<32x2xf32>
    %37 = vector.shape_cast %36 : vector<32x2xf32> to vector<1x32x2xf32>
    %38 = vector.extract_strided_slice %35 {offsets = [0, 2], sizes = [32, 2], strides = [1, 1]} : vector<32x4xf32> to vector<32x2xf32>
    %39 = vector.shape_cast %38 : vector<32x2xf32> to vector<1x32x2xf32>
    %40 = vector.broadcast %37 : vector<1x32x2xf32> to vector<2x32x2xf32>
    %41 = vector.broadcast %32 : vector<2x32x1xf32> to vector<2x32x2xf32>
    %42 = arith.mulf %40, %41 : vector<2x32x2xf32>
    %cst_17 = arith.constant dense<0.000000e+00> : vector<2x2xf32>
    %43 = vector.multi_reduction <add>, %42, %cst_17 [1] : vector<2x32x2xf32> to vector<2x2xf32>
    %44 = vector.shape_cast %43 : vector<2x2xf32> to vector<2x1x2xf32>
    %cst_18 = arith.constant 0.000000e+00 : f32
    %45 = vector.broadcast %cst_18 : f32 to vector<2x1x2xf32>
    %46 = arith.maximumf %44, %45 : vector<2x1x2xf32>
    %47 = vector.broadcast %37 : vector<1x32x2xf32> to vector<2x32x2xf32>
    %48 = vector.broadcast %34 : vector<2x32x1xf32> to vector<2x32x2xf32>
    %49 = arith.mulf %47, %48 : vector<2x32x2xf32>
    %cst_19 = arith.constant dense<0.000000e+00> : vector<2x2xf32>
    %50 = vector.multi_reduction <add>, %49, %cst_19 [1] : vector<2x32x2xf32> to vector<2x2xf32>
    %51 = vector.shape_cast %50 : vector<2x2xf32> to vector<2x1x2xf32>
    %cst_20 = arith.constant 0.000000e+00 : f32
    %52 = vector.broadcast %cst_20 : f32 to vector<2x1x2xf32>
    %53 = arith.maximumf %51, %52 : vector<2x1x2xf32>
    %54 = vector.broadcast %39 : vector<1x32x2xf32> to vector<2x32x2xf32>
    %55 = vector.broadcast %46 : vector<2x1x2xf32> to vector<2x32x2xf32>
    %56 = arith.mulf %54, %55 : vector<2x32x2xf32>
    %cst_21 = arith.constant dense<0.000000e+00> : vector<2x32xf32>
    %57 = vector.multi_reduction <add>, %56, %cst_21 [2] : vector<2x32x2xf32> to vector<2x32xf32>
    %58 = vector.shape_cast %57 : vector<2x32xf32> to vector<2x32x1xf32>
    %59 = vector.broadcast %39 : vector<1x32x2xf32> to vector<2x32x2xf32>
    %60 = vector.broadcast %53 : vector<2x1x2xf32> to vector<2x32x2xf32>
    %61 = arith.mulf %59, %60 : vector<2x32x2xf32>
    %cst_22 = arith.constant dense<0.000000e+00> : vector<2x32xf32>
    %62 = vector.multi_reduction <add>, %61, %cst_22 [2] : vector<2x32x2xf32> to vector<2x32xf32>
    %63 = vector.shape_cast %62 : vector<2x32xf32> to vector<2x32x1xf32>
    %64 = arith.addf %58, %63 : vector<2x32x1xf32>
    %65 = arith.negf %64 : vector<2x32x1xf32>
    %66 = math.exp %65 : vector<2x32x1xf32>
    %cst_23 = arith.constant 1.000000e+00 : f32
    %67 = vector.broadcast %cst_23 : f32 to vector<2x32x1xf32>
    %68 = arith.addf %67, %66 : vector<2x32x1xf32>
    %69 = arith.divf %67, %68 : vector<2x32x1xf32>
    %70 = vector.broadcast %69 : vector<2x32x1xf32> to vector<2x32x256xf32>
    %71 = arith.mulf %70, %28 : vector<2x32x256xf32>
    %c0_24 = arith.constant 0 : index
    %c0_25 = arith.constant 0 : index
    %c0_26 = arith.constant 0 : index
    %72 = vector.load %arg8[%c0_24, %c0_25, %c0_26] : memref<2x32x256xf32, #tpu.memory_space<vmem>>, vector<2x32x256xf32>
    tpu.vector_store %arg8[%c0_24, %c0_25, %c0_26], %71 {strides = array<i32>} : memref<2x32x256xf32, #tpu.memory_space<vmem>>, vector<2x32x256xf32>,
    %c0_27 = arith.constant 0 : index
    %c0_28 = arith.constant 0 : index
    %c0_29 = arith.constant 0 : index
    %73 = vector.load %arg8[%c0_27, %c0_28, %c0_29] : memref<2x32x256xf32, #tpu.memory_space<vmem>>, vector<2x32x256xf32>
    %cst_30 = arith.constant dense<0.000000e+00> : vector<2x256xf32>
    %74 = vector.multi_reduction <add>, %73, %cst_30 [1] : vector<2x32x256xf32> to vector<2x256xf32>
    %cst_31 = arith.constant 3.125000e-02 : f32
    %75 = vector.broadcast %cst_31 : f32 to vector<2x256xf32>
    %76 = arith.mulf %74, %75 : vector<2x256xf32>
    %cst_32 = arith.constant dense<0xFF800000> : vector<2x256xf32>
    %77 = vector.multi_reduction <maximumf>, %73, %cst_32 [1] : vector<2x32x256xf32> to vector<2x256xf32>
    %78 = vector.shape_cast %76 : vector<2x256xf32> to vector<1x2x256xf32>
    %79 = vector.shape_cast %77 : vector<2x256xf32> to vector<1x2x256xf32>
    %80 = tpu.concatenate %78, %79 in 0 : vector<1x2x256xf32>, vector<1x2x256xf32> -> vector<2x2x256xf32>
    %c0_33 = arith.constant 0 : index
    %c0_34 = arith.constant 0 : index
    %81 = vector.load %arg6[%c0_33, %c0_34] : memref<9x256xf32, #tpu.memory_space<vmem>>, vector<9x256xf32>
    %cst_35 = arith.constant 0.000000e+00 : f32
    %82 = vector.broadcast %cst_35 : f32 to vector<2x256xf32>
    %c17_i32 = arith.constant 17 : i32
    %83 = tpu.dynamic_rotate %80 by %c17_i32 dim 2 : vector<2x2x256xf32>, i32 -> vector<2x2x256xf32>
    %c0_36 = arith.constant 0 : index
    %84 = memref.load %arg1[%c0_36] : memref<18xf32, #tpu.memory_space<smem>>
    %85 = vector.extract_strided_slice %83 {offsets = [0, 0, 0], sizes = [1, 2, 256], strides = [1, 1, 1]} : vector<2x2x256xf32> to vector<1x2x256xf32>
    %86 = vector.shape_cast %85 : vector<1x2x256xf32> to vector<2x256xf32>
    %87 = vector.broadcast %84 : f32 to vector<2x256xf32>
    %88 = arith.mulf %87, %86 : vector<2x256xf32>
    %c9 = arith.constant 9 : index
    %89 = memref.load %arg1[%c9] : memref<18xf32, #tpu.memory_space<smem>>
    %90 = vector.extract_strided_slice %83 {offsets = [1, 0, 0], sizes = [1, 2, 256], strides = [1, 1, 1]} : vector<2x2x256xf32> to vector<1x2x256xf32>
    %91 = vector.shape_cast %90 : vector<1x2x256xf32> to vector<2x256xf32>
    %92 = vector.broadcast %89 : f32 to vector<2x256xf32>
    %93 = arith.mulf %92, %91 : vector<2x256xf32>
    %94 = arith.addf %88, %93 : vector<2x256xf32>
    %95 = vector.extract_strided_slice %81 {offsets = [0, 0], sizes = [1, 256], strides = [1, 1]} : vector<9x256xf32> to vector<1x256xf32>
    %96 = vector.broadcast %95 : vector<1x256xf32> to vector<2x256xf32>
    %97 = arith.mulf %94, %96 : vector<2x256xf32>
    %98 = arith.addf %82, %97 : vector<2x256xf32>
    %c16_i32 = arith.constant 16 : i32
    %99 = tpu.dynamic_rotate %80 by %c16_i32 dim 2 : vector<2x2x256xf32>, i32 -> vector<2x2x256xf32>
    %c1 = arith.constant 1 : index
    %100 = memref.load %arg1[%c1] : memref<18xf32, #tpu.memory_space<smem>>
    %101 = vector.extract_strided_slice %99 {offsets = [0, 0, 0], sizes = [1, 2, 256], strides = [1, 1, 1]} : vector<2x2x256xf32> to vector<1x2x256xf32>
    %102 = vector.shape_cast %101 : vector<1x2x256xf32> to vector<2x256xf32>
    %103 = vector.broadcast %100 : f32 to vector<2x256xf32>
    %104 = arith.mulf %103, %102 : vector<2x256xf32>
    %c10 = arith.constant 10 : index
    %105 = memref.load %arg1[%c10] : memref<18xf32, #tpu.memory_space<smem>>
    %106 = vector.extract_strided_slice %99 {offsets = [1, 0, 0], sizes = [1, 2, 256], strides = [1, 1, 1]} : vector<2x2x256xf32> to vector<1x2x256xf32>
    %107 = vector.shape_cast %106 : vector<1x2x256xf32> to vector<2x256xf32>
    %108 = vector.broadcast %105 : f32 to vector<2x256xf32>
    %109 = arith.mulf %108, %107 : vector<2x256xf32>
    %110 = arith.addf %104, %109 : vector<2x256xf32>
    %111 = vector.extract_strided_slice %81 {offsets = [1, 0], sizes = [1, 256], strides = [1, 1]} : vector<9x256xf32> to vector<1x256xf32>
    %112 = vector.broadcast %111 : vector<1x256xf32> to vector<2x256xf32>
    %113 = arith.mulf %110, %112 : vector<2x256xf32>
    %114 = arith.addf %98, %113 : vector<2x256xf32>
    %c15_i32 = arith.constant 15 : i32
    %115 = tpu.dynamic_rotate %80 by %c15_i32 dim 2 : vector<2x2x256xf32>, i32 -> vector<2x2x256xf32>
    %c2 = arith.constant 2 : index
    %116 = memref.load %arg1[%c2] : memref<18xf32, #tpu.memory_space<smem>>
    %117 = vector.extract_strided_slice %115 {offsets = [0, 0, 0], sizes = [1, 2, 256], strides = [1, 1, 1]} : vector<2x2x256xf32> to vector<1x2x256xf32>
    %118 = vector.shape_cast %117 : vector<1x2x256xf32> to vector<2x256xf32>
    %119 = vector.broadcast %116 : f32 to vector<2x256xf32>
    %120 = arith.mulf %119, %118 : vector<2x256xf32>
    %c11 = arith.constant 11 : index
    %121 = memref.load %arg1[%c11] : memref<18xf32, #tpu.memory_space<smem>>
    %122 = vector.extract_strided_slice %115 {offsets = [1, 0, 0], sizes = [1, 2, 256], strides = [1, 1, 1]} : vector<2x2x256xf32> to vector<1x2x256xf32>
    %123 = vector.shape_cast %122 : vector<1x2x256xf32> to vector<2x256xf32>
    %124 = vector.broadcast %121 : f32 to vector<2x256xf32>
    %125 = arith.mulf %124, %123 : vector<2x256xf32>
    %126 = arith.addf %120, %125 : vector<2x256xf32>
    %127 = vector.extract_strided_slice %81 {offsets = [2, 0], sizes = [1, 256], strides = [1, 1]} : vector<9x256xf32> to vector<1x256xf32>
    %128 = vector.broadcast %127 : vector<1x256xf32> to vector<2x256xf32>
    %129 = arith.mulf %126, %128 : vector<2x256xf32>
    %130 = arith.addf %114, %129 : vector<2x256xf32>
    %c1_i32 = arith.constant 1 : i32
    %131 = tpu.dynamic_rotate %80 by %c1_i32 dim 2 : vector<2x2x256xf32>, i32 -> vector<2x2x256xf32>
    %c3 = arith.constant 3 : index
    %132 = memref.load %arg1[%c3] : memref<18xf32, #tpu.memory_space<smem>>
    %133 = vector.extract_strided_slice %131 {offsets = [0, 0, 0], sizes = [1, 2, 256], strides = [1, 1, 1]} : vector<2x2x256xf32> to vector<1x2x256xf32>
    %134 = vector.shape_cast %133 : vector<1x2x256xf32> to vector<2x256xf32>
    %135 = vector.broadcast %132 : f32 to vector<2x256xf32>
    %136 = arith.mulf %135, %134 : vector<2x256xf32>
    %c12 = arith.constant 12 : index
    %137 = memref.load %arg1[%c12] : memref<18xf32, #tpu.memory_space<smem>>
    %138 = vector.extract_strided_slice %131 {offsets = [1, 0, 0], sizes = [1, 2, 256], strides = [1, 1, 1]} : vector<2x2x256xf32> to vector<1x2x256xf32>
    %139 = vector.shape_cast %138 : vector<1x2x256xf32> to vector<2x256xf32>
    %140 = vector.broadcast %137 : f32 to vector<2x256xf32>
    %141 = arith.mulf %140, %139 : vector<2x256xf32>
    %142 = arith.addf %136, %141 : vector<2x256xf32>
    %143 = vector.extract_strided_slice %81 {offsets = [3, 0], sizes = [1, 256], strides = [1, 1]} : vector<9x256xf32> to vector<1x256xf32>
    %144 = vector.broadcast %143 : vector<1x256xf32> to vector<2x256xf32>
    %145 = arith.mulf %142, %144 : vector<2x256xf32>
    %146 = arith.addf %130, %145 : vector<2x256xf32>
    %c4 = arith.constant 4 : index
    %147 = memref.load %arg1[%c4] : memref<18xf32, #tpu.memory_space<smem>>
    %148 = vector.extract_strided_slice %80 {offsets = [0, 0, 0], sizes = [1, 2, 256], strides = [1, 1, 1]} : vector<2x2x256xf32> to vector<1x2x256xf32>
    %149 = vector.shape_cast %148 : vector<1x2x256xf32> to vector<2x256xf32>
    %150 = vector.broadcast %147 : f32 to vector<2x256xf32>
    %151 = arith.mulf %150, %149 : vector<2x256xf32>
    %c13 = arith.constant 13 : index
    %152 = memref.load %arg1[%c13] : memref<18xf32, #tpu.memory_space<smem>>
    %153 = vector.extract_strided_slice %80 {offsets = [1, 0, 0], sizes = [1, 2, 256], strides = [1, 1, 1]} : vector<2x2x256xf32> to vector<1x2x256xf32>
    %154 = vector.shape_cast %153 : vector<1x2x256xf32> to vector<2x256xf32>
    %155 = vector.broadcast %152 : f32 to vector<2x256xf32>
    %156 = arith.mulf %155, %154 : vector<2x256xf32>
    %157 = arith.addf %151, %156 : vector<2x256xf32>
    %158 = arith.addf %146, %157 : vector<2x256xf32>
    %c255_i32 = arith.constant 255 : i32
    %159 = tpu.dynamic_rotate %80 by %c255_i32 dim 2 : vector<2x2x256xf32>, i32 -> vector<2x2x256xf32>
    %c5 = arith.constant 5 : index
    %160 = memref.load %arg1[%c5] : memref<18xf32, #tpu.memory_space<smem>>
    %161 = vector.extract_strided_slice %159 {offsets = [0, 0, 0], sizes = [1, 2, 256], strides = [1, 1, 1]} : vector<2x2x256xf32> to vector<1x2x256xf32>
    %162 = vector.shape_cast %161 : vector<1x2x256xf32> to vector<2x256xf32>
    %163 = vector.broadcast %160 : f32 to vector<2x256xf32>
    %164 = arith.mulf %163, %162 : vector<2x256xf32>
    %c14 = arith.constant 14 : index
    %165 = memref.load %arg1[%c14] : memref<18xf32, #tpu.memory_space<smem>>
    %166 = vector.extract_strided_slice %159 {offsets = [1, 0, 0], sizes = [1, 2, 256], strides = [1, 1, 1]} : vector<2x2x256xf32> to vector<1x2x256xf32>
    %167 = vector.shape_cast %166 : vector<1x2x256xf32> to vector<2x256xf32>
    %168 = vector.broadcast %165 : f32 to vector<2x256xf32>
    %169 = arith.mulf %168, %167 : vector<2x256xf32>
    %170 = arith.addf %164, %169 : vector<2x256xf32>
    %171 = vector.extract_strided_slice %81 {offsets = [5, 0], sizes = [1, 256], strides = [1, 1]} : vector<9x256xf32> to vector<1x256xf32>
    %172 = vector.broadcast %171 : vector<1x256xf32> to vector<2x256xf32>
    %173 = arith.mulf %170, %172 : vector<2x256xf32>
    %174 = arith.addf %158, %173 : vector<2x256xf32>
    %c241_i32 = arith.constant 241 : i32
    %175 = tpu.dynamic_rotate %80 by %c241_i32 dim 2 : vector<2x2x256xf32>, i32 -> vector<2x2x256xf32>
    %c6 = arith.constant 6 : index
    %176 = memref.load %arg1[%c6] : memref<18xf32, #tpu.memory_space<smem>>
    %177 = vector.extract_strided_slice %175 {offsets = [0, 0, 0], sizes = [1, 2, 256], strides = [1, 1, 1]} : vector<2x2x256xf32> to vector<1x2x256xf32>
    %178 = vector.shape_cast %177 : vector<1x2x256xf32> to vector<2x256xf32>
    %179 = vector.broadcast %176 : f32 to vector<2x256xf32>
    %180 = arith.mulf %179, %178 : vector<2x256xf32>
    %c15 = arith.constant 15 : index
    %181 = memref.load %arg1[%c15] : memref<18xf32, #tpu.memory_space<smem>>
    %182 = vector.extract_strided_slice %175 {offsets = [1, 0, 0], sizes = [1, 2, 256], strides = [1, 1, 1]} : vector<2x2x256xf32> to vector<1x2x256xf32>
    %183 = vector.shape_cast %182 : vector<1x2x256xf32> to vector<2x256xf32>
    %184 = vector.broadcast %181 : f32 to vector<2x256xf32>
    %185 = arith.mulf %184, %183 : vector<2x256xf32>
    %186 = arith.addf %180, %185 : vector<2x256xf32>
    %187 = vector.extract_strided_slice %81 {offsets = [6, 0], sizes = [1, 256], strides = [1, 1]} : vector<9x256xf32> to vector<1x256xf32>
    %188 = vector.broadcast %187 : vector<1x256xf32> to vector<2x256xf32>
    %189 = arith.mulf %186, %188 : vector<2x256xf32>
    %190 = arith.addf %174, %189 : vector<2x256xf32>
    %c240_i32 = arith.constant 240 : i32
    %191 = tpu.dynamic_rotate %80 by %c240_i32 dim 2 : vector<2x2x256xf32>, i32 -> vector<2x2x256xf32>
    %c7 = arith.constant 7 : index
    %192 = memref.load %arg1[%c7] : memref<18xf32, #tpu.memory_space<smem>>
    %193 = vector.extract_strided_slice %191 {offsets = [0, 0, 0], sizes = [1, 2, 256], strides = [1, 1, 1]} : vector<2x2x256xf32> to vector<1x2x256xf32>
    %194 = vector.shape_cast %193 : vector<1x2x256xf32> to vector<2x256xf32>
    %195 = vector.broadcast %192 : f32 to vector<2x256xf32>
    %196 = arith.mulf %195, %194 : vector<2x256xf32>
    %c16 = arith.constant 16 : index
    %197 = memref.load %arg1[%c16] : memref<18xf32, #tpu.memory_space<smem>>
    %198 = vector.extract_strided_slice %191 {offsets = [1, 0, 0], sizes = [1, 2, 256], strides = [1, 1, 1]} : vector<2x2x256xf32> to vector<1x2x256xf32>
    %199 = vector.shape_cast %198 : vector<1x2x256xf32> to vector<2x256xf32>
    %200 = vector.broadcast %197 : f32 to vector<2x256xf32>
    %201 = arith.mulf %200, %199 : vector<2x256xf32>
    %202 = arith.addf %196, %201 : vector<2x256xf32>
    %203 = vector.extract_strided_slice %81 {offsets = [7, 0], sizes = [1, 256], strides = [1, 1]} : vector<9x256xf32> to vector<1x256xf32>
    %204 = vector.broadcast %203 : vector<1x256xf32> to vector<2x256xf32>
    %205 = arith.mulf %202, %204 : vector<2x256xf32>
    %206 = arith.addf %190, %205 : vector<2x256xf32>
    %c239_i32 = arith.constant 239 : i32
    %207 = tpu.dynamic_rotate %80 by %c239_i32 dim 2 : vector<2x2x256xf32>, i32 -> vector<2x2x256xf32>
    %c8 = arith.constant 8 : index
    %208 = memref.load %arg1[%c8] : memref<18xf32, #tpu.memory_space<smem>>
    %209 = vector.extract_strided_slice %207 {offsets = [0, 0, 0], sizes = [1, 2, 256], strides = [1, 1, 1]} : vector<2x2x256xf32> to vector<1x2x256xf32>
    %210 = vector.shape_cast %209 : vector<1x2x256xf32> to vector<2x256xf32>
    %211 = vector.broadcast %208 : f32 to vector<2x256xf32>
    %212 = arith.mulf %211, %210 : vector<2x256xf32>
    %c17 = arith.constant 17 : index
    %213 = memref.load %arg1[%c17] : memref<18xf32, #tpu.memory_space<smem>>
    %214 = vector.extract_strided_slice %207 {offsets = [1, 0, 0], sizes = [1, 2, 256], strides = [1, 1, 1]} : vector<2x2x256xf32> to vector<1x2x256xf32>
    %215 = vector.shape_cast %214 : vector<1x2x256xf32> to vector<2x256xf32>
    %216 = vector.broadcast %213 : f32 to vector<2x256xf32>
    %217 = arith.mulf %216, %215 : vector<2x256xf32>
    %218 = arith.addf %212, %217 : vector<2x256xf32>
    %219 = vector.extract_strided_slice %81 {offsets = [8, 0], sizes = [1, 256], strides = [1, 1]} : vector<9x256xf32> to vector<1x256xf32>
    %220 = vector.broadcast %219 : vector<1x256xf32> to vector<2x256xf32>
    %221 = arith.mulf %218, %220 : vector<2x256xf32>
    %222 = arith.addf %206, %221 : vector<2x256xf32>
    %223 = arith.negf %222 : vector<2x256xf32>
    %224 = math.exp %223 : vector<2x256xf32>
    %cst_37 = arith.constant 1.000000e+00 : f32
    %225 = vector.broadcast %cst_37 : f32 to vector<2x256xf32>
    %226 = arith.addf %225, %224 : vector<2x256xf32>
    %227 = arith.divf %225, %226 : vector<2x256xf32>
    %228 = vector.shape_cast %227 : vector<2x256xf32> to vector<2x1x256xf32>
    %c0_38 = arith.constant 0 : index
    %c0_39 = arith.constant 0 : index
    %c0_40 = arith.constant 0 : index
    %229 = vector.load %arg8[%c0_38, %c0_39, %c0_40] : memref<2x32x256xf32, #tpu.memory_space<vmem>>, vector<2x32x256xf32>
    %230 = vector.broadcast %228 : vector<2x1x256xf32> to vector<2x32x256xf32>
    %231 = arith.mulf %230, %229 : vector<2x32x256xf32>
    %c0_41 = arith.constant 0 : index
    %c0_42 = arith.constant 0 : index
    %c0_43 = arith.constant 0 : index
    %232 = vector.load %arg3[%c0_41, %c0_42, %c0_43] : memref<2x32x256xf32, #tpu.memory_space<vmem>>, vector<2x32x256xf32>
    %233 = vector.broadcast %26 : vector<2x1x1xf32> to vector<2x32x256xf32>
    %234 = arith.mulf %233, %232 : vector<2x32x256xf32>
    %235 = arith.addf %231, %234 : vector<2x32x256xf32>
    %c0_44 = arith.constant 0 : index
    %c0_45 = arith.constant 0 : index
    %c0_46 = arith.constant 0 : index
    %236 = vector.load %arg7[%c0_44, %c0_45, %c0_46] : memref<2x32x256xf32, #tpu.memory_space<vmem>>, vector<2x32x256xf32>
    tpu.vector_store %arg7[%c0_44, %c0_45, %c0_46], %235 {strides = array<i32>} : memref<2x32x256xf32, #tpu.memory_space<vmem>>, vector<2x32x256xf32>,
    return
  }
  func.func @transform_0(%arg0: i32) -> i32 {
    %c0_i32 = arith.constant 0 : i32
    %c0_i32_0 = arith.constant 0 : i32
    return %c0_i32 : i32
  }
  func.func @transform_1(%arg0: i32) -> (i32, i32, i32) {
    %c0_i32 = arith.constant 0 : i32
    %c0_i32_0 = arith.constant 0 : i32
    %c0_i32_1 = arith.constant 0 : i32
    return %arg0, %c0_i32, %c0_i32_0 : i32, i32, i32
  }
  func.func @transform_2(%arg0: i32) -> (i32, i32, i32) {
    %c0_i32 = arith.constant 0 : i32
    %c0_i32_0 = arith.constant 0 : i32
    %c0_i32_1 = arith.constant 0 : i32
    return %arg0, %c0_i32, %c0_i32_0 : i32, i32, i32
  }
  func.func @transform_3(%arg0: i32) -> (i32, i32, i32) {
    %c0_i32 = arith.constant 0 : i32
    %c0_i32_0 = arith.constant 0 : i32
    %c0_i32_1 = arith.constant 0 : i32
    %c0_i32_2 = arith.constant 0 : i32
    return %c0_i32, %c0_i32_0, %c0_i32_1 : i32, i32, i32
  }
  func.func @transform_4(%arg0: i32) -> (i32, i32) {
    %c0_i32 = arith.constant 0 : i32
    %c0_i32_0 = arith.constant 0 : i32
    %c0_i32_1 = arith.constant 0 : i32
    return %c0_i32, %c0_i32_0 : i32, i32
  }
  func.func @transform_5(%arg0: i32) -> (i32, i32) {
    %c0_i32 = arith.constant 0 : i32
    %c0_i32_0 = arith.constant 0 : i32
    %c0_i32_1 = arith.constant 0 : i32
    return %c0_i32, %c0_i32_0 : i32, i32
  }
  func.func @transform_6(%arg0: i32) -> (i32, i32, i32) {
    %c0_i32 = arith.constant 0 : i32
    %c0_i32_0 = arith.constant 0 : i32
    %c0_i32_1 = arith.constant 0 : i32
    return %arg0, %c0_i32, %c0_i32_0 : i32, i32, i32
  }
}

</mosaic_0001>

<llo_original>
// kernel: tpu_custom_call.1
$region0: #{tpu_custom_call.1}
  #allocation0 [shape = 'u32[]', space=smem, size = 0x4, offset = 0x4, fixed_abs, tag = 'smem constant byte address 0x4 - core index']
  #allocation1 [shape = 'u32[144,128]{1,0:T(1,128)}', space=vmem, size = 0x12000, scoped, tag = 'internal scratch']
  #allocation2 [shape = 'f32[2,32,256]{2,1,0:T(8,128)}', space=vmem, size = 0x10000, scoped, tag = 'scratch operand']
  %s0 = inlined_call_operand.vmem [shape: f32[18], index: 0, kind: input, shape index: {}]
  %s1 = inlined_call_operand.hbm [shape: f32[4,32,256], index: 1, kind: input, shape index: {}]
  %s2 = inlined_call_operand.hbm [shape: f32[4,32,256], index: 2, kind: input, shape index: {}]
  %s3 = inlined_call_operand.vmem [shape: f32[2,2,32], index: 3, kind: input, shape index: {}]
  %s4 = inlined_call_operand.vmem [shape: f32[32,4], index: 4, kind: input, shape index: {}]
  %s5 = inlined_call_operand.vmem [shape: f32[9,256], index: 5, kind: input, shape index: {}]
  %s6 = inlined_call_operand.hbm [shape: f32[4,32,256], index: 6, kind: output, shape index: {}]
  %s7 = sld [smem:[#allocation0]]
  $region69: #{tpu_custom_call.1} parent=0
    _
  %s9 = ssub.s32 1, %s7
  %s10 = scalar_select 0, %s9, %s7
  $region1: #{tpu_custom_call.1} parent=0
    #allocation3 [shape = 'u8[512]{0}', space=smem, size = 0x200, scoped, tag = 'input window, operand 0, single buffered']
    #allocation4 [shape = 's32[2]{0}', space=sflag, size = 0x8, scoped, tag = 'scoped memory for tpu_custom_call.1']
    #allocation5 [shape = 's32[2]{0}', space=sflag, size = 0x8, scoped, tag = 'scoped memory for tpu_custom_call.1']
    #allocation6 [shape = 's32[2]{0}', space=sflag, size = 0x8, scoped, tag = 'scoped memory for tpu_custom_call.1']
    #allocation7 [shape = 'u8[131072]{0}', space=vmem, size = 0x20000, scoped, tag = 'input window, operand 1']
    #allocation8 [shape = 'u8[131072]{0}', space=vmem, size = 0x20000, scoped, tag = 'input window, operand 2']
    #allocation9 [shape = 's32[2]{0}', space=sflag, size = 0x8, scoped, tag = 'scoped memory for tpu_custom_call.1']
    #allocation10 [shape = 'u8[131072]{0}', space=vmem, size = 0x20000, scoped, tag = 'output window, operand 0']
    %11 = vsyncpa [#allocation6], 0
    %12 = vsyncpa [#allocation4], 0
    %s13 = scalar_lea.sflag [#allocation4], 1
    %14 = vsyncpa %s13, 0
    %15 = vsyncpa [#allocation9], 0
    %s16 = scalar_lea.sflag [#allocation9], 1
    %17 = vsyncpa %s16, 0
    %18 = vsyncpa [#allocation5], 0
    %s19 = scalar_lea.sflag [#allocation5], 1
    %20 = vsyncpa %s19, 0
    loop: start=0, step=1, limit=4
    $region2: #{tpu_custom_call.1} parent=1 // loop_pre_header
      _
    $region3: #{tpu_custom_call.1} parent=1 // loop_header
      %s22 = sphi 0, %s26
      %p23 = scmp.ge.s32.totalorder %s22, 4
      %s30 = sphi 0, %s30
      %s32 = sphi 0, %s30
      %s33 = sphi 0, %s32
      %s47 = sphi 0, %s33
      %s53 = sphi 0, %s55
      %s56 = sphi 0, %s53
      %s57 = sphi 0, %s56
      %s73 = sphi 0, %s57
      %s79 = sphi 0, %s81
      %s82 = sphi 0, %s79
      %s83 = sphi 0, %s82
      %s99 = sphi 0, %s83
      %s103 = sphi 0, %s103
      %s105 = sphi 0, %s103
      %s106 = sphi 0, %s105
      %s120 = sphi 0, %s106
      %s124 = sphi 0, %s124
      %s126 = sphi 0, %s124
      %s127 = sphi 0, %s126
      %s141 = sphi 0, %s127
      %s145 = sphi 0, %s145
      %s147 = sphi 0, %s145
      %s148 = sphi 0, %s147
      %s162 = sphi 0, %s148
      %s168 = sphi 0, %s170
      %s171 = sphi 0, %s168
      %s172 = sphi 0, %s171
      %s188 = sphi 0, %s172
    $region4: #{tpu_custom_call.1} parent=1 // loop_header_branch
      %25 = sbr.rel (%p23) target = $region8
    $region5: #{tpu_custom_call.1} parent=1 // loop_body
      %s27 = ssub.s32 %s22, 1
      %s28 = ssub.s32 %s22, 2
      %s29 = sadd.s32 %s22, 1
      %s31 = sadd.s32 %s30, 1
      %p34 = scmp.eq.s32.totalorder %s22, 1
      %p35 = scmp.ne.s32.totalorder %s30, %s32
      %p36 = scmp.eq.s32.totalorder %s22, 0
      %p37 = por %p35, %p36
      %p38 = scmp.ne.s32.totalorder %s30, %s32
      %p39 = scmp.eq.s32.totalorder %s27, 1
      %p40 = por %p38, %p39
      %p41 = scmp.ne.s32.totalorder %s32, %s33
      %p42 = scmp.eq.s32.totalorder %s27, 0
      %p43 = por %p41, %p42
      %p44 = scmp.ne.s32.totalorder %s32, %s33
      %p45 = scmp.eq.s32.totalorder %s28, 1
      %p46 = por %p44, %p45
      %p48 = scmp.ne.s32.totalorder %s33, %s47
      %p49 = scmp.eq.s32.totalorder %s28, 0
      %p50 = por %p48, %p49
      %s51 = ssub.s32 %s22, %s29
      %p52 = scmp.eq.s32.totalorder %s51, 0
      %s54 = sadd.s32 %s53, 1
      %s55 = scalar_select %p52, %s53, %s54
      %p58 = pneg %p52
      %p59 = scmp.eq.s32.totalorder %s22, 1
      %p60 = por %p58, %p59
      %p61 = scmp.ne.s32.totalorder %s53, %s56
      %p62 = scmp.eq.s32.totalorder %s22, 0
      %p63 = por %p61, %p62
      %p64 = scmp.ne.s32.totalorder %s53, %s56
      %p65 = scmp.eq.s32.totalorder %s27, 1
      %p66 = por %p64, %p65
      %p67 = scmp.ne.s32.totalorder %s56, %s57
      %p68 = scmp.eq.s32.totalorder %s27, 0
      %p69 = por %p67, %p68
      %p70 = scmp.ne.s32.totalorder %s56, %s57
      %p71 = scmp.eq.s32.totalorder %s28, 1
      %p72 = por %p70, %p71
      %p74 = scmp.ne.s32.totalorder %s57, %s73
      %p75 = scmp.eq.s32.totalorder %s28, 0
      %p76 = por %p74, %p75
      %s77 = ssub.s32 %s22, %s29
      %p78 = scmp.eq.s32.totalorder %s77, 0
      %s80 = sadd.s32 %s79, 1
      %s81 = scalar_select %p78, %s79, %s80
      %p84 = pneg %p78
      %p85 = scmp.eq.s32.totalorder %s22, 1
      %p86 = por %p84, %p85
      %p87 = scmp.ne.s32.totalorder %s79, %s82
      %p88 = scmp.eq.s32.totalorder %s22, 0
      %p89 = por %p87, %p88
      %p90 = scmp.ne.s32.totalorder %s79, %s82
      %p91 = scmp.eq.s32.totalorder %s27, 1
      %p92 = por %p90, %p91
      %p93 = scmp.ne.s32.totalorder %s82, %s83
      %p94 = scmp.eq.s32.totalorder %s27, 0
      %p95 = por %p93, %p94
      %p96 = scmp.ne.s32.totalorder %s82, %s83
      %p97 = scmp.eq.s32.totalorder %s28, 1
      %p98 = por %p96, %p97
      %p100 = scmp.ne.s32.totalorder %s83, %s99
      %p101 = scmp.eq.s32.totalorder %s28, 0
      %p102 = por %p100, %p101
      %s104 = sadd.s32 %s103, 1
      %p107 = scmp.eq.s32.totalorder %s22, 1
      %p108 = scmp.ne.s32.totalorder %s103, %s105
      %p109 = scmp.eq.s32.totalorder %s22, 0
      %p110 = por %p108, %p109
      %p111 = scmp.ne.s32.totalorder %s103, %s105
      %p112 = scmp.eq.s32.totalorder %s27, 1
      %p113 = por %p111, %p112
      %p114 = scmp.ne.s32.totalorder %s105, %s106
      %p115 = scmp.eq.s32.totalorder %s27, 0
      %p116 = por %p114, %p115
      %p117 = scmp.ne.s32.totalorder %s105, %s106
      %p118 = scmp.eq.s32.totalorder %s28, 1
      %p119 = por %p117, %p118
      %p121 = scmp.ne.s32.totalorder %s106, %s120
      %p122 = scmp.eq.s32.totalorder %s28, 0
      %p123 = por %p121, %p122
      %s125 = sadd.s32 %s124, 1
      %p128 = scmp.eq.s32.totalorder %s22, 1
      %p129 = scmp.ne.s32.totalorder %s124, %s126
      %p130 = scmp.eq.s32.totalorder %s22, 0
      %p131 = por %p129, %p130
      %p132 = scmp.ne.s32.totalorder %s124, %s126
      %p133 = scmp.eq.s32.totalorder %s27, 1
      %p134 = por %p132, %p133
      %p135 = scmp.ne.s32.totalorder %s126, %s127
      %p136 = scmp.eq.s32.totalorder %s27, 0
      %p137 = por %p135, %p136
      %p138 = scmp.ne.s32.totalorder %s126, %s127
      %p139 = scmp.eq.s32.totalorder %s28, 1
      %p140 = por %p138, %p139
      %p142 = scmp.ne.s32.totalorder %s127, %s141
      %p143 = scmp.eq.s32.totalorder %s28, 0
      %p144 = por %p142, %p143
      %s146 = sadd.s32 %s145, 1
      %p149 = scmp.eq.s32.totalorder %s22, 1
      %p150 = scmp.ne.s32.totalorder %s145, %s147
      %p151 = scmp.eq.s32.totalorder %s22, 0
      %p152 = por %p150, %p151
      %p153 = scmp.ne.s32.totalorder %s145, %s147
      %p154 = scmp.eq.s32.totalorder %s27, 1
      %p155 = por %p153, %p154
      %p156 = scmp.ne.s32.totalorder %s147, %s148
      %p157 = scmp.eq.s32.totalorder %s27, 0
      %p158 = por %p156, %p157
      %p159 = scmp.ne.s32.totalorder %s147, %s148
      %p160 = scmp.eq.s32.totalorder %s28, 1
      %p161 = por %p159, %p160
      %p163 = scmp.ne.s32.totalorder %s148, %s162
      %p164 = scmp.eq.s32.totalorder %s28, 0
      %p165 = por %p163, %p164
      %s166 = ssub.s32 %s22, %s29
      %p167 = scmp.eq.s32.totalorder %s166, 0
      %s169 = sadd.s32 %s168, 1
      %s170 = scalar_select %p167, %s168, %s169
      %p173 = pneg %p167
      %p174 = scmp.eq.s32.totalorder %s22, 1
      %p175 = por %p173, %p174
      %p176 = scmp.ne.s32.totalorder %s168, %s171
      %p177 = scmp.eq.s32.totalorder %s22, 0
      %p178 = por %p176, %p177
      %p179 = scmp.ne.s32.totalorder %s168, %s171
      %p180 = scmp.eq.s32.totalorder %s27, 1
      %p181 = por %p179, %p180
      %p182 = scmp.ne.s32.totalorder %s171, %s172
      %p183 = scmp.eq.s32.totalorder %s27, 0
      %p184 = por %p182, %p183
      %p185 = scmp.ne.s32.totalorder %s171, %s172
      %p186 = scmp.eq.s32.totalorder %s28, 1
      %p187 = por %p185, %p186
      %p189 = scmp.ne.s32.totalorder %s172, %s188
      %p190 = scmp.eq.s32.totalorder %s28, 0
      %p191 = por %p189, %p190
      %p192 = scmp.le.s32.totalorder 1, %s22
      %p193 = scmp.lt.s32.totalorder %s22, 3
      %p194 = pnand %p192, %p193
      %p195 = pneg %p194
      // Predicated region
      $region9: #{tpu_custom_call.1} parent=5 // pred_check
        _
      $region10: #{tpu_custom_call.1} parent=5 // pred_check_branch
        %197 = sbr.rel (%p194) target = $region12
      $region11: #{tpu_custom_call.1} parent=5 // pred_region
        %s198 = ssub.s32 %s22, 1
        // Predicated region
        $region13: #{tpu_custom_call.1} parent=11 // pred_check
          %p199 = pneg %p43
        $region14: #{tpu_custom_call.1} parent=11 // pred_check_branch
          %201 = sbr.rel (%p199) target = $region16
        $region15: #{tpu_custom_call.1} parent=11 // pred_region
          %s203 = ssub.s32 16, 16
          %204 = vsyncadd [#allocation6], %s203
          %s206 = sshll.u32 %s0, 4
          %s207 = int_to_ptr.vmem [resolvable:$true] %s206
          %209 = dma.vmem_to_smem %s207, 16, [#allocation3], [#allocation6]
        $region16: #{tpu_custom_call.1} parent=11 // pred_fallthru
          _
        // Predicated region
        $region17: #{tpu_custom_call.1} parent=11 // pred_check
          %p210 = pneg %p116
        $region18: #{tpu_custom_call.1} parent=11 // pred_check_branch
          %212 = sbr.rel (%p210) target = $region20
        $region19: #{tpu_custom_call.1} parent=11 // pred_region
          _
        $region20: #{tpu_custom_call.1} parent=11 // pred_fallthru
          _
        // Predicated region
        $region21: #{tpu_custom_call.1} parent=11 // pred_check
          %p213 = pneg %p137
        $region22: #{tpu_custom_call.1} parent=11 // pred_check_branch
          %215 = sbr.rel (%p213) target = $region24
        $region23: #{tpu_custom_call.1} parent=11 // pred_region
          _
        $region24: #{tpu_custom_call.1} parent=11 // pred_fallthru
          _
        // Predicated region
        $region25: #{tpu_custom_call.1} parent=11 // pred_check
          %p216 = pneg %p158
        $region26: #{tpu_custom_call.1} parent=11 // pred_check_branch
          %218 = sbr.rel (%p216) target = $region28
        $region27: #{tpu_custom_call.1} parent=11 // pred_region
          _
        $region28: #{tpu_custom_call.1} parent=11 // pred_fallthru
          _
      $region12: #{tpu_custom_call.1} parent=5 // pred_fallthru
        _
      %p219 = scmp.lt.s32.totalorder %s22, 2
      // Predicated region
      $region29: #{tpu_custom_call.1} parent=5 // pred_check
        %p220 = pneg %p219
      $region30: #{tpu_custom_call.1} parent=5 // pred_check_branch
        %222 = sbr.rel (%p220) target = $region32
      $region31: #{tpu_custom_call.1} parent=5 // pred_region
        // Predicated region
        $region33: #{tpu_custom_call.1} parent=31 // pred_check
          %p223 = pneg %p63
        $region34: #{tpu_custom_call.1} parent=31 // pred_check_branch
          %225 = sbr.rel (%p223) target = $region36
        $region35: #{tpu_custom_call.1} parent=31 // pred_region
          %s226 = sand.u32 %s53, 1
          %s227 = scalar_lea.sflag [#allocation4], %s226
          %s228 = sand.u32 %s53, 1
          %s229 = smul.addr %s228, 128
          %s230 = scalar_lea.vmem [#allocation7], %s229
          %s231 = smul.u32 2, %s22
          %s233 = ssub.s32 2048, 2048
          %234 = vsyncadd %s227, %s233
          %s235 = smul.addr %s231, 8
          %s236 = smul.addr %s235, 128
          %s237 = scalar_lea.hbm %s1, %s236
          %s238 = sshll.u32 %s230, 4
          %s239 = int_to_ptr.vmem [resolvable:$true] %s238
          %244 = dma.hbm_to_vmem [thread:$0]  %s237, 2048, %s239, %s227, 256, 256, 16
        $region36: #{tpu_custom_call.1} parent=31 // pred_fallthru
          _
        // Predicated region
        $region37: #{tpu_custom_call.1} parent=31 // pred_check
          %p245 = pneg %p89
        $region38: #{tpu_custom_call.1} parent=31 // pred_check_branch
          %247 = sbr.rel (%p245) target = $region40
        $region39: #{tpu_custom_call.1} parent=31 // pred_region
          %s248 = sand.u32 %s79, 1
          %s249 = scalar_lea.sflag [#allocation9], %s248
          %s250 = sand.u32 %s79, 1
          %s251 = smul.addr %s250, 128
          %s252 = scalar_lea.vmem [#allocation8], %s251
          %s253 = smul.u32 2, %s22
          %s255 = ssub.s32 2048, 2048
          %256 = vsyncadd %s249, %s255
          %s257 = smul.addr %s253, 8
          %s258 = smul.addr %s257, 128
          %s259 = scalar_lea.hbm %s2, %s258
          %s260 = sshll.u32 %s252, 4
          %s261 = int_to_ptr.vmem [resolvable:$true] %s260
          %266 = dma.hbm_to_vmem [thread:$0]  %s259, 2048, %s261, %s249, 256, 256, 16
        $region40: #{tpu_custom_call.1} parent=31 // pred_fallthru
          _
      $region32: #{tpu_custom_call.1} parent=5 // pred_fallthru
        _
      %p267 = scmp.le.s32.totalorder 1, %s22
      %p268 = scmp.lt.s32.totalorder %s22, 3
      %p269 = pnand %p267, %p268
      %p270 = pneg %p269
      // Predicated region
      $region41: #{tpu_custom_call.1} parent=5 // pred_check
        _
      $region42: #{tpu_custom_call.1} parent=5 // pred_check_branch
        %272 = sbr.rel (%p269) target = $region44
      $region43: #{tpu_custom_call.1} parent=5 // pred_region
        %s273 = ssub.s32 %s22, 1
        // Predicated region
        $region45: #{tpu_custom_call.1} parent=43 // pred_check
          %p274 = pneg %p43
        $region46: #{tpu_custom_call.1} parent=43 // pred_check_branch
          %276 = sbr.rel (%p274) target = $region48
        $region47: #{tpu_custom_call.1} parent=43 // pred_region
          %277 = dma.done [#allocation6], 16
        $region48: #{tpu_custom_call.1} parent=43 // pred_fallthru
          _
        %s278 = sand.u32 %s56, 1
        %s279 = scalar_lea.sflag [#allocation4], %s278
        %s280 = sand.u32 %s56, 1
        %s281 = smul.addr %s280, 128
        %s282 = scalar_lea.vmem [#allocation7], %s281
        // Predicated region
        $region49: #{tpu_custom_call.1} parent=43 // pred_check
          %p283 = pneg %p69
        $region50: #{tpu_custom_call.1} parent=43 // pred_check_branch
          %285 = sbr.rel (%p283) target = $region52
        $region51: #{tpu_custom_call.1} parent=43 // pred_region
          %286 = dma.done %s279, 2048
        $region52: #{tpu_custom_call.1} parent=43 // pred_fallthru
          _
        %s287 = sand.u32 %s82, 1
        %s288 = scalar_lea.sflag [#allocation9], %s287
        %s289 = sand.u32 %s82, 1
        %s290 = smul.addr %s289, 128
        %s291 = scalar_lea.vmem [#allocation8], %s290
        // Predicated region
        $region53: #{tpu_custom_call.1} parent=43 // pred_check
          %p292 = pneg %p95
        $region54: #{tpu_custom_call.1} parent=43 // pred_check_branch
          %294 = sbr.rel (%p292) target = $region56
        $region55: #{tpu_custom_call.1} parent=43 // pred_region
          %295 = dma.done %s288, 2048
        $region56: #{tpu_custom_call.1} parent=43 // pred_fallthru
          _
        %296 = sfence
        %p297 = pneg %p43
        %p298 = pneg %p40
        %s299 = sand.u32 %s56, 1
        %s300 = scalar_lea.sflag [#allocation4], %s299
        %s301 = sand.u32 %s56, 1
        %s302 = smul.addr %s301, 128
        %s303 = scalar_lea.vmem [#allocation7], %s302
        %p304 = pneg %p69
        %p305 = pneg %p66
        %s306 = sand.u32 %s82, 1
        %s307 = scalar_lea.sflag [#allocation9], %s306
        %s308 = sand.u32 %s82, 1
        %s309 = smul.addr %s308, 128
        %s310 = scalar_lea.vmem [#allocation8], %s309
        %p311 = pneg %p95
        %p312 = pneg %p92
        %p313 = pneg %p116
        %p314 = pneg %p113
        %p315 = pneg %p137
        %p316 = pneg %p134
        %p317 = pneg %p158
        %p318 = pneg %p155
        %p319 = pneg %p184
        %p320 = pneg %p181
        %s321 = sand.u32 %s171, 1
        %s322 = scalar_lea.sflag [#allocation5], %s321
        %s323 = sand.u32 %s171, 1
        %s324 = smul.addr %s323, 128
        %s325 = scalar_lea.vmem [#allocation10], %s324
        %s326 = smul.u32 2, %s27
        %s327 = smul.u32 2, %s27
        %s328 = smul.u32 2, %s27
        %v329 = vld [vmem:[%s282] sm:$0xff]
        %v330 = vld [vmem:[%s282 + $0x8] sm:$0xff]
        %v331 = vld [vmem:[%s282 + $0x10] sm:$0xff]
        %v332 = vld [vmem:[%s282 + $0x18] sm:$0xff]
        %v333 = vld [vmem:[%s282 + $0x20] sm:$0xff]
        %v334 = vld [vmem:[%s282 + $0x28] sm:$0xff]
        %v335 = vld [vmem:[%s282 + $0x30] sm:$0xff]
        %v336 = vld [vmem:[%s282 + $0x38] sm:$0xff]
        %v337 = vld [vmem:[%s282 + $0x40] sm:$0xff]
        %v338 = vld [vmem:[%s282 + $0x48] sm:$0xff]
        %v339 = vld [vmem:[%s282 + $0x50] sm:$0xff]
        %v340 = vld [vmem:[%s282 + $0x58] sm:$0xff]
        %v341 = vld [vmem:[%s282 + $0x60] sm:$0xff]
        %v342 = vld [vmem:[%s282 + $0x68] sm:$0xff]
        %v343 = vld [vmem:[%s282 + $0x70] sm:$0xff]
        %v344 = vld [vmem:[%s282 + $0x78] sm:$0xff]
        %v345 = vld [vmem:[%s291] sm:$0xff]
        %v346 = vld [vmem:[%s291 + $0x8] sm:$0xff]
        %v347 = vld [vmem:[%s291 + $0x10] sm:$0xff]
        %v348 = vld [vmem:[%s291 + $0x18] sm:$0xff]
        %v349 = vld [vmem:[%s291 + $0x20] sm:$0xff]
        %v350 = vld [vmem:[%s291 + $0x28] sm:$0xff]
        %v351 = vld [vmem:[%s291 + $0x30] sm:$0xff]
        %v352 = vld [vmem:[%s291 + $0x38] sm:$0xff]
        %v353 = vld [vmem:[%s291 + $0x40] sm:$0xff]
        %v354 = vld [vmem:[%s291 + $0x48] sm:$0xff]
        %v355 = vld [vmem:[%s291 + $0x50] sm:$0xff]
        %v356 = vld [vmem:[%s291 + $0x58] sm:$0xff]
        %v357 = vld [vmem:[%s291 + $0x60] sm:$0xff]
        %v358 = vld [vmem:[%s291 + $0x68] sm:$0xff]
        %v359 = vld [vmem:[%s291 + $0x70] sm:$0xff]
        %v360 = vld [vmem:[%s291 + $0x78] sm:$0xff]
        %v361 = vld [vmem:[%s3] sm:$0x3]
        %v362 = vld [vmem:[%s3 + $0x2] sm:$0x3]
        %vm363 = vcmask 261120
        %v365 = vsel %vm363, %v362, 0
        %v367 = vand.u32 %v346, 4294901760
        %368 = vmatprep.subr.mxu0 %v367
        %v369 = vand.u32 %v345, 4294901760
        %370 = vmatpush1.msra.mxu0 %v369
        %v371 = vand.u32 %v348, 4294901760
        %372 = vmatprep.subr.mxu0 %v371
        %v373 = vand.u32 %v347, 4294901760
        %374 = vmatpush1.msra.mxu0 %v373
        %v375 = vand.u32 %v350, 4294901760
        %376 = vmatprep.subr.mxu0 %v375
        %v377 = vand.u32 %v349, 4294901760
        %378 = vmatpush1.msra.mxu0 %v377
        %v379 = vand.u32 %v352, 4294901760
        %380 = vmatprep.subr.mxu0 %v379
        %v381 = vand.u32 %v351, 4294901760
        %382 = vmatpush1.msra.mxu0 %v381
        %383 = vmatprep.subr.mxu0 0.0
        %384 = vmatpush1.msra.mxu0 0.0
        %385 = vmatprep.subr.mxu0 0.0
        %386 = vmatpush1.msra.mxu0 0.0
        %387 = vmatprep.subr.mxu0 0.0
        %388 = vmatpush1.msra.mxu0 0.0
        %389 = vmatprep.subr.mxu0 0.0
        %390 = vmatpush1.msra.mxu0 0.0
        %391 = vmatprep.subr.mxu0 0.0
        %392 = vmatpush1.msra.mxu0 0.0
        %393 = vmatprep.subr.mxu0 0.0
        %394 = vmatpush1.msra.mxu0 0.0
        %395 = vmatprep.subr.mxu0 0.0
        %396 = vmatpush1.msra.mxu0 0.0
        %397 = vmatprep.subr.mxu0 0.0
        %398 = vmatpush1.msra.mxu0 0.0
        %399 = vmatprep.subr.mxu0 0.0
        %400 = vmatpush1.msra.mxu0 0.0
        %401 = vmatprep.subr.mxu0 0.0
        %402 = vmatpush1.msra.mxu0 0.0
        %403 = vmatprep.subr.mxu0 0.0
        %404 = vmatpush1.msra.mxu0 0.0
        %405 = vmatprep.subr.mxu0 0.0
        %406 = vmatpush1.msra.mxu0 0.0
        %407 = vmatprep.subr.mxu0 0.0
        %408 = vmatpush1.msra.mxu0 0.0
        %409 = vmatprep.subr.mxu0 0.0
        %410 = vmatpush1.msra.mxu0 0.0
        %411 = vmatprep.subr.mxu0 0.0
        %412 = vmatpush1.msra.mxu0 0.0
        %413 = vmatprep.subr.mxu0 0.0
        %414 = vmatpush1.msra.mxu0 0.0
        %415 = vmatprep.subr.mxu0 0.0
        %416 = vmatpush1.msra.mxu0 0.0
        %417 = vmatprep.subr.mxu0 0.0
        %418 = vmatpush1.msra.mxu0 0.0
        %419 = vmatprep.subr.mxu0 0.0
        %420 = vmatpush1.msra.mxu0 0.0
        %421 = vmatprep.subr.mxu0 0.0
        %422 = vmatpush1.msra.mxu0 0.0
        %423 = vmatprep.subr.mxu0 0.0
        %424 = vmatpush1.msra.mxu0 0.0
        %425 = vmatprep.subr.mxu0 0.0
        %426 = vmatpush1.msra.mxu0 0.0
        %427 = vmatprep.subr.mxu0 0.0
        %428 = vmatpush1.msra.mxu0 0.0
        %429 = vmatprep.subr.mxu0 0.0
        %430 = vmatpush1.msra.mxu0 0.0
        %431 = vmatprep.subr.mxu0 0.0
        %432 = vmatpush1.msra.mxu0 0.0
        %433 = vmatprep.subr.mxu0 0.0
        %434 = vmatpush1.msra.mxu0 0.0
        %435 = vmatprep.subr.mxu0 0.0
        %436 = vmatpush1.msra.mxu0 0.0
        %437 = vmatprep.subr.mxu0 0.0
        %438 = vmatpush1.msra.mxu0 0.0
        %439 = vmatprep.mubr.f32.mxu0 0.0
        %v440 = vand.u32 %v365, 4294901760
        %v441 = vsub.f32 %v365, %v440
        %v442 = vand.u32 %v441, 4294901760
        %v443 = vsub.f32 %v441, %v442
        %v444 = vand.u32 %v443, 4294901760
        %445 = vmatmul.mubr.f32.gmra.mrb[0].mxu0 %v444
        %v446 = vpop.f32.mrb[0].mxu0
        %v447 = vadd.f32 0.0, %v446
        %v448 = vpop.f32.mrb[0].mxu0
        %v449 = vadd.f32 0.0, %v448
        %450 = vdwg.mxu0
        %v451 = vand.u32 %v346, 4294901760
        %v452 = vsub.f32 %v346, %v451
        %v453 = vand.u32 %v452, 4294901760
        %v454 = vsub.f32 %v452, %v453
        %v455 = vand.u32 %v454, 4294901760
        %456 = vmatprep.subr.mxu0 %v455
        %v457 = vand.u32 %v345, 4294901760
        %v458 = vsub.f32 %v345, %v457
        %v459 = vand.u32 %v458, 4294901760
        %v460 = vsub.f32 %v458, %v459
        %v461 = vand.u32 %v460, 4294901760
        %462 = vmatpush1.msra.mxu0 %v461
        %v463 = vand.u32 %v348, 4294901760
        %v464 = vsub.f32 %v348, %v463
        %v465 = vand.u32 %v464, 4294901760
        %v466 = vsub.f32 %v464, %v465
        %v467 = vand.u32 %v466, 4294901760
        %468 = vmatprep.subr.mxu0 %v467
        %v469 = vand.u32 %v347, 4294901760
        %v470 = vsub.f32 %v347, %v469
        %v471 = vand.u32 %v470, 4294901760
        %v472 = vsub.f32 %v470, %v471
        %v473 = vand.u32 %v472, 4294901760
        %474 = vmatpush1.msra.mxu0 %v473
        %v475 = vand.u32 %v350, 4294901760
        %v476 = vsub.f32 %v350, %v475
        %v477 = vand.u32 %v476, 4294901760
        %v478 = vsub.f32 %v476, %v477
        %v479 = vand.u32 %v478, 4294901760
        %480 = vmatprep.subr.mxu0 %v479
        %v481 = vand.u32 %v349, 4294901760
        %v482 = vsub.f32 %v349, %v481
        %v483 = vand.u32 %v482, 4294901760
        %v484 = vsub.f32 %v482, %v483
        %v485 = vand.u32 %v484, 4294901760
        %486 = vmatpush1.msra.mxu0 %v485
        %v487 = vand.u32 %v352, 4294901760
        %v488 = vsub.f32 %v352, %v487
        %v489 = vand.u32 %v488, 4294901760
        %v490 = vsub.f32 %v488, %v489
        %v491 = vand.u32 %v490, 4294901760
        %492 = vmatprep.subr.mxu0 %v491
        %v493 = vand.u32 %v351, 4294901760
        %v494 = vsub.f32 %v351, %v493
        %v495 = vand.u32 %v494, 4294901760
        %v496 = vsub.f32 %v494, %v495
        %v497 = vand.u32 %v496, 4294901760
        %498 = vmatpush1.msra.mxu0 %v497
        %499 = vmatprep.subr.mxu0 0.0
        %500 = vmatpush1.msra.mxu0 0.0
        %501 = vmatprep.subr.mxu0 0.0
        %502 = vmatpush1.msra.mxu0 0.0
        %503 = vmatprep.subr.mxu0 0.0
        %504 = vmatpush1.msra.mxu0 0.0
        %505 = vmatprep.subr.mxu0 0.0
        %506 = vmatpush1.msra.mxu0 0.0
        %507 = vmatprep.subr.mxu0 0.0
        %508 = vmatpush1.msra.mxu0 0.0
        %509 = vmatprep.subr.mxu0 0.0
        %510 = vmatpush1.msra.mxu0 0.0
        %511 = vmatprep.subr.mxu0 0.0
        %512 = vmatpush1.msra.mxu0 0.0
        %513 = vmatprep.subr.mxu0 0.0
        %514 = vmatpush1.msra.mxu0 0.0
        %515 = vmatprep.subr.mxu0 0.0
        %516 = vmatpush1.msra.mxu0 0.0
        %517 = vmatprep.subr.mxu0 0.0
        %518 = vmatpush1.msra.mxu0 0.0
        %519 = vmatprep.subr.mxu0 0.0
        %520 = vmatpush1.msra.mxu0 0.0
        %521 = vmatprep.subr.mxu0 0.0
        %522 = vmatpush1.msra.mxu0 0.0
        %523 = vmatprep.subr.mxu0 0.0
        %524 = vmatpush1.msra.mxu0 0.0
        %525 = vmatprep.subr.mxu0 0.0
        %526 = vmatpush1.msra.mxu0 0.0
        %527 = vmatprep.subr.mxu0 0.0
        %528 = vmatpush1.msra.mxu0 0.0
        %529 = vmatprep.subr.mxu0 0.0
        %530 = vmatpush1.msra.mxu0 0.0
        %531 = vmatprep.subr.mxu0 0.0
        %532 = vmatpush1.msra.mxu0 0.0
        %533 = vmatprep.subr.mxu0 0.0
        %534 = vmatpush1.msra.mxu0 0.0
        %535 = vmatprep.subr.mxu0 0.0
        %536 = vmatpush1.msra.mxu0 0.0
        %537 = vmatprep.subr.mxu0 0.0
        %538 = vmatpush1.msra.mxu0 0.0
        %539 = vmatprep.subr.mxu0 0.0
        %540 = vmatpush1.msra.mxu0 0.0
        %541 = vmatprep.subr.mxu0 0.0
        %542 = vmatpush1.msra.mxu0 0.0
        %543 = vmatprep.subr.mxu0 0.0
        %544 = vmatpush1.msra.mxu0 0.0
        %545 = vmatprep.subr.mxu0 0.0
        %546 = vmatpush1.msra.mxu0 0.0
        %547 = vmatprep.subr.mxu0 0.0
        %548 = vmatpush1.msra.mxu0 0.0
        %549 = vmatprep.subr.mxu0 0.0
        %550 = vmatpush1.msra.mxu0 0.0
        %551 = vmatprep.subr.mxu0 0.0
        %552 = vmatpush1.msra.mxu0 0.0
        %553 = vmatprep.subr.mxu0 0.0
        %554 = vmatpush1.msra.mxu0 0.0
        %555 = vmatprep.mubr.f32.mxu0 0.0
        %v556 = vand.u32 %v365, 4294901760
        %557 = vmatmul.mubr.f32.gmra.mrb[0].mxu0 %v556
        %v558 = vpop.f32.mrb[0].mxu0
        %v559 = vadd.f32 %v447, %v558
        %v560 = vpop.f32.mrb[0].mxu0
        %v561 = vadd.f32 %v449, %v560
        %562 = vdwg.mxu0
        %v563 = vand.u32 %v346, 4294901760
        %v564 = vsub.f32 %v346, %v563
        %565 = vmatprep.subr.mxu0 %v564
        %v566 = vand.u32 %v345, 4294901760
        %v567 = vsub.f32 %v345, %v566
        %568 = vmatpush1.msra.mxu0 %v567
        %v569 = vand.u32 %v348, 4294901760
        %v570 = vsub.f32 %v348, %v569
        %571 = vmatprep.subr.mxu0 %v570
        %v572 = vand.u32 %v347, 4294901760
        %v573 = vsub.f32 %v347, %v572
        %574 = vmatpush1.msra.mxu0 %v573
        %v575 = vand.u32 %v350, 4294901760
        %v576 = vsub.f32 %v350, %v575
        %577 = vmatprep.subr.mxu0 %v576
        %v578 = vand.u32 %v349, 4294901760
        %v579 = vsub.f32 %v349, %v578
        %580 = vmatpush1.msra.mxu0 %v579
        %v581 = vand.u32 %v352, 4294901760
        %v582 = vsub.f32 %v352, %v581
        %583 = vmatprep.subr.mxu0 %v582
        %v584 = vand.u32 %v351, 4294901760
        %v585 = vsub.f32 %v351, %v584
        %586 = vmatpush1.msra.mxu0 %v585
        %587 = vmatprep.subr.mxu0 0.0
        %588 = vmatpush1.msra.mxu0 0.0
        %589 = vmatprep.subr.mxu0 0.0
        %590 = vmatpush1.msra.mxu0 0.0
        %591 = vmatprep.subr.mxu0 0.0
        %592 = vmatpush1.msra.mxu0 0.0
        %593 = vmatprep.subr.mxu0 0.0
        %594 = vmatpush1.msra.mxu0 0.0
        %595 = vmatprep.subr.mxu0 0.0
        %596 = vmatpush1.msra.mxu0 0.0
        %597 = vmatprep.subr.mxu0 0.0
        %598 = vmatpush1.msra.mxu0 0.0
        %599 = vmatprep.subr.mxu0 0.0
        %600 = vmatpush1.msra.mxu0 0.0
        %601 = vmatprep.subr.mxu0 0.0
        %602 = vmatpush1.msra.mxu0 0.0
        %603 = vmatprep.subr.mxu0 0.0
        %604 = vmatpush1.msra.mxu0 0.0
        %605 = vmatprep.subr.mxu0 0.0
        %606 = vmatpush1.msra.mxu0 0.0
        %607 = vmatprep.subr.mxu0 0.0
        %608 = vmatpush1.msra.mxu0 0.0
        %609 = vmatprep.subr.mxu0 0.0
        %610 = vmatpush1.msra.mxu0 0.0
        %611 = vmatprep.subr.mxu0 0.0
        %612 = vmatpush1.msra.mxu0 0.0
        %613 = vmatprep.subr.mxu0 0.0
        %614 = vmatpush1.msra.mxu0 0.0
        %615 = vmatprep.subr.mxu0 0.0
        %616 = vmatpush1.msra.mxu0 0.0
        %617 = vmatprep.subr.mxu0 0.0
        %618 = vmatpush1.msra.mxu0 0.0
        %619 = vmatprep.subr.mxu0 0.0
        %620 = vmatpush1.msra.mxu0 0.0
        %621 = vmatprep.subr.mxu0 0.0
        %622 = vmatpush1.msra.mxu0 0.0
        %623 = vmatprep.subr.mxu0 0.0
        %624 = vmatpush1.msra.mxu0 0.0
        %625 = vmatprep.subr.mxu0 0.0
        %626 = vmatpush1.msra.mxu0 0.0
        %627 = vmatprep.subr.mxu0 0.0
        %628 = vmatpush1.msra.mxu0 0.0
        %629 = vmatprep.subr.mxu0 0.0
        %630 = vmatpush1.msra.mxu0 0.0
        %631 = vmatprep.subr.mxu0 0.0
        %632 = vmatpush1.msra.mxu0 0.0
        %633 = vmatprep.subr.mxu0 0.0
        %634 = vmatpush1.msra.mxu0 0.0
        %635 = vmatprep.subr.mxu0 0.0
        %636 = vmatpush1.msra.mxu0 0.0
        %637 = vmatprep.subr.mxu0 0.0
        %638 = vmatpush1.msra.mxu0 0.0
        %639 = vmatprep.subr.mxu0 0.0
        %640 = vmatpush1.msra.mxu0 0.0
        %641 = vmatprep.subr.mxu0 0.0
        %642 = vmatpush1.msra.mxu0 0.0
        %643 = vmatprep.mubr.f32.mxu0 0.0
        %v644 = vand.u32 %v365, 4294901760
        %v645 = vsub.f32 %v365, %v644
        %646 = vmatmul.mubr.f32.gmra.mrb[0].mxu0 %v645
        %v647 = vpop.f32.mrb[0].mxu0
        %v648 = vadd.f32 %v559, %v647
        %v649 = vpop.f32.mrb[0].mxu0
        %v650 = vadd.f32 %v561, %v649
        %651 = vdwg.mxu0
        %v652 = vand.u32 %v346, 4294901760
        %653 = vmatprep.subr.mxu0 %v652
        %v654 = vand.u32 %v345, 4294901760
        %655 = vmatpush1.msra.mxu0 %v654
        %v656 = vand.u32 %v348, 4294901760
        %657 = vmatprep.subr.mxu0 %v656
        %v658 = vand.u32 %v347, 4294901760
        %659 = vmatpush1.msra.mxu0 %v658
        %v660 = vand.u32 %v350, 4294901760
        %661 = vmatprep.subr.mxu0 %v660
        %v662 = vand.u32 %v349, 4294901760
        %663 = vmatpush1.msra.mxu0 %v662
        %v664 = vand.u32 %v352, 4294901760
        %665 = vmatprep.subr.mxu0 %v664
        %v666 = vand.u32 %v351, 4294901760
        %667 = vmatpush1.msra.mxu0 %v666
        %668 = vmatprep.subr.mxu0 0.0
        %669 = vmatpush1.msra.mxu0 0.0
        %670 = vmatprep.subr.mxu0 0.0
        %671 = vmatpush1.msra.mxu0 0.0
        %672 = vmatprep.subr.mxu0 0.0
        %673 = vmatpush1.msra.mxu0 0.0
        %674 = vmatprep.subr.mxu0 0.0
        %675 = vmatpush1.msra.mxu0 0.0
        %676 = vmatprep.subr.mxu0 0.0
        %677 = vmatpush1.msra.mxu0 0.0
        %678 = vmatprep.subr.mxu0 0.0
        %679 = vmatpush1.msra.mxu0 0.0
        %680 = vmatprep.subr.mxu0 0.0
        %681 = vmatpush1.msra.mxu0 0.0
        %682 = vmatprep.subr.mxu0 0.0
        %683 = vmatpush1.msra.mxu0 0.0
        %684 = vmatprep.subr.mxu0 0.0
        %685 = vmatpush1.msra.mxu0 0.0
        %686 = vmatprep.subr.mxu0 0.0
        %687 = vmatpush1.msra.mxu0 0.0
        %688 = vmatprep.subr.mxu0 0.0
        %689 = vmatpush1.msra.mxu0 0.0
        %690 = vmatprep.subr.mxu0 0.0
        %691 = vmatpush1.msra.mxu0 0.0
        %692 = vmatprep.subr.mxu0 0.0
        %693 = vmatpush1.msra.mxu0 0.0
        %694 = vmatprep.subr.mxu0 0.0
        %695 = vmatpush1.msra.mxu0 0.0
        %696 = vmatprep.subr.mxu0 0.0
        %697 = vmatpush1.msra.mxu0 0.0
        %698 = vmatprep.subr.mxu0 0.0
        %699 = vmatpush1.msra.mxu0 0.0
        %700 = vmatprep.subr.mxu0 0.0
        %701 = vmatpush1.msra.mxu0 0.0
        %702 = vmatprep.subr.mxu0 0.0
        %703 = vmatpush1.msra.mxu0 0.0
        %704 = vmatprep.subr.mxu0 0.0
        %705 = vmatpush1.msra.mxu0 0.0
        %706 = vmatprep.subr.mxu0 0.0
        %707 = vmatpush1.msra.mxu0 0.0
        %708 = vmatprep.subr.mxu0 0.0
        %709 = vmatpush1.msra.mxu0 0.0
        %710 = vmatprep.subr.mxu0 0.0
        %711 = vmatpush1.msra.mxu0 0.0
        %712 = vmatprep.subr.mxu0 0.0
        %713 = vmatpush1.msra.mxu0 0.0
        %714 = vmatprep.subr.mxu0 0.0
        %715 = vmatpush1.msra.mxu0 0.0
        %716 = vmatprep.subr.mxu0 0.0
        %717 = vmatpush1.msra.mxu0 0.0
        %718 = vmatprep.subr.mxu0 0.0
        %719 = vmatpush1.msra.mxu0 0.0
        %720 = vmatprep.subr.mxu0 0.0
        %721 = vmatpush1.msra.mxu0 0.0
        %722 = vmatprep.subr.mxu0 0.0
        %723 = vmatpush1.msra.mxu0 0.0
        %724 = vmatprep.mubr.f32.mxu0 0.0
        %v725 = vand.u32 %v365, 4294901760
        %v726 = vsub.f32 %v365, %v725
        %v727 = vand.u32 %v726, 4294901760
        %728 = vmatmul.mubr.f32.gmra.mrb[0].mxu0 %v727
        %v729 = vpop.f32.mrb[0].mxu0
        %v730 = vadd.f32 %v648, %v729
        %v731 = vpop.f32.mrb[0].mxu0
        %v732 = vadd.f32 %v650, %v731
        %733 = vdwg.mxu0
        %v734 = vand.u32 %v346, 4294901760
        %v735 = vsub.f32 %v346, %v734
        %v736 = vand.u32 %v735, 4294901760
        %737 = vmatprep.subr.mxu0 %v736
        %v738 = vand.u32 %v345, 4294901760
        %v739 = vsub.f32 %v345, %v738
        %v740 = vand.u32 %v739, 4294901760
        %741 = vmatpush1.msra.mxu0 %v740
        %v742 = vand.u32 %v348, 4294901760
        %v743 = vsub.f32 %v348, %v742
        %v744 = vand.u32 %v743, 4294901760
        %745 = vmatprep.subr.mxu0 %v744
        %v746 = vand.u32 %v347, 4294901760
        %v747 = vsub.f32 %v347, %v746
        %v748 = vand.u32 %v747, 4294901760
        %749 = vmatpush1.msra.mxu0 %v748
        %v750 = vand.u32 %v350, 4294901760
        %v751 = vsub.f32 %v350, %v750
        %v752 = vand.u32 %v751, 4294901760
        %753 = vmatprep.subr.mxu0 %v752
        %v754 = vand.u32 %v349, 4294901760
        %v755 = vsub.f32 %v349, %v754
        %v756 = vand.u32 %v755, 4294901760
        %757 = vmatpush1.msra.mxu0 %v756
        %v758 = vand.u32 %v352, 4294901760
        %v759 = vsub.f32 %v352, %v758
        %v760 = vand.u32 %v759, 4294901760
        %761 = vmatprep.subr.mxu0 %v760
        %v762 = vand.u32 %v351, 4294901760
        %v763 = vsub.f32 %v351, %v762
        %v764 = vand.u32 %v763, 4294901760
        %765 = vmatpush1.msra.mxu0 %v764
        %766 = vmatprep.subr.mxu0 0.0
        %767 = vmatpush1.msra.mxu0 0.0
        %768 = vmatprep.subr.mxu0 0.0
        %769 = vmatpush1.msra.mxu0 0.0
        %770 = vmatprep.subr.mxu0 0.0
        %771 = vmatpush1.msra.mxu0 0.0
        %772 = vmatprep.subr.mxu0 0.0
        %773 = vmatpush1.msra.mxu0 0.0
        %774 = vmatprep.subr.mxu0 0.0
        %775 = vmatpush1.msra.mxu0 0.0
        %776 = vmatprep.subr.mxu0 0.0
        %777 = vmatpush1.msra.mxu0 0.0
        %778 = vmatprep.subr.mxu0 0.0
        %779 = vmatpush1.msra.mxu0 0.0
        %780 = vmatprep.subr.mxu0 0.0
        %781 = vmatpush1.msra.mxu0 0.0
        %782 = vmatprep.subr.mxu0 0.0
        %783 = vmatpush1.msra.mxu0 0.0
        %784 = vmatprep.subr.mxu0 0.0
        %785 = vmatpush1.msra.mxu0 0.0
        %786 = vmatprep.subr.mxu0 0.0
        %787 = vmatpush1.msra.mxu0 0.0
        %788 = vmatprep.subr.mxu0 0.0
        %789 = vmatpush1.msra.mxu0 0.0
        %790 = vmatprep.subr.mxu0 0.0
        %791 = vmatpush1.msra.mxu0 0.0
        %792 = vmatprep.subr.mxu0 0.0
        %793 = vmatpush1.msra.mxu0 0.0
        %794 = vmatprep.subr.mxu0 0.0
        %795 = vmatpush1.msra.mxu0 0.0
        %796 = vmatprep.subr.mxu0 0.0
        %797 = vmatpush1.msra.mxu0 0.0
        %798 = vmatprep.subr.mxu0 0.0
        %799 = vmatpush1.msra.mxu0 0.0
        %800 = vmatprep.subr.mxu0 0.0
        %801 = vmatpush1.msra.mxu0 0.0
        %802 = vmatprep.subr.mxu0 0.0
        %803 = vmatpush1.msra.mxu0 0.0
        %804 = vmatprep.subr.mxu0 0.0
        %805 = vmatpush1.msra.mxu0 0.0
        %806 = vmatprep.subr.mxu0 0.0
        %807 = vmatpush1.msra.mxu0 0.0
        %808 = vmatprep.subr.mxu0 0.0
        %809 = vmatpush1.msra.mxu0 0.0
        %810 = vmatprep.subr.mxu0 0.0
        %811 = vmatpush1.msra.mxu0 0.0
        %812 = vmatprep.subr.mxu0 0.0
        %813 = vmatpush1.msra.mxu0 0.0
        %814 = vmatprep.subr.mxu0 0.0
        %815 = vmatpush1.msra.mxu0 0.0
        %816 = vmatprep.subr.mxu0 0.0
        %817 = vmatpush1.msra.mxu0 0.0
        %818 = vmatprep.subr.mxu0 0.0
        %819 = vmatpush1.msra.mxu0 0.0
        %820 = vmatprep.subr.mxu0 0.0
        %821 = vmatpush1.msra.mxu0 0.0
        %822 = vmatprep.mubr.f32.mxu0 0.0
        %v823 = vand.u32 %v365, 4294901760
        %824 = vmatmul.mubr.f32.gmra.mrb[0].mxu0 %v823
        %v825 = vpop.f32.mrb[0].mxu0
        %v826 = vadd.f32 %v730, %v825
        %v827 = vpop.f32.mrb[0].mxu0
        %v828 = vadd.f32 %v732, %v827
        %829 = vdwg.mxu0
        %v830 = vand.u32 %v346, 4294901760
        %831 = vmatprep.subr.mxu0 %v830
        %v832 = vand.u32 %v345, 4294901760
        %833 = vmatpush1.msra.mxu0 %v832
        %v834 = vand.u32 %v348, 4294901760
        %835 = vmatprep.subr.mxu0 %v834
        %v836 = vand.u32 %v347, 4294901760
        %837 = vmatpush1.msra.mxu0 %v836
        %v838 = vand.u32 %v350, 4294901760
        %839 = vmatprep.subr.mxu0 %v838
        %v840 = vand.u32 %v349, 4294901760
        %841 = vmatpush1.msra.mxu0 %v840
        %v842 = vand.u32 %v352, 4294901760
        %843 = vmatprep.subr.mxu0 %v842
        %v844 = vand.u32 %v351, 4294901760
        %845 = vmatpush1.msra.mxu0 %v844
        %846 = vmatprep.subr.mxu0 0.0
        %847 = vmatpush1.msra.mxu0 0.0
        %848 = vmatprep.subr.mxu0 0.0
        %849 = vmatpush1.msra.mxu0 0.0
        %850 = vmatprep.subr.mxu0 0.0
        %851 = vmatpush1.msra.mxu0 0.0
        %852 = vmatprep.subr.mxu0 0.0
        %853 = vmatpush1.msra.mxu0 0.0
        %854 = vmatprep.subr.mxu0 0.0
        %855 = vmatpush1.msra.mxu0 0.0
        %856 = vmatprep.subr.mxu0 0.0
        %857 = vmatpush1.msra.mxu0 0.0
        %858 = vmatprep.subr.mxu0 0.0
        %859 = vmatpush1.msra.mxu0 0.0
        %860 = vmatprep.subr.mxu0 0.0
        %861 = vmatpush1.msra.mxu0 0.0
        %862 = vmatprep.subr.mxu0 0.0
        %863 = vmatpush1.msra.mxu0 0.0
        %864 = vmatprep.subr.mxu0 0.0
        %865 = vmatpush1.msra.mxu0 0.0
        %866 = vmatprep.subr.mxu0 0.0
        %867 = vmatpush1.msra.mxu0 0.0
        %868 = vmatprep.subr.mxu0 0.0
        %869 = vmatpush1.msra.mxu0 0.0
        %870 = vmatprep.subr.mxu0 0.0
        %871 = vmatpush1.msra.mxu0 0.0
        %872 = vmatprep.subr.mxu0 0.0
        %873 = vmatpush1.msra.mxu0 0.0
        %874 = vmatprep.subr.mxu0 0.0
        %875 = vmatpush1.msra.mxu0 0.0
        %876 = vmatprep.subr.mxu0 0.0
        %877 = vmatpush1.msra.mxu0 0.0
        %878 = vmatprep.subr.mxu0 0.0
        %879 = vmatpush1.msra.mxu0 0.0
        %880 = vmatprep.subr.mxu0 0.0
        %881 = vmatpush1.msra.mxu0 0.0
        %882 = vmatprep.subr.mxu0 0.0
        %883 = vmatpush1.msra.mxu0 0.0
        %884 = vmatprep.subr.mxu0 0.0
        %885 = vmatpush1.msra.mxu0 0.0
        %886 = vmatprep.subr.mxu0 0.0
        %887 = vmatpush1.msra.mxu0 0.0
        %888 = vmatprep.subr.mxu0 0.0
        %889 = vmatpush1.msra.mxu0 0.0
        %890 = vmatprep.subr.mxu0 0.0
        %891 = vmatpush1.msra.mxu0 0.0
        %892 = vmatprep.subr.mxu0 0.0
        %893 = vmatpush1.msra.mxu0 0.0
        %894 = vmatprep.subr.mxu0 0.0
        %895 = vmatpush1.msra.mxu0 0.0
        %896 = vmatprep.subr.mxu0 0.0
        %897 = vmatpush1.msra.mxu0 0.0
        %898 = vmatprep.subr.mxu0 0.0
        %899 = vmatpush1.msra.mxu0 0.0
        %900 = vmatprep.subr.mxu0 0.0
        %901 = vmatpush1.msra.mxu0 0.0
        %902 = vmatprep.mubr.f32.mxu0 0.0
        %v903 = vand.u32 %v365, 4294901760
        %904 = vmatmul.mubr.f32.gmra.mrb[0].mxu0 %v903
        %v905 = vpop.f32.mrb[0].mxu0
        %v906 = vadd.f32 %v826, %v905
        %v907 = vpop.f32.mrb[0].mxu0
        %v908 = vadd.f32 %v828, %v907
        %909 = vdwg.mxu0
        %v910 = vand.u32 %v354, 4294901760
        %911 = vmatprep.subr.mxu0 %v910
        %v912 = vand.u32 %v353, 4294901760
        %913 = vmatpush1.msra.mxu0 %v912
        %v914 = vand.u32 %v356, 4294901760
        %915 = vmatprep.subr.mxu0 %v914
        %v916 = vand.u32 %v355, 4294901760
        %917 = vmatpush1.msra.mxu0 %v916
        %v918 = vand.u32 %v358, 4294901760
        %919 = vmatprep.subr.mxu0 %v918
        %v920 = vand.u32 %v357, 4294901760
        %921 = vmatpush1.msra.mxu0 %v920
        %v922 = vand.u32 %v360, 4294901760
        %923 = vmatprep.subr.mxu0 %v922
        %v924 = vand.u32 %v359, 4294901760
        %925 = vmatpush1.msra.mxu0 %v924
        %926 = vmatprep.subr.mxu0 0.0
        %927 = vmatpush1.msra.mxu0 0.0
        %928 = vmatprep.subr.mxu0 0.0
        %929 = vmatpush1.msra.mxu0 0.0
        %930 = vmatprep.subr.mxu0 0.0
        %931 = vmatpush1.msra.mxu0 0.0
        %932 = vmatprep.subr.mxu0 0.0
        %933 = vmatpush1.msra.mxu0 0.0
        %934 = vmatprep.subr.mxu0 0.0
        %935 = vmatpush1.msra.mxu0 0.0
        %936 = vmatprep.subr.mxu0 0.0
        %937 = vmatpush1.msra.mxu0 0.0
        %938 = vmatprep.subr.mxu0 0.0
        %939 = vmatpush1.msra.mxu0 0.0
        %940 = vmatprep.subr.mxu0 0.0
        %941 = vmatpush1.msra.mxu0 0.0
        %942 = vmatprep.subr.mxu0 0.0
        %943 = vmatpush1.msra.mxu0 0.0
        %944 = vmatprep.subr.mxu0 0.0
        %945 = vmatpush1.msra.mxu0 0.0
        %946 = vmatprep.subr.mxu0 0.0
        %947 = vmatpush1.msra.mxu0 0.0
        %948 = vmatprep.subr.mxu0 0.0
        %949 = vmatpush1.msra.mxu0 0.0
        %950 = vmatprep.subr.mxu0 0.0
        %951 = vmatpush1.msra.mxu0 0.0
        %952 = vmatprep.subr.mxu0 0.0
        %953 = vmatpush1.msra.mxu0 0.0
        %954 = vmatprep.subr.mxu0 0.0
        %955 = vmatpush1.msra.mxu0 0.0
        %956 = vmatprep.subr.mxu0 0.0
        %957 = vmatpush1.msra.mxu0 0.0
        %958 = vmatprep.subr.mxu0 0.0
        %959 = vmatpush1.msra.mxu0 0.0
        %960 = vmatprep.subr.mxu0 0.0
        %961 = vmatpush1.msra.mxu0 0.0
        %962 = vmatprep.subr.mxu0 0.0
        %963 = vmatpush1.msra.mxu0 0.0
        %964 = vmatprep.subr.mxu0 0.0
        %965 = vmatpush1.msra.mxu0 0.0
        %966 = vmatprep.subr.mxu0 0.0
        %967 = vmatpush1.msra.mxu0 0.0
        %968 = vmatprep.subr.mxu0 0.0
        %969 = vmatpush1.msra.mxu0 0.0
        %970 = vmatprep.subr.mxu0 0.0
        %971 = vmatpush1.msra.mxu0 0.0
        %972 = vmatprep.subr.mxu0 0.0
        %973 = vmatpush1.msra.mxu0 0.0
        %974 = vmatprep.subr.mxu0 0.0
        %975 = vmatpush1.msra.mxu0 0.0
        %976 = vmatprep.subr.mxu0 0.0
        %977 = vmatpush1.msra.mxu0 0.0
        %978 = vmatprep.subr.mxu0 0.0
        %979 = vmatpush1.msra.mxu0 0.0
        %980 = vmatprep.subr.mxu0 0.0
        %981 = vmatpush1.msra.mxu0 0.0
        %982 = vmatprep.mubr.f32.mxu0 0.0
        %v983 = vand.u32 %v365, 4294901760
        %v984 = vsub.f32 %v365, %v983
        %v985 = vand.u32 %v984, 4294901760
        %v986 = vsub.f32 %v984, %v985
        %v987 = vand.u32 %v986, 4294901760
        %988 = vmatmul.mubr.f32.gmra.mrb[0].mxu0 %v987
        %v989 = vpop.f32.mrb[0].mxu0
        %v990 = vadd.f32 0.0, %v989
        %v991 = vpop.f32.mrb[0].mxu0
        %v992 = vadd.f32 0.0, %v991
        %993 = vdwg.mxu0
        %v994 = vand.u32 %v354, 4294901760
        %v995 = vsub.f32 %v354, %v994
        %v996 = vand.u32 %v995, 4294901760
        %v997 = vsub.f32 %v995, %v996
        %v998 = vand.u32 %v997, 4294901760
        %999 = vmatprep.subr.mxu0 %v998
        %v1000 = vand.u32 %v353, 4294901760
        %v1001 = vsub.f32 %v353, %v1000
        %v1002 = vand.u32 %v1001, 4294901760
        %v1003 = vsub.f32 %v1001, %v1002
        %v1004 = vand.u32 %v1003, 4294901760
        %1005 = vmatpush1.msra.mxu0 %v1004
        %v1006 = vand.u32 %v356, 4294901760
        %v1007 = vsub.f32 %v356, %v1006
        %v1008 = vand.u32 %v1007, 4294901760
        %v1009 = vsub.f32 %v1007, %v1008
        %v1010 = vand.u32 %v1009, 4294901760
        %1011 = vmatprep.subr.mxu0 %v1010
        %v1012 = vand.u32 %v355, 4294901760
        %v1013 = vsub.f32 %v355, %v1012
        %v1014 = vand.u32 %v1013, 4294901760
        %v1015 = vsub.f32 %v1013, %v1014
        %v1016 = vand.u32 %v1015, 4294901760
        %1017 = vmatpush1.msra.mxu0 %v1016
        %v1018 = vand.u32 %v358, 4294901760
        %v1019 = vsub.f32 %v358, %v1018
        %v1020 = vand.u32 %v1019, 4294901760
        %v1021 = vsub.f32 %v1019, %v1020
        %v1022 = vand.u32 %v1021, 4294901760
        %1023 = vmatprep.subr.mxu0 %v1022
        %v1024 = vand.u32 %v357, 4294901760
        %v1025 = vsub.f32 %v357, %v1024
        %v1026 = vand.u32 %v1025, 4294901760
        %v1027 = vsub.f32 %v1025, %v1026
        %v1028 = vand.u32 %v1027, 4294901760
        %1029 = vmatpush1.msra.mxu0 %v1028
        %v1030 = vand.u32 %v360, 4294901760
        %v1031 = vsub.f32 %v360, %v1030
        %v1032 = vand.u32 %v1031, 4294901760
        %v1033 = vsub.f32 %v1031, %v1032
        %v1034 = vand.u32 %v1033, 4294901760
        %1035 = vmatprep.subr.mxu0 %v1034
        %v1036 = vand.u32 %v359, 4294901760
        %v1037 = vsub.f32 %v359, %v1036
        %v1038 = vand.u32 %v1037, 4294901760
        %v1039 = vsub.f32 %v1037, %v1038
        %v1040 = vand.u32 %v1039, 4294901760
        %1041 = vmatpush1.msra.mxu0 %v1040
        %1042 = vmatprep.subr.mxu0 0.0
        %1043 = vmatpush1.msra.mxu0 0.0
        %1044 = vmatprep.subr.mxu0 0.0
        %1045 = vmatpush1.msra.mxu0 0.0
        %1046 = vmatprep.subr.mxu0 0.0
        %1047 = vmatpush1.msra.mxu0 0.0
        %1048 = vmatprep.subr.mxu0 0.0
        %1049 = vmatpush1.msra.mxu0 0.0
        %1050 = vmatprep.subr.mxu0 0.0
        %1051 = vmatpush1.msra.mxu0 0.0
        %1052 = vmatprep.subr.mxu0 0.0
        %1053 = vmatpush1.msra.mxu0 0.0
        %1054 = vmatprep.subr.mxu0 0.0
        %1055 = vmatpush1.msra.mxu0 0.0
        %1056 = vmatprep.subr.mxu0 0.0
        %1057 = vmatpush1.msra.mxu0 0.0
        %1058 = vmatprep.subr.mxu0 0.0
        %1059 = vmatpush1.msra.mxu0 0.0
        %1060 = vmatprep.subr.mxu0 0.0
        %1061 = vmatpush1.msra.mxu0 0.0
        %1062 = vmatprep.subr.mxu0 0.0
        %1063 = vmatpush1.msra.mxu0 0.0
        %1064 = vmatprep.subr.mxu0 0.0
        %1065 = vmatpush1.msra.mxu0 0.0
        %1066 = vmatprep.subr.mxu0 0.0
        %1067 = vmatpush1.msra.mxu0 0.0
        %1068 = vmatprep.subr.mxu0 0.0
        %1069 = vmatpush1.msra.mxu0 0.0
        %1070 = vmatprep.subr.mxu0 0.0
        %1071 = vmatpush1.msra.mxu0 0.0
        %1072 = vmatprep.subr.mxu0 0.0
        %1073 = vmatpush1.msra.mxu0 0.0
        %1074 = vmatprep.subr.mxu0 0.0
        %1075 = vmatpush1.msra.mxu0 0.0
        %1076 = vmatprep.subr.mxu0 0.0
        %1077 = vmatpush1.msra.mxu0 0.0
        %1078 = vmatprep.subr.mxu0 0.0
        %1079 = vmatpush1.msra.mxu0 0.0
        %1080 = vmatprep.subr.mxu0 0.0
        %1081 = vmatpush1.msra.mxu0 0.0
        %1082 = vmatprep.subr.mxu0 0.0
        %1083 = vmatpush1.msra.mxu0 0.0
        %1084 = vmatprep.subr.mxu0 0.0
        %1085 = vmatpush1.msra.mxu0 0.0
        %1086 = vmatprep.subr.mxu0 0.0
        %1087 = vmatpush1.msra.mxu0 0.0
        %1088 = vmatprep.subr.mxu0 0.0
        %1089 = vmatpush1.msra.mxu0 0.0
        %1090 = vmatprep.subr.mxu0 0.0
        %1091 = vmatpush1.msra.mxu0 0.0
        %1092 = vmatprep.subr.mxu0 0.0
        %1093 = vmatpush1.msra.mxu0 0.0
        %1094 = vmatprep.subr.mxu0 0.0
        %1095 = vmatpush1.msra.mxu0 0.0
        %1096 = vmatprep.subr.mxu0 0.0
        %1097 = vmatpush1.msra.mxu0 0.0
        %1098 = vmatprep.mubr.f32.mxu0 0.0
        %v1099 = vand.u32 %v365, 4294901760
        %1100 = vmatmul.mubr.f32.gmra.mrb[0].mxu0 %v1099
        %v1101 = vpop.f32.mrb[0].mxu0
        %v1102 = vadd.f32 %v990, %v1101
        %v1103 = vpop.f32.mrb[0].mxu0
        %v1104 = vadd.f32 %v992, %v1103
        %1105 = vdwg.mxu0
        %v1106 = vand.u32 %v354, 4294901760
        %v1107 = vsub.f32 %v354, %v1106
        %1108 = vmatprep.subr.mxu0 %v1107
        %v1109 = vand.u32 %v353, 4294901760
        %v1110 = vsub.f32 %v353, %v1109
        %1111 = vmatpush1.msra.mxu0 %v1110
        %v1112 = vand.u32 %v356, 4294901760
        %v1113 = vsub.f32 %v356, %v1112
        %1114 = vmatprep.subr.mxu0 %v1113
        %v1115 = vand.u32 %v355, 4294901760
        %v1116 = vsub.f32 %v355, %v1115
        %1117 = vmatpush1.msra.mxu0 %v1116
        %v1118 = vand.u32 %v358, 4294901760
        %v1119 = vsub.f32 %v358, %v1118
        %1120 = vmatprep.subr.mxu0 %v1119
        %v1121 = vand.u32 %v357, 4294901760
        %v1122 = vsub.f32 %v357, %v1121
        %1123 = vmatpush1.msra.mxu0 %v1122
        %v1124 = vand.u32 %v360, 4294901760
        %v1125 = vsub.f32 %v360, %v1124
        %1126 = vmatprep.subr.mxu0 %v1125
        %v1127 = vand.u32 %v359, 4294901760
        %v1128 = vsub.f32 %v359, %v1127
        %1129 = vmatpush1.msra.mxu0 %v1128
        %1130 = vmatprep.subr.mxu0 0.0
        %1131 = vmatpush1.msra.mxu0 0.0
        %1132 = vmatprep.subr.mxu0 0.0
        %1133 = vmatpush1.msra.mxu0 0.0
        %1134 = vmatprep.subr.mxu0 0.0
        %1135 = vmatpush1.msra.mxu0 0.0
        %1136 = vmatprep.subr.mxu0 0.0
        %1137 = vmatpush1.msra.mxu0 0.0
        %1138 = vmatprep.subr.mxu0 0.0
        %1139 = vmatpush1.msra.mxu0 0.0
        %1140 = vmatprep.subr.mxu0 0.0
        %1141 = vmatpush1.msra.mxu0 0.0
        %1142 = vmatprep.subr.mxu0 0.0
        %1143 = vmatpush1.msra.mxu0 0.0
        %1144 = vmatprep.subr.mxu0 0.0
        %1145 = vmatpush1.msra.mxu0 0.0
        %1146 = vmatprep.subr.mxu0 0.0
        %1147 = vmatpush1.msra.mxu0 0.0
        %1148 = vmatprep.subr.mxu0 0.0
        %1149 = vmatpush1.msra.mxu0 0.0
        %1150 = vmatprep.subr.mxu0 0.0
        %1151 = vmatpush1.msra.mxu0 0.0
        %1152 = vmatprep.subr.mxu0 0.0
        %1153 = vmatpush1.msra.mxu0 0.0
        %1154 = vmatprep.subr.mxu0 0.0
        %1155 = vmatpush1.msra.mxu0 0.0
        %1156 = vmatprep.subr.mxu0 0.0
        %1157 = vmatpush1.msra.mxu0 0.0
        %1158 = vmatprep.subr.mxu0 0.0
        %1159 = vmatpush1.msra.mxu0 0.0
        %1160 = vmatprep.subr.mxu0 0.0
        %1161 = vmatpush1.msra.mxu0 0.0
        %1162 = vmatprep.subr.mxu0 0.0
        %1163 = vmatpush1.msra.mxu0 0.0
        %1164 = vmatprep.subr.mxu0 0.0
        %1165 = vmatpush1.msra.mxu0 0.0
        %1166 = vmatprep.subr.mxu0 0.0
        %1167 = vmatpush1.msra.mxu0 0.0
        %1168 = vmatprep.subr.mxu0 0.0
        %1169 = vmatpush1.msra.mxu0 0.0
        %1170 = vmatprep.subr.mxu0 0.0
        %1171 = vmatpush1.msra.mxu0 0.0
        %1172 = vmatprep.subr.mxu0 0.0
        %1173 = vmatpush1.msra.mxu0 0.0
        %1174 = vmatprep.subr.mxu0 0.0
        %1175 = vmatpush1.msra.mxu0 0.0
        %1176 = vmatprep.subr.mxu0 0.0
        %1177 = vmatpush1.msra.mxu0 0.0
        %1178 = vmatprep.subr.mxu0 0.0
        %1179 = vmatpush1.msra.mxu0 0.0
        %1180 = vmatprep.subr.mxu0 0.0
        %1181 = vmatpush1.msra.mxu0 0.0
        %1182 = vmatprep.subr.mxu0 0.0
        %1183 = vmatpush1.msra.mxu0 0.0
        %1184 = vmatprep.subr.mxu0 0.0
        %1185 = vmatpush1.msra.mxu0 0.0
        %1186 = vmatprep.mubr.f32.mxu0 0.0
        %v1187 = vand.u32 %v365, 4294901760
        %v1188 = vsub.f32 %v365, %v1187
        %1189 = vmatmul.mubr.f32.gmra.mrb[0].mxu0 %v1188
        %v1190 = vpop.f32.mrb[0].mxu0
        %v1191 = vadd.f32 %v1102, %v1190
        %v1192 = vpop.f32.mrb[0].mxu0
        %v1193 = vadd.f32 %v1104, %v1192
        %1194 = vdwg.mxu0
        %v1195 = vand.u32 %v354, 4294901760
        %1196 = vmatprep.subr.mxu0 %v1195
        %v1197 = vand.u32 %v353, 4294901760
        %1198 = vmatpush1.msra.mxu0 %v1197
        %v1199 = vand.u32 %v356, 4294901760
        %1200 = vmatprep.subr.mxu0 %v1199
        %v1201 = vand.u32 %v355, 4294901760
        %1202 = vmatpush1.msra.mxu0 %v1201
        %v1203 = vand.u32 %v358, 4294901760
        %1204 = vmatprep.subr.mxu0 %v1203
        %v1205 = vand.u32 %v357, 4294901760
        %1206 = vmatpush1.msra.mxu0 %v1205
        %v1207 = vand.u32 %v360, 4294901760
        %1208 = vmatprep.subr.mxu0 %v1207
        %v1209 = vand.u32 %v359, 4294901760
        %1210 = vmatpush1.msra.mxu0 %v1209
        %1211 = vmatprep.subr.mxu0 0.0
        %1212 = vmatpush1.msra.mxu0 0.0
        %1213 = vmatprep.subr.mxu0 0.0
        %1214 = vmatpush1.msra.mxu0 0.0
        %1215 = vmatprep.subr.mxu0 0.0
        %1216 = vmatpush1.msra.mxu0 0.0
        %1217 = vmatprep.subr.mxu0 0.0
        %1218 = vmatpush1.msra.mxu0 0.0
        %1219 = vmatprep.subr.mxu0 0.0
        %1220 = vmatpush1.msra.mxu0 0.0
        %1221 = vmatprep.subr.mxu0 0.0
        %1222 = vmatpush1.msra.mxu0 0.0
        %1223 = vmatprep.subr.mxu0 0.0
        %1224 = vmatpush1.msra.mxu0 0.0
        %1225 = vmatprep.subr.mxu0 0.0
        %1226 = vmatpush1.msra.mxu0 0.0
        %1227 = vmatprep.subr.mxu0 0.0
        %1228 = vmatpush1.msra.mxu0 0.0
        %1229 = vmatprep.subr.mxu0 0.0
        %1230 = vmatpush1.msra.mxu0 0.0
        %1231 = vmatprep.subr.mxu0 0.0
        %1232 = vmatpush1.msra.mxu0 0.0
        %1233 = vmatprep.subr.mxu0 0.0
        %1234 = vmatpush1.msra.mxu0 0.0
        %1235 = vmatprep.subr.mxu0 0.0
        %1236 = vmatpush1.msra.mxu0 0.0
        %1237 = vmatprep.subr.mxu0 0.0
        %1238 = vmatpush1.msra.mxu0 0.0
        %1239 = vmatprep.subr.mxu0 0.0
        %1240 = vmatpush1.msra.mxu0 0.0
        %1241 = vmatprep.subr.mxu0 0.0
        %1242 = vmatpush1.msra.mxu0 0.0
        %1243 = vmatprep.subr.mxu0 0.0
        %1244 = vmatpush1.msra.mxu0 0.0
        %1245 = vmatprep.subr.mxu0 0.0
        %1246 = vmatpush1.msra.mxu0 0.0
        %1247 = vmatprep.subr.mxu0 0.0
        %1248 = vmatpush1.msra.mxu0 0.0
        %1249 = vmatprep.subr.mxu0 0.0
        %1250 = vmatpush1.msra.mxu0 0.0
        %1251 = vmatprep.subr.mxu0 0.0
        %1252 = vmatpush1.msra.mxu0 0.0
        %1253 = vmatprep.subr.mxu0 0.0
        %1254 = vmatpush1.msra.mxu0 0.0
        %1255 = vmatprep.subr.mxu0 0.0
        %1256 = vmatpush1.msra.mxu0 0.0
        %1257 = vmatprep.subr.mxu0 0.0
        %1258 = vmatpush1.msra.mxu0 0.0
        %1259 = vmatprep.subr.mxu0 0.0
        %1260 = vmatpush1.msra.mxu0 0.0
        %1261 = vmatprep.subr.mxu0 0.0
        %1262 = vmatpush1.msra.mxu0 0.0
        %1263 = vmatprep.subr.mxu0 0.0
        %1264 = vmatpush1.msra.mxu0 0.0
        %1265 = vmatprep.subr.mxu0 0.0
        %1266 = vmatpush1.msra.mxu0 0.0
        %1267 = vmatprep.mubr.f32.mxu0 0.0
        %v1268 = vand.u32 %v365, 4294901760
        %v1269 = vsub.f32 %v365, %v1268
        %v1270 = vand.u32 %v1269, 4294901760
        %1271 = vmatmul.mubr.f32.gmra.mrb[0].mxu0 %v1270
        %v1272 = vpop.f32.mrb[0].mxu0
        %v1273 = vadd.f32 %v1191, %v1272
        %v1274 = vpop.f32.mrb[0].mxu0
        %v1275 = vadd.f32 %v1193, %v1274
        %1276 = vdwg.mxu0
        %v1277 = vand.u32 %v354, 4294901760
        %v1278 = vsub.f32 %v354, %v1277
        %v1279 = vand.u32 %v1278, 4294901760
        %1280 = vmatprep.subr.mxu0 %v1279
        %v1281 = vand.u32 %v353, 4294901760
        %v1282 = vsub.f32 %v353, %v1281
        %v1283 = vand.u32 %v1282, 4294901760
        %1284 = vmatpush1.msra.mxu0 %v1283
        %v1285 = vand.u32 %v356, 4294901760
        %v1286 = vsub.f32 %v356, %v1285
        %v1287 = vand.u32 %v1286, 4294901760
        %1288 = vmatprep.subr.mxu0 %v1287
        %v1289 = vand.u32 %v355, 4294901760
        %v1290 = vsub.f32 %v355, %v1289
        %v1291 = vand.u32 %v1290, 4294901760
        %1292 = vmatpush1.msra.mxu0 %v1291
        %v1293 = vand.u32 %v358, 4294901760
        %v1294 = vsub.f32 %v358, %v1293
        %v1295 = vand.u32 %v1294, 4294901760
        %1296 = vmatprep.subr.mxu0 %v1295
        %v1297 = vand.u32 %v357, 4294901760
        %v1298 = vsub.f32 %v357, %v1297
        %v1299 = vand.u32 %v1298, 4294901760
        %1300 = vmatpush1.msra.mxu0 %v1299
        %v1301 = vand.u32 %v360, 4294901760
        %v1302 = vsub.f32 %v360, %v1301
        %v1303 = vand.u32 %v1302, 4294901760
        %1304 = vmatprep.subr.mxu0 %v1303
        %v1305 = vand.u32 %v359, 4294901760
        %v1306 = vsub.f32 %v359, %v1305
        %v1307 = vand.u32 %v1306, 4294901760
        %1308 = vmatpush1.msra.mxu0 %v1307
        %1309 = vmatprep.subr.mxu0 0.0
        %1310 = vmatpush1.msra.mxu0 0.0
        %1311 = vmatprep.subr.mxu0 0.0
        %1312 = vmatpush1.msra.mxu0 0.0
        %1313 = vmatprep.subr.mxu0 0.0
        %1314 = vmatpush1.msra.mxu0 0.0
        %1315 = vmatprep.subr.mxu0 0.0
        %1316 = vmatpush1.msra.mxu0 0.0
        %1317 = vmatprep.subr.mxu0 0.0
        %1318 = vmatpush1.msra.mxu0 0.0
        %1319 = vmatprep.subr.mxu0 0.0
        %1320 = vmatpush1.msra.mxu0 0.0
        %1321 = vmatprep.subr.mxu0 0.0
        %1322 = vmatpush1.msra.mxu0 0.0
        %1323 = vmatprep.subr.mxu0 0.0
        %1324 = vmatpush1.msra.mxu0 0.0
        %1325 = vmatprep.subr.mxu0 0.0
        %1326 = vmatpush1.msra.mxu0 0.0
        %1327 = vmatprep.subr.mxu0 0.0
        %1328 = vmatpush1.msra.mxu0 0.0
        %1329 = vmatprep.subr.mxu0 0.0
        %1330 = vmatpush1.msra.mxu0 0.0
        %1331 = vmatprep.subr.mxu0 0.0
        %1332 = vmatpush1.msra.mxu0 0.0
        %1333 = vmatprep.subr.mxu0 0.0
        %1334 = vmatpush1.msra.mxu0 0.0
        %1335 = vmatprep.subr.mxu0 0.0
        %1336 = vmatpush1.msra.mxu0 0.0
        %1337 = vmatprep.subr.mxu0 0.0
        %1338 = vmatpush1.msra.mxu0 0.0
        %1339 = vmatprep.subr.mxu0 0.0
        %1340 = vmatpush1.msra.mxu0 0.0
        %1341 = vmatprep.subr.mxu0 0.0
        %1342 = vmatpush1.msra.mxu0 0.0
        %1343 = vmatprep.subr.mxu0 0.0
        %1344 = vmatpush1.msra.mxu0 0.0
        %1345 = vmatprep.subr.mxu0 0.0
        %1346 = vmatpush1.msra.mxu0 0.0
        %1347 = vmatprep.subr.mxu0 0.0
        %1348 = vmatpush1.msra.mxu0 0.0
        %1349 = vmatprep.subr.mxu0 0.0
        %1350 = vmatpush1.msra.mxu0 0.0
        %1351 = vmatprep.subr.mxu0 0.0
        %1352 = vmatpush1.msra.mxu0 0.0
        %1353 = vmatprep.subr.mxu0 0.0
        %1354 = vmatpush1.msra.mxu0 0.0
        %1355 = vmatprep.subr.mxu0 0.0
        %1356 = vmatpush1.msra.mxu0 0.0
        %1357 = vmatprep.subr.mxu0 0.0
        %1358 = vmatpush1.msra.mxu0 0.0
        %1359 = vmatprep.subr.mxu0 0.0
        %1360 = vmatpush1.msra.mxu0 0.0
        %1361 = vmatprep.subr.mxu0 0.0
        %1362 = vmatpush1.msra.mxu0 0.0
        %1363 = vmatprep.subr.mxu0 0.0
        %1364 = vmatpush1.msra.mxu0 0.0
        %1365 = vmatprep.mubr.f32.mxu0 0.0
        %v1366 = vand.u32 %v365, 4294901760
        %1367 = vmatmul.mubr.f32.gmra.mrb[0].mxu0 %v1366
        %v1368 = vpop.f32.mrb[0].mxu0
        %v1369 = vadd.f32 %v1273, %v1368
        %v1370 = vpop.f32.mrb[0].mxu0
        %v1371 = vadd.f32 %v1275, %v1370
        %1372 = vdwg.mxu0
        %v1373 = vand.u32 %v354, 4294901760
        %1374 = vmatprep.subr.mxu0 %v1373
        %v1375 = vand.u32 %v353, 4294901760
        %1376 = vmatpush1.msra.mxu0 %v1375
        %v1377 = vand.u32 %v356, 4294901760
        %1378 = vmatprep.subr.mxu0 %v1377
        %v1379 = vand.u32 %v355, 4294901760
        %1380 = vmatpush1.msra.mxu0 %v1379
        %v1381 = vand.u32 %v358, 4294901760
        %1382 = vmatprep.subr.mxu0 %v1381
        %v1383 = vand.u32 %v357, 4294901760
        %1384 = vmatpush1.msra.mxu0 %v1383
        %v1385 = vand.u32 %v360, 4294901760
        %1386 = vmatprep.subr.mxu0 %v1385
        %v1387 = vand.u32 %v359, 4294901760
        %1388 = vmatpush1.msra.mxu0 %v1387
        %1389 = vmatprep.subr.mxu0 0.0
        %1390 = vmatpush1.msra.mxu0 0.0
        %1391 = vmatprep.subr.mxu0 0.0
        %1392 = vmatpush1.msra.mxu0 0.0
        %1393 = vmatprep.subr.mxu0 0.0
        %1394 = vmatpush1.msra.mxu0 0.0
        %1395 = vmatprep.subr.mxu0 0.0
        %1396 = vmatpush1.msra.mxu0 0.0
        %1397 = vmatprep.subr.mxu0 0.0
        %1398 = vmatpush1.msra.mxu0 0.0
        %1399 = vmatprep.subr.mxu0 0.0
        %1400 = vmatpush1.msra.mxu0 0.0
        %1401 = vmatprep.subr.mxu0 0.0
        %1402 = vmatpush1.msra.mxu0 0.0
        %1403 = vmatprep.subr.mxu0 0.0
        %1404 = vmatpush1.msra.mxu0 0.0
        %1405 = vmatprep.subr.mxu0 0.0
        %1406 = vmatpush1.msra.mxu0 0.0
        %1407 = vmatprep.subr.mxu0 0.0
        %1408 = vmatpush1.msra.mxu0 0.0
        %1409 = vmatprep.subr.mxu0 0.0
        %1410 = vmatpush1.msra.mxu0 0.0
        %1411 = vmatprep.subr.mxu0 0.0
        %1412 = vmatpush1.msra.mxu0 0.0
        %1413 = vmatprep.subr.mxu0 0.0
        %1414 = vmatpush1.msra.mxu0 0.0
        %1415 = vmatprep.subr.mxu0 0.0
        %1416 = vmatpush1.msra.mxu0 0.0
        %1417 = vmatprep.subr.mxu0 0.0
        %1418 = vmatpush1.msra.mxu0 0.0
        %1419 = vmatprep.subr.mxu0 0.0
        %1420 = vmatpush1.msra.mxu0 0.0
        %1421 = vmatprep.subr.mxu0 0.0
        %1422 = vmatpush1.msra.mxu0 0.0
        %1423 = vmatprep.subr.mxu0 0.0
        %1424 = vmatpush1.msra.mxu0 0.0
        %1425 = vmatprep.subr.mxu0 0.0
        %1426 = vmatpush1.msra.mxu0 0.0
        %1427 = vmatprep.subr.mxu0 0.0
        %1428 = vmatpush1.msra.mxu0 0.0
        %1429 = vmatprep.subr.mxu0 0.0
        %1430 = vmatpush1.msra.mxu0 0.0
        %1431 = vmatprep.subr.mxu0 0.0
        %1432 = vmatpush1.msra.mxu0 0.0
        %1433 = vmatprep.subr.mxu0 0.0
        %1434 = vmatpush1.msra.mxu0 0.0
        %1435 = vmatprep.subr.mxu0 0.0
        %1436 = vmatpush1.msra.mxu0 0.0
        %1437 = vmatprep.subr.mxu0 0.0
        %1438 = vmatpush1.msra.mxu0 0.0
        %1439 = vmatprep.subr.mxu0 0.0
        %1440 = vmatpush1.msra.mxu0 0.0
        %1441 = vmatprep.subr.mxu0 0.0
        %1442 = vmatpush1.msra.mxu0 0.0
        %1443 = vmatprep.subr.mxu0 0.0
        %1444 = vmatpush1.msra.mxu0 0.0
        %1445 = vmatprep.mubr.f32.mxu0 0.0
        %v1446 = vand.u32 %v365, 4294901760
        %1447 = vmatmul.mubr.f32.gmra.mrb[0].mxu0 %v1446
        %v1448 = vpop.f32.mrb[0].mxu0
        %v1449 = vadd.f32 %v1369, %v1448
        %v1450 = vpop.f32.mrb[0].mxu0
        %v1451 = vadd.f32 %v1371, %v1450
        %1452 = vdwg.mxu0
        %v1454 = vsel %vm363, %v361, 0
        %v1456 = vand.u32 %v330, 4294901760
        %1457 = vmatprep.subr.mxu0 %v1456
        %v1458 = vand.u32 %v329, 4294901760
        %1459 = vmatpush1.msra.mxu0 %v1458
        %v1460 = vand.u32 %v332, 4294901760
        %1461 = vmatprep.subr.mxu0 %v1460
        %v1462 = vand.u32 %v331, 4294901760
        %1463 = vmatpush1.msra.mxu0 %v1462
        %v1464 = vand.u32 %v334, 4294901760
        %1465 = vmatprep.subr.mxu0 %v1464
        %v1466 = vand.u32 %v333, 4294901760
        %1467 = vmatpush1.msra.mxu0 %v1466
        %v1468 = vand.u32 %v336, 4294901760
        %1469 = vmatprep.subr.mxu0 %v1468
        %v1470 = vand.u32 %v335, 4294901760
        %1471 = vmatpush1.msra.mxu0 %v1470
        %1472 = vmatprep.subr.mxu0 0.0
        %1473 = vmatpush1.msra.mxu0 0.0
        %1474 = vmatprep.subr.mxu0 0.0
        %1475 = vmatpush1.msra.mxu0 0.0
        %1476 = vmatprep.subr.mxu0 0.0
        %1477 = vmatpush1.msra.mxu0 0.0
        %1478 = vmatprep.subr.mxu0 0.0
        %1479 = vmatpush1.msra.mxu0 0.0
        %1480 = vmatprep.subr.mxu0 0.0
        %1481 = vmatpush1.msra.mxu0 0.0
        %1482 = vmatprep.subr.mxu0 0.0
        %1483 = vmatpush1.msra.mxu0 0.0
        %1484 = vmatprep.subr.mxu0 0.0
        %1485 = vmatpush1.msra.mxu0 0.0
        %1486 = vmatprep.subr.mxu0 0.0
        %1487 = vmatpush1.msra.mxu0 0.0
        %1488 = vmatprep.subr.mxu0 0.0
        %1489 = vmatpush1.msra.mxu0 0.0
        %1490 = vmatprep.subr.mxu0 0.0
        %1491 = vmatpush1.msra.mxu0 0.0
        %1492 = vmatprep.subr.mxu0 0.0
        %1493 = vmatpush1.msra.mxu0 0.0
        %1494 = vmatprep.subr.mxu0 0.0
        %1495 = vmatpush1.msra.mxu0 0.0
        %1496 = vmatprep.subr.mxu0 0.0
        %1497 = vmatpush1.msra.mxu0 0.0
        %1498 = vmatprep.subr.mxu0 0.0
        %1499 = vmatpush1.msra.mxu0 0.0
        %1500 = vmatprep.subr.mxu0 0.0
        %1501 = vmatpush1.msra.mxu0 0.0
        %1502 = vmatprep.subr.mxu0 0.0
        %1503 = vmatpush1.msra.mxu0 0.0
        %1504 = vmatprep.subr.mxu0 0.0
        %1505 = vmatpush1.msra.mxu0 0.0
        %1506 = vmatprep.subr.mxu0 0.0
        %1507 = vmatpush1.msra.mxu0 0.0
        %1508 = vmatprep.subr.mxu0 0.0
        %1509 = vmatpush1.msra.mxu0 0.0
        %1510 = vmatprep.subr.mxu0 0.0
        %1511 = vmatpush1.msra.mxu0 0.0
        %1512 = vmatprep.subr.mxu0 0.0
        %1513 = vmatpush1.msra.mxu0 0.0
        %1514 = vmatprep.subr.mxu0 0.0
        %1515 = vmatpush1.msra.mxu0 0.0
        %1516 = vmatprep.subr.mxu0 0.0
        %1517 = vmatpush1.msra.mxu0 0.0
        %1518 = vmatprep.subr.mxu0 0.0
        %1519 = vmatpush1.msra.mxu0 0.0
        %1520 = vmatprep.subr.mxu0 0.0
        %1521 = vmatpush1.msra.mxu0 0.0
        %1522 = vmatprep.subr.mxu0 0.0
        %1523 = vmatpush1.msra.mxu0 0.0
        %1524 = vmatprep.subr.mxu0 0.0
        %1525 = vmatpush1.msra.mxu0 0.0
        %1526 = vmatprep.subr.mxu0 0.0
        %1527 = vmatpush1.msra.mxu0 0.0
        %1528 = vmatprep.mubr.f32.mxu0 0.0
        %v1529 = vand.u32 %v1454, 4294901760
        %v1530 = vsub.f32 %v1454, %v1529
        %v1531 = vand.u32 %v1530, 4294901760
        %v1532 = vsub.f32 %v1530, %v1531
        %v1533 = vand.u32 %v1532, 4294901760
        %1534 = vmatmul.mubr.f32.gmra.mrb[0].mxu0 %v1533
        %v1535 = vpop.f32.mrb[0].mxu0
        %v1536 = vadd.f32 %v906, %v1535
        %v1537 = vpop.f32.mrb[0].mxu0
        %v1538 = vadd.f32 %v908, %v1537
        %1539 = vdwg.mxu0
        %v1540 = vand.u32 %v330, 4294901760
        %v1541 = vsub.f32 %v330, %v1540
        %v1542 = vand.u32 %v1541, 4294901760
        %v1543 = vsub.f32 %v1541, %v1542
        %v1544 = vand.u32 %v1543, 4294901760
        %1545 = vmatprep.subr.mxu0 %v1544
        %v1546 = vand.u32 %v329, 4294901760
        %v1547 = vsub.f32 %v329, %v1546
        %v1548 = vand.u32 %v1547, 4294901760
        %v1549 = vsub.f32 %v1547, %v1548
        %v1550 = vand.u32 %v1549, 4294901760
        %1551 = vmatpush1.msra.mxu0 %v1550
        %v1552 = vand.u32 %v332, 4294901760
        %v1553 = vsub.f32 %v332, %v1552
        %v1554 = vand.u32 %v1553, 4294901760
        %v1555 = vsub.f32 %v1553, %v1554
        %v1556 = vand.u32 %v1555, 4294901760
        %1557 = vmatprep.subr.mxu0 %v1556
        %v1558 = vand.u32 %v331, 4294901760
        %v1559 = vsub.f32 %v331, %v1558
        %v1560 = vand.u32 %v1559, 4294901760
        %v1561 = vsub.f32 %v1559, %v1560
        %v1562 = vand.u32 %v1561, 4294901760
        %1563 = vmatpush1.msra.mxu0 %v1562
        %v1564 = vand.u32 %v334, 4294901760
        %v1565 = vsub.f32 %v334, %v1564
        %v1566 = vand.u32 %v1565, 4294901760
        %v1567 = vsub.f32 %v1565, %v1566
        %v1568 = vand.u32 %v1567, 4294901760
        %1569 = vmatprep.subr.mxu0 %v1568
        %v1570 = vand.u32 %v333, 4294901760
        %v1571 = vsub.f32 %v333, %v1570
        %v1572 = vand.u32 %v1571, 4294901760
        %v1573 = vsub.f32 %v1571, %v1572
        %v1574 = vand.u32 %v1573, 4294901760
        %1575 = vmatpush1.msra.mxu0 %v1574
        %v1576 = vand.u32 %v336, 4294901760
        %v1577 = vsub.f32 %v336, %v1576
        %v1578 = vand.u32 %v1577, 4294901760
        %v1579 = vsub.f32 %v1577, %v1578
        %v1580 = vand.u32 %v1579, 4294901760
        %1581 = vmatprep.subr.mxu0 %v1580
        %v1582 = vand.u32 %v335, 4294901760
        %v1583 = vsub.f32 %v335, %v1582
        %v1584 = vand.u32 %v1583, 4294901760
        %v1585 = vsub.f32 %v1583, %v1584
        %v1586 = vand.u32 %v1585, 4294901760
        %1587 = vmatpush1.msra.mxu0 %v1586
        %1588 = vmatprep.subr.mxu0 0.0
        %1589 = vmatpush1.msra.mxu0 0.0
        %1590 = vmatprep.subr.mxu0 0.0
        %1591 = vmatpush1.msra.mxu0 0.0
        %1592 = vmatprep.subr.mxu0 0.0
        %1593 = vmatpush1.msra.mxu0 0.0
        %1594 = vmatprep.subr.mxu0 0.0
        %1595 = vmatpush1.msra.mxu0 0.0
        %1596 = vmatprep.subr.mxu0 0.0
        %1597 = vmatpush1.msra.mxu0 0.0
        %1598 = vmatprep.subr.mxu0 0.0
        %1599 = vmatpush1.msra.mxu0 0.0
        %1600 = vmatprep.subr.mxu0 0.0
        %1601 = vmatpush1.msra.mxu0 0.0
        %1602 = vmatprep.subr.mxu0 0.0
        %1603 = vmatpush1.msra.mxu0 0.0
        %1604 = vmatprep.subr.mxu0 0.0
        %1605 = vmatpush1.msra.mxu0 0.0
        %1606 = vmatprep.subr.mxu0 0.0
        %1607 = vmatpush1.msra.mxu0 0.0
        %1608 = vmatprep.subr.mxu0 0.0
        %1609 = vmatpush1.msra.mxu0 0.0
        %1610 = vmatprep.subr.mxu0 0.0
        %1611 = vmatpush1.msra.mxu0 0.0
        %1612 = vmatprep.subr.mxu0 0.0
        %1613 = vmatpush1.msra.mxu0 0.0
        %1614 = vmatprep.subr.mxu0 0.0
        %1615 = vmatpush1.msra.mxu0 0.0
        %1616 = vmatprep.subr.mxu0 0.0
        %1617 = vmatpush1.msra.mxu0 0.0
        %1618 = vmatprep.subr.mxu0 0.0
        %1619 = vmatpush1.msra.mxu0 0.0
        %1620 = vmatprep.subr.mxu0 0.0
        %1621 = vmatpush1.msra.mxu0 0.0
        %1622 = vmatprep.subr.mxu0 0.0
        %1623 = vmatpush1.msra.mxu0 0.0
        %1624 = vmatprep.subr.mxu0 0.0
        %1625 = vmatpush1.msra.mxu0 0.0
        %1626 = vmatprep.subr.mxu0 0.0
        %1627 = vmatpush1.msra.mxu0 0.0
        %1628 = vmatprep.subr.mxu0 0.0
        %1629 = vmatpush1.msra.mxu0 0.0
        %1630 = vmatprep.subr.mxu0 0.0
        %1631 = vmatpush1.msra.mxu0 0.0
        %1632 = vmatprep.subr.mxu0 0.0
        %1633 = vmatpush1.msra.mxu0 0.0
        %1634 = vmatprep.subr.mxu0 0.0
        %1635 = vmatpush1.msra.mxu0 0.0
        %1636 = vmatprep.subr.mxu0 0.0
        %1637 = vmatpush1.msra.mxu0 0.0
        %1638 = vmatprep.subr.mxu0 0.0
        %1639 = vmatpush1.msra.mxu0 0.0
        %1640 = vmatprep.subr.mxu0 0.0
        %1641 = vmatpush1.msra.mxu0 0.0
        %1642 = vmatprep.subr.mxu0 0.0
        %1643 = vmatpush1.msra.mxu0 0.0
        %1644 = vmatprep.mubr.f32.mxu0 0.0
        %v1645 = vand.u32 %v1454, 4294901760
        %1646 = vmatmul.mubr.f32.gmra.mrb[0].mxu0 %v1645
        %v1647 = vpop.f32.mrb[0].mxu0
        %v1648 = vadd.f32 %v1536, %v1647
        %v1649 = vpop.f32.mrb[0].mxu0
        %v1650 = vadd.f32 %v1538, %v1649
        %1651 = vdwg.mxu0
        %v1652 = vand.u32 %v330, 4294901760
        %v1653 = vsub.f32 %v330, %v1652
        %1654 = vmatprep.subr.mxu0 %v1653
        %v1655 = vand.u32 %v329, 4294901760
        %v1656 = vsub.f32 %v329, %v1655
        %1657 = vmatpush1.msra.mxu0 %v1656
        %v1658 = vand.u32 %v332, 4294901760
        %v1659 = vsub.f32 %v332, %v1658
        %1660 = vmatprep.subr.mxu0 %v1659
        %v1661 = vand.u32 %v331, 4294901760
        %v1662 = vsub.f32 %v331, %v1661
        %1663 = vmatpush1.msra.mxu0 %v1662
        %v1664 = vand.u32 %v334, 4294901760
        %v1665 = vsub.f32 %v334, %v1664
        %1666 = vmatprep.subr.mxu0 %v1665
        %v1667 = vand.u32 %v333, 4294901760
        %v1668 = vsub.f32 %v333, %v1667
        %1669 = vmatpush1.msra.mxu0 %v1668
        %v1670 = vand.u32 %v336, 4294901760
        %v1671 = vsub.f32 %v336, %v1670
        %1672 = vmatprep.subr.mxu0 %v1671
        %v1673 = vand.u32 %v335, 4294901760
        %v1674 = vsub.f32 %v335, %v1673
        %1675 = vmatpush1.msra.mxu0 %v1674
        %1676 = vmatprep.subr.mxu0 0.0
        %1677 = vmatpush1.msra.mxu0 0.0
        %1678 = vmatprep.subr.mxu0 0.0
        %1679 = vmatpush1.msra.mxu0 0.0
        %1680 = vmatprep.subr.mxu0 0.0
        %1681 = vmatpush1.msra.mxu0 0.0
        %1682 = vmatprep.subr.mxu0 0.0
        %1683 = vmatpush1.msra.mxu0 0.0
        %1684 = vmatprep.subr.mxu0 0.0
        %1685 = vmatpush1.msra.mxu0 0.0
        %1686 = vmatprep.subr.mxu0 0.0
        %1687 = vmatpush1.msra.mxu0 0.0
        %1688 = vmatprep.subr.mxu0 0.0
        %1689 = vmatpush1.msra.mxu0 0.0
        %1690 = vmatprep.subr.mxu0 0.0
        %1691 = vmatpush1.msra.mxu0 0.0
        %1692 = vmatprep.subr.mxu0 0.0
        %1693 = vmatpush1.msra.mxu0 0.0
        %1694 = vmatprep.subr.mxu0 0.0
        %1695 = vmatpush1.msra.mxu0 0.0
        %1696 = vmatprep.subr.mxu0 0.0
        %1697 = vmatpush1.msra.mxu0 0.0
        %1698 = vmatprep.subr.mxu0 0.0
        %1699 = vmatpush1.msra.mxu0 0.0
        %1700 = vmatprep.subr.mxu0 0.0
        %1701 = vmatpush1.msra.mxu0 0.0
        %1702 = vmatprep.subr.mxu0 0.0
        %1703 = vmatpush1.msra.mxu0 0.0
        %1704 = vmatprep.subr.mxu0 0.0
        %1705 = vmatpush1.msra.mxu0 0.0
        %1706 = vmatprep.subr.mxu0 0.0
        %1707 = vmatpush1.msra.mxu0 0.0
        %1708 = vmatprep.subr.mxu0 0.0
        %1709 = vmatpush1.msra.mxu0 0.0
        %1710 = vmatprep.subr.mxu0 0.0
        %1711 = vmatpush1.msra.mxu0 0.0
        %1712 = vmatprep.subr.mxu0 0.0
        %1713 = vmatpush1.msra.mxu0 0.0
        %1714 = vmatprep.subr.mxu0 0.0
        %1715 = vmatpush1.msra.mxu0 0.0
        %1716 = vmatprep.subr.mxu0 0.0
        %1717 = vmatpush1.msra.mxu0 0.0
        %1718 = vmatprep.subr.mxu0 0.0
        %1719 = vmatpush1.msra.mxu0 0.0
        %1720 = vmatprep.subr.mxu0 0.0
        %1721 = vmatpush1.msra.mxu0 0.0
        %1722 = vmatprep.subr.mxu0 0.0
        %1723 = vmatpush1.msra.mxu0 0.0
        %1724 = vmatprep.subr.mxu0 0.0
        %1725 = vmatpush1.msra.mxu0 0.0
        %1726 = vmatprep.subr.mxu0 0.0
        %1727 = vmatpush1.msra.mxu0 0.0
        %1728 = vmatprep.subr.mxu0 0.0
        %1729 = vmatpush1.msra.mxu0 0.0
        %1730 = vmatprep.subr.mxu0 0.0
        %1731 = vmatpush1.msra.mxu0 0.0
        %1732 = vmatprep.mubr.f32.mxu0 0.0
        %v1733 = vand.u32 %v1454, 4294901760
        %v1734 = vsub.f32 %v1454, %v1733
        %1735 = vmatmul.mubr.f32.gmra.mrb[0].mxu0 %v1734
        %v1736 = vpop.f32.mrb[0].mxu0
        %v1737 = vadd.f32 %v1648, %v1736
        %v1738 = vpop.f32.mrb[0].mxu0
        %v1739 = vadd.f32 %v1650, %v1738
        %1740 = vdwg.mxu0
        %v1741 = vand.u32 %v330, 4294901760
        %1742 = vmatprep.subr.mxu0 %v1741
        %v1743 = vand.u32 %v329, 4294901760
        %1744 = vmatpush1.msra.mxu0 %v1743
        %v1745 = vand.u32 %v332, 4294901760
        %1746 = vmatprep.subr.mxu0 %v1745
        %v1747 = vand.u32 %v331, 4294901760
        %1748 = vmatpush1.msra.mxu0 %v1747
        %v1749 = vand.u32 %v334, 4294901760
        %1750 = vmatprep.subr.mxu0 %v1749
        %v1751 = vand.u32 %v333, 4294901760
        %1752 = vmatpush1.msra.mxu0 %v1751
        %v1753 = vand.u32 %v336, 4294901760
        %1754 = vmatprep.subr.mxu0 %v1753
        %v1755 = vand.u32 %v335, 4294901760
        %1756 = vmatpush1.msra.mxu0 %v1755
        %1757 = vmatprep.subr.mxu0 0.0
        %1758 = vmatpush1.msra.mxu0 0.0
        %1759 = vmatprep.subr.mxu0 0.0
        %1760 = vmatpush1.msra.mxu0 0.0
        %1761 = vmatprep.subr.mxu0 0.0
        %1762 = vmatpush1.msra.mxu0 0.0
        %1763 = vmatprep.subr.mxu0 0.0
        %1764 = vmatpush1.msra.mxu0 0.0
        %1765 = vmatprep.subr.mxu0 0.0
        %1766 = vmatpush1.msra.mxu0 0.0
        %1767 = vmatprep.subr.mxu0 0.0
        %1768 = vmatpush1.msra.mxu0 0.0
        %1769 = vmatprep.subr.mxu0 0.0
        %1770 = vmatpush1.msra.mxu0 0.0
        %1771 = vmatprep.subr.mxu0 0.0
        %1772 = vmatpush1.msra.mxu0 0.0
        %1773 = vmatprep.subr.mxu0 0.0
        %1774 = vmatpush1.msra.mxu0 0.0
        %1775 = vmatprep.subr.mxu0 0.0
        %1776 = vmatpush1.msra.mxu0 0.0
        %1777 = vmatprep.subr.mxu0 0.0
        %1778 = vmatpush1.msra.mxu0 0.0
        %1779 = vmatprep.subr.mxu0 0.0
        %1780 = vmatpush1.msra.mxu0 0.0
        %1781 = vmatprep.subr.mxu0 0.0
        %1782 = vmatpush1.msra.mxu0 0.0
        %1783 = vmatprep.subr.mxu0 0.0
        %1784 = vmatpush1.msra.mxu0 0.0
        %1785 = vmatprep.subr.mxu0 0.0
        %1786 = vmatpush1.msra.mxu0 0.0
        %1787 = vmatprep.subr.mxu0 0.0
        %1788 = vmatpush1.msra.mxu0 0.0
        %1789 = vmatprep.subr.mxu0 0.0
        %1790 = vmatpush1.msra.mxu0 0.0
        %1791 = vmatprep.subr.mxu0 0.0
        %1792 = vmatpush1.msra.mxu0 0.0
        %1793 = vmatprep.subr.mxu0 0.0
        %1794 = vmatpush1.msra.mxu0 0.0
        %1795 = vmatprep.subr.mxu0 0.0
        %1796 = vmatpush1.msra.mxu0 0.0
        %1797 = vmatprep.subr.mxu0 0.0
        %1798 = vmatpush1.msra.mxu0 0.0
        %1799 = vmatprep.subr.mxu0 0.0
        %1800 = vmatpush1.msra.mxu0 0.0
        %1801 = vmatprep.subr.mxu0 0.0
        %1802 = vmatpush1.msra.mxu0 0.0
        %1803 = vmatprep.subr.mxu0 0.0
        %1804 = vmatpush1.msra.mxu0 0.0
        %1805 = vmatprep.subr.mxu0 0.0
        %1806 = vmatpush1.msra.mxu0 0.0
        %1807 = vmatprep.subr.mxu0 0.0
        %1808 = vmatpush1.msra.mxu0 0.0
        %1809 = vmatprep.subr.mxu0 0.0
        %1810 = vmatpush1.msra.mxu0 0.0
        %1811 = vmatprep.subr.mxu0 0.0
        %1812 = vmatpush1.msra.mxu0 0.0
        %1813 = vmatprep.mubr.f32.mxu0 0.0
        %v1814 = vand.u32 %v1454, 4294901760
        %v1815 = vsub.f32 %v1454, %v1814
        %v1816 = vand.u32 %v1815, 4294901760
        %1817 = vmatmul.mubr.f32.gmra.mrb[0].mxu0 %v1816
        %v1818 = vpop.f32.mrb[0].mxu0
        %v1819 = vadd.f32 %v1737, %v1818
        %v1820 = vpop.f32.mrb[0].mxu0
        %v1821 = vadd.f32 %v1739, %v1820
        %1822 = vdwg.mxu0
        %v1823 = vand.u32 %v330, 4294901760
        %v1824 = vsub.f32 %v330, %v1823
        %v1825 = vand.u32 %v1824, 4294901760
        %1826 = vmatprep.subr.mxu0 %v1825
        %v1827 = vand.u32 %v329, 4294901760
        %v1828 = vsub.f32 %v329, %v1827
        %v1829 = vand.u32 %v1828, 4294901760
        %1830 = vmatpush1.msra.mxu0 %v1829
        %v1831 = vand.u32 %v332, 4294901760
        %v1832 = vsub.f32 %v332, %v1831
        %v1833 = vand.u32 %v1832, 4294901760
        %1834 = vmatprep.subr.mxu0 %v1833
        %v1835 = vand.u32 %v331, 4294901760
        %v1836 = vsub.f32 %v331, %v1835
        %v1837 = vand.u32 %v1836, 4294901760
        %1838 = vmatpush1.msra.mxu0 %v1837
        %v1839 = vand.u32 %v334, 4294901760
        %v1840 = vsub.f32 %v334, %v1839
        %v1841 = vand.u32 %v1840, 4294901760
        %1842 = vmatprep.subr.mxu0 %v1841
        %v1843 = vand.u32 %v333, 4294901760
        %v1844 = vsub.f32 %v333, %v1843
        %v1845 = vand.u32 %v1844, 4294901760
        %1846 = vmatpush1.msra.mxu0 %v1845
        %v1847 = vand.u32 %v336, 4294901760
        %v1848 = vsub.f32 %v336, %v1847
        %v1849 = vand.u32 %v1848, 4294901760
        %1850 = vmatprep.subr.mxu0 %v1849
        %v1851 = vand.u32 %v335, 4294901760
        %v1852 = vsub.f32 %v335, %v1851
        %v1853 = vand.u32 %v1852, 4294901760
        %1854 = vmatpush1.msra.mxu0 %v1853
        %1855 = vmatprep.subr.mxu0 0.0
        %1856 = vmatpush1.msra.mxu0 0.0
        %1857 = vmatprep.subr.mxu0 0.0
        %1858 = vmatpush1.msra.mxu0 0.0
        %1859 = vmatprep.subr.mxu0 0.0
        %1860 = vmatpush1.msra.mxu0 0.0
        %1861 = vmatprep.subr.mxu0 0.0
        %1862 = vmatpush1.msra.mxu0 0.0
        %1863 = vmatprep.subr.mxu0 0.0
        %1864 = vmatpush1.msra.mxu0 0.0
        %1865 = vmatprep.subr.mxu0 0.0
        %1866 = vmatpush1.msra.mxu0 0.0
        %1867 = vmatprep.subr.mxu0 0.0
        %1868 = vmatpush1.msra.mxu0 0.0
        %1869 = vmatprep.subr.mxu0 0.0
        %1870 = vmatpush1.msra.mxu0 0.0
        %1871 = vmatprep.subr.mxu0 0.0
        %1872 = vmatpush1.msra.mxu0 0.0
        %1873 = vmatprep.subr.mxu0 0.0
        %1874 = vmatpush1.msra.mxu0 0.0
        %1875 = vmatprep.subr.mxu0 0.0
        %1876 = vmatpush1.msra.mxu0 0.0
        %1877 = vmatprep.subr.mxu0 0.0
        %1878 = vmatpush1.msra.mxu0 0.0
        %1879 = vmatprep.subr.mxu0 0.0
        %1880 = vmatpush1.msra.mxu0 0.0
        %1881 = vmatprep.subr.mxu0 0.0
        %1882 = vmatpush1.msra.mxu0 0.0
        %1883 = vmatprep.subr.mxu0 0.0
        %1884 = vmatpush1.msra.mxu0 0.0
        %1885 = vmatprep.subr.mxu0 0.0
        %1886 = vmatpush1.msra.mxu0 0.0
        %1887 = vmatprep.subr.mxu0 0.0
        %1888 = vmatpush1.msra.mxu0 0.0
        %1889 = vmatprep.subr.mxu0 0.0
        %1890 = vmatpush1.msra.mxu0 0.0
        %1891 = vmatprep.subr.mxu0 0.0
        %1892 = vmatpush1.msra.mxu0 0.0
        %1893 = vmatprep.subr.mxu0 0.0
        %1894 = vmatpush1.msra.mxu0 0.0
        %1895 = vmatprep.subr.mxu0 0.0
        %1896 = vmatpush1.msra.mxu0 0.0
        %1897 = vmatprep.subr.mxu0 0.0
        %1898 = vmatpush1.msra.mxu0 0.0
        %1899 = vmatprep.subr.mxu0 0.0
        %1900 = vmatpush1.msra.mxu0 0.0
        %1901 = vmatprep.subr.mxu0 0.0
        %1902 = vmatpush1.msra.mxu0 0.0
        %1903 = vmatprep.subr.mxu0 0.0
        %1904 = vmatpush1.msra.mxu0 0.0
        %1905 = vmatprep.subr.mxu0 0.0
        %1906 = vmatpush1.msra.mxu0 0.0
        %1907 = vmatprep.subr.mxu0 0.0
        %1908 = vmatpush1.msra.mxu0 0.0
        %1909 = vmatprep.subr.mxu0 0.0
        %1910 = vmatpush1.msra.mxu0 0.0
        %1911 = vmatprep.mubr.f32.mxu0 0.0
        %v1912 = vand.u32 %v1454, 4294901760
        %1913 = vmatmul.mubr.f32.gmra.mrb[0].mxu0 %v1912
        %v1914 = vpop.f32.mrb[0].mxu0
        %v1915 = vadd.f32 %v1819, %v1914
        %v1916 = vpop.f32.mrb[0].mxu0
        %v1917 = vadd.f32 %v1821, %v1916
        %1918 = vdwg.mxu0
        %v1919 = vand.u32 %v330, 4294901760
        %1920 = vmatprep.subr.mxu0 %v1919
        %v1921 = vand.u32 %v329, 4294901760
        %1922 = vmatpush1.msra.mxu0 %v1921
        %v1923 = vand.u32 %v332, 4294901760
        %1924 = vmatprep.subr.mxu0 %v1923
        %v1925 = vand.u32 %v331, 4294901760
        %1926 = vmatpush1.msra.mxu0 %v1925
        %v1927 = vand.u32 %v334, 4294901760
        %1928 = vmatprep.subr.mxu0 %v1927
        %v1929 = vand.u32 %v333, 4294901760
        %1930 = vmatpush1.msra.mxu0 %v1929
        %v1931 = vand.u32 %v336, 4294901760
        %1932 = vmatprep.subr.mxu0 %v1931
        %v1933 = vand.u32 %v335, 4294901760
        %1934 = vmatpush1.msra.mxu0 %v1933
        %1935 = vmatprep.subr.mxu0 0.0
        %1936 = vmatpush1.msra.mxu0 0.0
        %1937 = vmatprep.subr.mxu0 0.0
        %1938 = vmatpush1.msra.mxu0 0.0
        %1939 = vmatprep.subr.mxu0 0.0
        %1940 = vmatpush1.msra.mxu0 0.0
        %1941 = vmatprep.subr.mxu0 0.0
        %1942 = vmatpush1.msra.mxu0 0.0
        %1943 = vmatprep.subr.mxu0 0.0
        %1944 = vmatpush1.msra.mxu0 0.0
        %1945 = vmatprep.subr.mxu0 0.0
        %1946 = vmatpush1.msra.mxu0 0.0
        %1947 = vmatprep.subr.mxu0 0.0
        %1948 = vmatpush1.msra.mxu0 0.0
        %1949 = vmatprep.subr.mxu0 0.0
        %1950 = vmatpush1.msra.mxu0 0.0
        %1951 = vmatprep.subr.mxu0 0.0
        %1952 = vmatpush1.msra.mxu0 0.0
        %1953 = vmatprep.subr.mxu0 0.0
        %1954 = vmatpush1.msra.mxu0 0.0
        %1955 = vmatprep.subr.mxu0 0.0
        %1956 = vmatpush1.msra.mxu0 0.0
        %1957 = vmatprep.subr.mxu0 0.0
        %1958 = vmatpush1.msra.mxu0 0.0
        %1959 = vmatprep.subr.mxu0 0.0
        %1960 = vmatpush1.msra.mxu0 0.0
        %1961 = vmatprep.subr.mxu0 0.0
        %1962 = vmatpush1.msra.mxu0 0.0
        %1963 = vmatprep.subr.mxu0 0.0
        %1964 = vmatpush1.msra.mxu0 0.0
        %1965 = vmatprep.subr.mxu0 0.0
        %1966 = vmatpush1.msra.mxu0 0.0
        %1967 = vmatprep.subr.mxu0 0.0
        %1968 = vmatpush1.msra.mxu0 0.0
        %1969 = vmatprep.subr.mxu0 0.0
        %1970 = vmatpush1.msra.mxu0 0.0
        %1971 = vmatprep.subr.mxu0 0.0
        %1972 = vmatpush1.msra.mxu0 0.0
        %1973 = vmatprep.subr.mxu0 0.0
        %1974 = vmatpush1.msra.mxu0 0.0
        %1975 = vmatprep.subr.mxu0 0.0
        %1976 = vmatpush1.msra.mxu0 0.0
        %1977 = vmatprep.subr.mxu0 0.0
        %1978 = vmatpush1.msra.mxu0 0.0
        %1979 = vmatprep.subr.mxu0 0.0
        %1980 = vmatpush1.msra.mxu0 0.0
        %1981 = vmatprep.subr.mxu0 0.0
        %1982 = vmatpush1.msra.mxu0 0.0
        %1983 = vmatprep.subr.mxu0 0.0
        %1984 = vmatpush1.msra.mxu0 0.0
        %1985 = vmatprep.subr.mxu0 0.0
        %1986 = vmatpush1.msra.mxu0 0.0
        %1987 = vmatprep.subr.mxu0 0.0
        %1988 = vmatpush1.msra.mxu0 0.0
        %1989 = vmatprep.subr.mxu0 0.0
        %1990 = vmatpush1.msra.mxu0 0.0
        %1991 = vmatprep.mubr.f32.mxu0 0.0
        %v1992 = vand.u32 %v1454, 4294901760
        %1993 = vmatmul.mubr.f32.gmra.mrb[0].mxu0 %v1992
        %v1994 = vpop.f32.mrb[0].mxu0
        %v1995 = vadd.f32 %v1915, %v1994
        %v1996 = vpop.f32.mrb[0].mxu0
        %v1997 = vadd.f32 %v1917, %v1996
        %1998 = vdwg.mxu0
        %v1999 = vand.u32 %v338, 4294901760
        %2000 = vmatprep.subr.mxu0 %v1999
        %v2001 = vand.u32 %v337, 4294901760
        %2002 = vmatpush1.msra.mxu0 %v2001
        %v2003 = vand.u32 %v340, 4294901760
        %2004 = vmatprep.subr.mxu0 %v2003
        %v2005 = vand.u32 %v339, 4294901760
        %2006 = vmatpush1.msra.mxu0 %v2005
        %v2007 = vand.u32 %v342, 4294901760
        %2008 = vmatprep.subr.mxu0 %v2007
        %v2009 = vand.u32 %v341, 4294901760
        %2010 = vmatpush1.msra.mxu0 %v2009
        %v2011 = vand.u32 %v344, 4294901760
        %2012 = vmatprep.subr.mxu0 %v2011
        %v2013 = vand.u32 %v343, 4294901760
        %2014 = vmatpush1.msra.mxu0 %v2013
        %2015 = vmatprep.subr.mxu0 0.0
        %2016 = vmatpush1.msra.mxu0 0.0
        %2017 = vmatprep.subr.mxu0 0.0
        %2018 = vmatpush1.msra.mxu0 0.0
        %2019 = vmatprep.subr.mxu0 0.0
        %2020 = vmatpush1.msra.mxu0 0.0
        %2021 = vmatprep.subr.mxu0 0.0
        %2022 = vmatpush1.msra.mxu0 0.0
        %2023 = vmatprep.subr.mxu0 0.0
        %2024 = vmatpush1.msra.mxu0 0.0
        %2025 = vmatprep.subr.mxu0 0.0
        %2026 = vmatpush1.msra.mxu0 0.0
        %2027 = vmatprep.subr.mxu0 0.0
        %2028 = vmatpush1.msra.mxu0 0.0
        %2029 = vmatprep.subr.mxu0 0.0
        %2030 = vmatpush1.msra.mxu0 0.0
        %2031 = vmatprep.subr.mxu0 0.0
        %2032 = vmatpush1.msra.mxu0 0.0
        %2033 = vmatprep.subr.mxu0 0.0
        %2034 = vmatpush1.msra.mxu0 0.0
        %2035 = vmatprep.subr.mxu0 0.0
        %2036 = vmatpush1.msra.mxu0 0.0
        %2037 = vmatprep.subr.mxu0 0.0
        %2038 = vmatpush1.msra.mxu0 0.0
        %2039 = vmatprep.subr.mxu0 0.0
        %2040 = vmatpush1.msra.mxu0 0.0
        %2041 = vmatprep.subr.mxu0 0.0
        %2042 = vmatpush1.msra.mxu0 0.0
        %2043 = vmatprep.subr.mxu0 0.0
        %2044 = vmatpush1.msra.mxu0 0.0
        %2045 = vmatprep.subr.mxu0 0.0
        %2046 = vmatpush1.msra.mxu0 0.0
        %2047 = vmatprep.subr.mxu0 0.0
        %2048 = vmatpush1.msra.mxu0 0.0
        %2049 = vmatprep.subr.mxu0 0.0
        %2050 = vmatpush1.msra.mxu0 0.0
        %2051 = vmatprep.subr.mxu0 0.0
        %2052 = vmatpush1.msra.mxu0 0.0
        %2053 = vmatprep.subr.mxu0 0.0
        %2054 = vmatpush1.msra.mxu0 0.0
        %2055 = vmatprep.subr.mxu0 0.0
        %2056 = vmatpush1.msra.mxu0 0.0
        %2057 = vmatprep.subr.mxu0 0.0
        %2058 = vmatpush1.msra.mxu0 0.0
        %2059 = vmatprep.subr.mxu0 0.0
        %2060 = vmatpush1.msra.mxu0 0.0
        %2061 = vmatprep.subr.mxu0 0.0
        %2062 = vmatpush1.msra.mxu0 0.0
        %2063 = vmatprep.subr.mxu0 0.0
        %2064 = vmatpush1.msra.mxu0 0.0
        %2065 = vmatprep.subr.mxu0 0.0
        %2066 = vmatpush1.msra.mxu0 0.0
        %2067 = vmatprep.subr.mxu0 0.0
        %2068 = vmatpush1.msra.mxu0 0.0
        %2069 = vmatprep.subr.mxu0 0.0
        %2070 = vmatpush1.msra.mxu0 0.0
        %2071 = vmatprep.mubr.f32.mxu0 0.0
        %v2072 = vand.u32 %v1454, 4294901760
        %v2073 = vsub.f32 %v1454, %v2072
        %v2074 = vand.u32 %v2073, 4294901760
        %v2075 = vsub.f32 %v2073, %v2074
        %v2076 = vand.u32 %v2075, 4294901760
        %2077 = vmatmul.mubr.f32.gmra.mrb[0].mxu0 %v2076
        %v2078 = vpop.f32.mrb[0].mxu0
        %v2079 = vadd.f32 %v1449, %v2078
        %v2080 = vpop.f32.mrb[0].mxu0
        %v2081 = vadd.f32 %v1451, %v2080
        %2082 = vdwg.mxu0
        %v2083 = vand.u32 %v338, 4294901760
        %v2084 = vsub.f32 %v338, %v2083
        %v2085 = vand.u32 %v2084, 4294901760
        %v2086 = vsub.f32 %v2084, %v2085
        %v2087 = vand.u32 %v2086, 4294901760
        %2088 = vmatprep.subr.mxu0 %v2087
        %v2089 = vand.u32 %v337, 4294901760
        %v2090 = vsub.f32 %v337, %v2089
        %v2091 = vand.u32 %v2090, 4294901760
        %v2092 = vsub.f32 %v2090, %v2091
        %v2093 = vand.u32 %v2092, 4294901760
        %2094 = vmatpush1.msra.mxu0 %v2093
        %v2095 = vand.u32 %v340, 4294901760
        %v2096 = vsub.f32 %v340, %v2095
        %v2097 = vand.u32 %v2096, 4294901760
        %v2098 = vsub.f32 %v2096, %v2097
        %v2099 = vand.u32 %v2098, 4294901760
        %2100 = vmatprep.subr.mxu0 %v2099
        %v2101 = vand.u32 %v339, 4294901760
        %v2102 = vsub.f32 %v339, %v2101
        %v2103 = vand.u32 %v2102, 4294901760
        %v2104 = vsub.f32 %v2102, %v2103
        %v2105 = vand.u32 %v2104, 4294901760
        %2106 = vmatpush1.msra.mxu0 %v2105
        %v2107 = vand.u32 %v342, 4294901760
        %v2108 = vsub.f32 %v342, %v2107
        %v2109 = vand.u32 %v2108, 4294901760
        %v2110 = vsub.f32 %v2108, %v2109
        %v2111 = vand.u32 %v2110, 4294901760
        %2112 = vmatprep.subr.mxu0 %v2111
        %v2113 = vand.u32 %v341, 4294901760
        %v2114 = vsub.f32 %v341, %v2113
        %v2115 = vand.u32 %v2114, 4294901760
        %v2116 = vsub.f32 %v2114, %v2115
        %v2117 = vand.u32 %v2116, 4294901760
        %2118 = vmatpush1.msra.mxu0 %v2117
        %v2119 = vand.u32 %v344, 4294901760
        %v2120 = vsub.f32 %v344, %v2119
        %v2121 = vand.u32 %v2120, 4294901760
        %v2122 = vsub.f32 %v2120, %v2121
        %v2123 = vand.u32 %v2122, 4294901760
        %2124 = vmatprep.subr.mxu0 %v2123
        %v2125 = vand.u32 %v343, 4294901760
        %v2126 = vsub.f32 %v343, %v2125
        %v2127 = vand.u32 %v2126, 4294901760
        %v2128 = vsub.f32 %v2126, %v2127
        %v2129 = vand.u32 %v2128, 4294901760
        %2130 = vmatpush1.msra.mxu0 %v2129
        %2131 = vmatprep.subr.mxu0 0.0
        %2132 = vmatpush1.msra.mxu0 0.0
        %2133 = vmatprep.subr.mxu0 0.0
        %2134 = vmatpush1.msra.mxu0 0.0
        %2135 = vmatprep.subr.mxu0 0.0
        %2136 = vmatpush1.msra.mxu0 0.0
        %2137 = vmatprep.subr.mxu0 0.0
        %2138 = vmatpush1.msra.mxu0 0.0
        %2139 = vmatprep.subr.mxu0 0.0
        %2140 = vmatpush1.msra.mxu0 0.0
        %2141 = vmatprep.subr.mxu0 0.0
        %2142 = vmatpush1.msra.mxu0 0.0
        %2143 = vmatprep.subr.mxu0 0.0
        %2144 = vmatpush1.msra.mxu0 0.0
        %2145 = vmatprep.subr.mxu0 0.0
        %2146 = vmatpush1.msra.mxu0 0.0
        %2147 = vmatprep.subr.mxu0 0.0
        %2148 = vmatpush1.msra.mxu0 0.0
        %2149 = vmatprep.subr.mxu0 0.0
        %2150 = vmatpush1.msra.mxu0 0.0
        %2151 = vmatprep.subr.mxu0 0.0
        %2152 = vmatpush1.msra.mxu0 0.0
        %2153 = vmatprep.subr.mxu0 0.0
        %2154 = vmatpush1.msra.mxu0 0.0
        %2155 = vmatprep.subr.mxu0 0.0
        %2156 = vmatpush1.msra.mxu0 0.0
        %2157 = vmatprep.subr.mxu0 0.0
        %2158 = vmatpush1.msra.mxu0 0.0
        %2159 = vmatprep.subr.mxu0 0.0
        %2160 = vmatpush1.msra.mxu0 0.0
        %2161 = vmatprep.subr.mxu0 0.0
        %2162 = vmatpush1.msra.mxu0 0.0
        %2163 = vmatprep.subr.mxu0 0.0
        %2164 = vmatpush1.msra.mxu0 0.0
        %2165 = vmatprep.subr.mxu0 0.0
        %2166 = vmatpush1.msra.mxu0 0.0
        %2167 = vmatprep.subr.mxu0 0.0
        %2168 = vmatpush1.msra.mxu0 0.0
        %2169 = vmatprep.subr.mxu0 0.0
        %2170 = vmatpush1.msra.mxu0 0.0
        %2171 = vmatprep.subr.mxu0 0.0
        %2172 = vmatpush1.msra.mxu0 0.0
        %2173 = vmatprep.subr.mxu0 0.0
        %2174 = vmatpush1.msra.mxu0 0.0
        %2175 = vmatprep.subr.mxu0 0.0
        %2176 = vmatpush1.msra.mxu0 0.0
        %2177 = vmatprep.subr.mxu0 0.0
        %2178 = vmatpush1.msra.mxu0 0.0
        %2179 = vmatprep.subr.mxu0 0.0
        %2180 = vmatpush1.msra.mxu0 0.0
        %2181 = vmatprep.subr.mxu0 0.0
        %2182 = vmatpush1.msra.mxu0 0.0
        %2183 = vmatprep.subr.mxu0 0.0
        %2184 = vmatpush1.msra.mxu0 0.0
        %2185 = vmatprep.subr.mxu0 0.0
        %2186 = vmatpush1.msra.mxu0 0.0
        %2187 = vmatprep.mubr.f32.mxu0 0.0
        %v2188 = vand.u32 %v1454, 4294901760
        %2189 = vmatmul.mubr.f32.gmra.mrb[0].mxu0 %v2188
        %v2190 = vpop.f32.mrb[0].mxu0
        %v2191 = vadd.f32 %v2079, %v2190
        %v2192 = vpop.f32.mrb[0].mxu0
        %v2193 = vadd.f32 %v2081, %v2192
        %2194 = vdwg.mxu0
        %v2195 = vand.u32 %v338, 4294901760
        %v2196 = vsub.f32 %v338, %v2195
        %2197 = vmatprep.subr.mxu0 %v2196
        %v2198 = vand.u32 %v337, 4294901760
        %v2199 = vsub.f32 %v337, %v2198
        %2200 = vmatpush1.msra.mxu0 %v2199
        %v2201 = vand.u32 %v340, 4294901760
        %v2202 = vsub.f32 %v340, %v2201
        %2203 = vmatprep.subr.mxu0 %v2202
        %v2204 = vand.u32 %v339, 4294901760
        %v2205 = vsub.f32 %v339, %v2204
        %2206 = vmatpush1.msra.mxu0 %v2205
        %v2207 = vand.u32 %v342, 4294901760
        %v2208 = vsub.f32 %v342, %v2207
        %2209 = vmatprep.subr.mxu0 %v2208
        %v2210 = vand.u32 %v341, 4294901760
        %v2211 = vsub.f32 %v341, %v2210
        %2212 = vmatpush1.msra.mxu0 %v2211
        %v2213 = vand.u32 %v344, 4294901760
        %v2214 = vsub.f32 %v344, %v2213
        %2215 = vmatprep.subr.mxu0 %v2214
        %v2216 = vand.u32 %v343, 4294901760
        %v2217 = vsub.f32 %v343, %v2216
        %2218 = vmatpush1.msra.mxu0 %v2217
        %2219 = vmatprep.subr.mxu0 0.0
        %2220 = vmatpush1.msra.mxu0 0.0
        %2221 = vmatprep.subr.mxu0 0.0
        %2222 = vmatpush1.msra.mxu0 0.0
        %2223 = vmatprep.subr.mxu0 0.0
        %2224 = vmatpush1.msra.mxu0 0.0
        %2225 = vmatprep.subr.mxu0 0.0
        %2226 = vmatpush1.msra.mxu0 0.0
        %2227 = vmatprep.subr.mxu0 0.0
        %2228 = vmatpush1.msra.mxu0 0.0
        %2229 = vmatprep.subr.mxu0 0.0
        %2230 = vmatpush1.msra.mxu0 0.0
        %2231 = vmatprep.subr.mxu0 0.0
        %2232 = vmatpush1.msra.mxu0 0.0
        %2233 = vmatprep.subr.mxu0 0.0
        %2234 = vmatpush1.msra.mxu0 0.0
        %2235 = vmatprep.subr.mxu0 0.0
        %2236 = vmatpush1.msra.mxu0 0.0
        %2237 = vmatprep.subr.mxu0 0.0
        %2238 = vmatpush1.msra.mxu0 0.0
        %2239 = vmatprep.subr.mxu0 0.0
        %2240 = vmatpush1.msra.mxu0 0.0
        %2241 = vmatprep.subr.mxu0 0.0
        %2242 = vmatpush1.msra.mxu0 0.0
        %2243 = vmatprep.subr.mxu0 0.0
        %2244 = vmatpush1.msra.mxu0 0.0
        %2245 = vmatprep.subr.mxu0 0.0
        %2246 = vmatpush1.msra.mxu0 0.0
        %2247 = vmatprep.subr.mxu0 0.0
        %2248 = vmatpush1.msra.mxu0 0.0
        %2249 = vmatprep.subr.mxu0 0.0
        %2250 = vmatpush1.msra.mxu0 0.0
        %2251 = vmatprep.subr.mxu0 0.0
        %2252 = vmatpush1.msra.mxu0 0.0
        %2253 = vmatprep.subr.mxu0 0.0
        %2254 = vmatpush1.msra.mxu0 0.0
        %2255 = vmatprep.subr.mxu0 0.0
        %2256 = vmatpush1.msra.mxu0 0.0
        %2257 = vmatprep.subr.mxu0 0.0
        %2258 = vmatpush1.msra.mxu0 0.0
        %2259 = vmatprep.subr.mxu0 0.0
        %2260 = vmatpush1.msra.mxu0 0.0
        %2261 = vmatprep.subr.mxu0 0.0
        %2262 = vmatpush1.msra.mxu0 0.0
        %2263 = vmatprep.subr.mxu0 0.0
        %2264 = vmatpush1.msra.mxu0 0.0
        %2265 = vmatprep.subr.mxu0 0.0
        %2266 = vmatpush1.msra.mxu0 0.0
        %2267 = vmatprep.subr.mxu0 0.0
        %2268 = vmatpush1.msra.mxu0 0.0
        %2269 = vmatprep.subr.mxu0 0.0
        %2270 = vmatpush1.msra.mxu0 0.0
        %2271 = vmatprep.subr.mxu0 0.0
        %2272 = vmatpush1.msra.mxu0 0.0
        %2273 = vmatprep.subr.mxu0 0.0
        %2274 = vmatpush1.msra.mxu0 0.0
        %2275 = vmatprep.mubr.f32.mxu0 0.0
        %v2276 = vand.u32 %v1454, 4294901760
        %v2277 = vsub.f32 %v1454, %v2276
        %2278 = vmatmul.mubr.f32.gmra.mrb[0].mxu0 %v2277
        %v2279 = vpop.f32.mrb[0].mxu0
        %v2280 = vadd.f32 %v2191, %v2279
        %v2281 = vpop.f32.mrb[0].mxu0
        %v2282 = vadd.f32 %v2193, %v2281
        %2283 = vdwg.mxu0
        %v2284 = vand.u32 %v338, 4294901760
        %2285 = vmatprep.subr.mxu0 %v2284
        %v2286 = vand.u32 %v337, 4294901760
        %2287 = vmatpush1.msra.mxu0 %v2286
        %v2288 = vand.u32 %v340, 4294901760
        %2289 = vmatprep.subr.mxu0 %v2288
        %v2290 = vand.u32 %v339, 4294901760
        %2291 = vmatpush1.msra.mxu0 %v2290
        %v2292 = vand.u32 %v342, 4294901760
        %2293 = vmatprep.subr.mxu0 %v2292
        %v2294 = vand.u32 %v341, 4294901760
        %2295 = vmatpush1.msra.mxu0 %v2294
        %v2296 = vand.u32 %v344, 4294901760
        %2297 = vmatprep.subr.mxu0 %v2296
        %v2298 = vand.u32 %v343, 4294901760
        %2299 = vmatpush1.msra.mxu0 %v2298
        %2300 = vmatprep.subr.mxu0 0.0
        %2301 = vmatpush1.msra.mxu0 0.0
        %2302 = vmatprep.subr.mxu0 0.0
        %2303 = vmatpush1.msra.mxu0 0.0
        %2304 = vmatprep.subr.mxu0 0.0
        %2305 = vmatpush1.msra.mxu0 0.0
        %2306 = vmatprep.subr.mxu0 0.0
        %2307 = vmatpush1.msra.mxu0 0.0
        %2308 = vmatprep.subr.mxu0 0.0
        %2309 = vmatpush1.msra.mxu0 0.0
        %2310 = vmatprep.subr.mxu0 0.0
        %2311 = vmatpush1.msra.mxu0 0.0
        %2312 = vmatprep.subr.mxu0 0.0
        %2313 = vmatpush1.msra.mxu0 0.0
        %2314 = vmatprep.subr.mxu0 0.0
        %2315 = vmatpush1.msra.mxu0 0.0
        %2316 = vmatprep.subr.mxu0 0.0
        %2317 = vmatpush1.msra.mxu0 0.0
        %2318 = vmatprep.subr.mxu0 0.0
        %2319 = vmatpush1.msra.mxu0 0.0
        %2320 = vmatprep.subr.mxu0 0.0
        %2321 = vmatpush1.msra.mxu0 0.0
        %2322 = vmatprep.subr.mxu0 0.0
        %2323 = vmatpush1.msra.mxu0 0.0
        %2324 = vmatprep.subr.mxu0 0.0
        %2325 = vmatpush1.msra.mxu0 0.0
        %2326 = vmatprep.subr.mxu0 0.0
        %2327 = vmatpush1.msra.mxu0 0.0
        %2328 = vmatprep.subr.mxu0 0.0
        %2329 = vmatpush1.msra.mxu0 0.0
        %2330 = vmatprep.subr.mxu0 0.0
        %2331 = vmatpush1.msra.mxu0 0.0
        %2332 = vmatprep.subr.mxu0 0.0
        %2333 = vmatpush1.msra.mxu0 0.0
        %2334 = vmatprep.subr.mxu0 0.0
        %2335 = vmatpush1.msra.mxu0 0.0
        %2336 = vmatprep.subr.mxu0 0.0
        %2337 = vmatpush1.msra.mxu0 0.0
        %2338 = vmatprep.subr.mxu0 0.0
        %2339 = vmatpush1.msra.mxu0 0.0
        %2340 = vmatprep.subr.mxu0 0.0
        %2341 = vmatpush1.msra.mxu0 0.0
        %2342 = vmatprep.subr.mxu0 0.0
        %2343 = vmatpush1.msra.mxu0 0.0
        %2344 = vmatprep.subr.mxu0 0.0
        %2345 = vmatpush1.msra.mxu0 0.0
        %2346 = vmatprep.subr.mxu0 0.0
        %2347 = vmatpush1.msra.mxu0 0.0
        %2348 = vmatprep.subr.mxu0 0.0
        %2349 = vmatpush1.msra.mxu0 0.0
        %2350 = vmatprep.subr.mxu0 0.0
        %2351 = vmatpush1.msra.mxu0 0.0
        %2352 = vmatprep.subr.mxu0 0.0
        %2353 = vmatpush1.msra.mxu0 0.0
        %2354 = vmatprep.subr.mxu0 0.0
        %2355 = vmatpush1.msra.mxu0 0.0
        %2356 = vmatprep.mubr.f32.mxu0 0.0
        %v2357 = vand.u32 %v1454, 4294901760
        %v2358 = vsub.f32 %v1454, %v2357
        %v2359 = vand.u32 %v2358, 4294901760
        %2360 = vmatmul.mubr.f32.gmra.mrb[0].mxu0 %v2359
        %v2361 = vpop.f32.mrb[0].mxu0
        %v2362 = vadd.f32 %v2280, %v2361
        %v2363 = vpop.f32.mrb[0].mxu0
        %v2364 = vadd.f32 %v2282, %v2363
        %2365 = vdwg.mxu0
        %v2366 = vand.u32 %v338, 4294901760
        %v2367 = vsub.f32 %v338, %v2366
        %v2368 = vand.u32 %v2367, 4294901760
        %2369 = vmatprep.subr.mxu0 %v2368
        %v2370 = vand.u32 %v337, 4294901760
        %v2371 = vsub.f32 %v337, %v2370
        %v2372 = vand.u32 %v2371, 4294901760
        %2373 = vmatpush1.msra.mxu0 %v2372
        %v2374 = vand.u32 %v340, 4294901760
        %v2375 = vsub.f32 %v340, %v2374
        %v2376 = vand.u32 %v2375, 4294901760
        %2377 = vmatprep.subr.mxu0 %v2376
        %v2378 = vand.u32 %v339, 4294901760
        %v2379 = vsub.f32 %v339, %v2378
        %v2380 = vand.u32 %v2379, 4294901760
        %2381 = vmatpush1.msra.mxu0 %v2380
        %v2382 = vand.u32 %v342, 4294901760
        %v2383 = vsub.f32 %v342, %v2382
        %v2384 = vand.u32 %v2383, 4294901760
        %2385 = vmatprep.subr.mxu0 %v2384
        %v2386 = vand.u32 %v341, 4294901760
        %v2387 = vsub.f32 %v341, %v2386
        %v2388 = vand.u32 %v2387, 4294901760
        %2389 = vmatpush1.msra.mxu0 %v2388
        %v2390 = vand.u32 %v344, 4294901760
        %v2391 = vsub.f32 %v344, %v2390
        %v2392 = vand.u32 %v2391, 4294901760
        %2393 = vmatprep.subr.mxu0 %v2392
        %v2394 = vand.u32 %v343, 4294901760
        %v2395 = vsub.f32 %v343, %v2394
        %v2396 = vand.u32 %v2395, 4294901760
        %2397 = vmatpush1.msra.mxu0 %v2396
        %2398 = vmatprep.subr.mxu0 0.0
        %2399 = vmatpush1.msra.mxu0 0.0
        %2400 = vmatprep.subr.mxu0 0.0
        %2401 = vmatpush1.msra.mxu0 0.0
        %2402 = vmatprep.subr.mxu0 0.0
        %2403 = vmatpush1.msra.mxu0 0.0
        %2404 = vmatprep.subr.mxu0 0.0
        %2405 = vmatpush1.msra.mxu0 0.0
        %2406 = vmatprep.subr.mxu0 0.0
        %2407 = vmatpush1.msra.mxu0 0.0
        %2408 = vmatprep.subr.mxu0 0.0
        %2409 = vmatpush1.msra.mxu0 0.0
        %2410 = vmatprep.subr.mxu0 0.0
        %2411 = vmatpush1.msra.mxu0 0.0
        %2412 = vmatprep.subr.mxu0 0.0
        %2413 = vmatpush1.msra.mxu0 0.0
        %2414 = vmatprep.subr.mxu0 0.0
        %2415 = vmatpush1.msra.mxu0 0.0
        %2416 = vmatprep.subr.mxu0 0.0
        %2417 = vmatpush1.msra.mxu0 0.0
        %2418 = vmatprep.subr.mxu0 0.0
        %2419 = vmatpush1.msra.mxu0 0.0
        %2420 = vmatprep.subr.mxu0 0.0
        %2421 = vmatpush1.msra.mxu0 0.0
        %2422 = vmatprep.subr.mxu0 0.0
        %2423 = vmatpush1.msra.mxu0 0.0
        %2424 = vmatprep.subr.mxu0 0.0
        %2425 = vmatpush1.msra.mxu0 0.0
        %2426 = vmatprep.subr.mxu0 0.0
        %2427 = vmatpush1.msra.mxu0 0.0
        %2428 = vmatprep.subr.mxu0 0.0
        %2429 = vmatpush1.msra.mxu0 0.0
        %2430 = vmatprep.subr.mxu0 0.0
        %2431 = vmatpush1.msra.mxu0 0.0
        %2432 = vmatprep.subr.mxu0 0.0
        %2433 = vmatpush1.msra.mxu0 0.0
        %2434 = vmatprep.subr.mxu0 0.0
        %2435 = vmatpush1.msra.mxu0 0.0
        %2436 = vmatprep.subr.mxu0 0.0
        %2437 = vmatpush1.msra.mxu0 0.0
        %2438 = vmatprep.subr.mxu0 0.0
        %2439 = vmatpush1.msra.mxu0 0.0
        %2440 = vmatprep.subr.mxu0 0.0
        %2441 = vmatpush1.msra.mxu0 0.0
        %2442 = vmatprep.subr.mxu0 0.0
        %2443 = vmatpush1.msra.mxu0 0.0
        %2444 = vmatprep.subr.mxu0 0.0
        %2445 = vmatpush1.msra.mxu0 0.0
        %2446 = vmatprep.subr.mxu0 0.0
        %2447 = vmatpush1.msra.mxu0 0.0
        %2448 = vmatprep.subr.mxu0 0.0
        %2449 = vmatpush1.msra.mxu0 0.0
        %2450 = vmatprep.subr.mxu0 0.0
        %2451 = vmatpush1.msra.mxu0 0.0
        %2452 = vmatprep.subr.mxu0 0.0
        %2453 = vmatpush1.msra.mxu0 0.0
        %2454 = vmatprep.mubr.f32.mxu0 0.0
        %v2455 = vand.u32 %v1454, 4294901760
        %2456 = vmatmul.mubr.f32.gmra.mrb[0].mxu0 %v2455
        %v2457 = vpop.f32.mrb[0].mxu0
        %v2458 = vadd.f32 %v2362, %v2457
        %v2459 = vpop.f32.mrb[0].mxu0
        %v2460 = vadd.f32 %v2364, %v2459
        %2461 = vdwg.mxu0
        %v2462 = vand.u32 %v338, 4294901760
        %2463 = vmatprep.subr.mxu0 %v2462
        %v2464 = vand.u32 %v337, 4294901760
        %2465 = vmatpush1.msra.mxu0 %v2464
        %v2466 = vand.u32 %v340, 4294901760
        %2467 = vmatprep.subr.mxu0 %v2466
        %v2468 = vand.u32 %v339, 4294901760
        %2469 = vmatpush1.msra.mxu0 %v2468
        %v2470 = vand.u32 %v342, 4294901760
        %2471 = vmatprep.subr.mxu0 %v2470
        %v2472 = vand.u32 %v341, 4294901760
        %2473 = vmatpush1.msra.mxu0 %v2472
        %v2474 = vand.u32 %v344, 4294901760
        %2475 = vmatprep.subr.mxu0 %v2474
        %v2476 = vand.u32 %v343, 4294901760
        %2477 = vmatpush1.msra.mxu0 %v2476
        %2478 = vmatprep.subr.mxu0 0.0
        %2479 = vmatpush1.msra.mxu0 0.0
        %2480 = vmatprep.subr.mxu0 0.0
        %2481 = vmatpush1.msra.mxu0 0.0
        %2482 = vmatprep.subr.mxu0 0.0
        %2483 = vmatpush1.msra.mxu0 0.0
        %2484 = vmatprep.subr.mxu0 0.0
        %2485 = vmatpush1.msra.mxu0 0.0
        %2486 = vmatprep.subr.mxu0 0.0
        %2487 = vmatpush1.msra.mxu0 0.0
        %2488 = vmatprep.subr.mxu0 0.0
        %2489 = vmatpush1.msra.mxu0 0.0
        %2490 = vmatprep.subr.mxu0 0.0
        %2491 = vmatpush1.msra.mxu0 0.0
        %2492 = vmatprep.subr.mxu0 0.0
        %2493 = vmatpush1.msra.mxu0 0.0
        %2494 = vmatprep.subr.mxu0 0.0
        %2495 = vmatpush1.msra.mxu0 0.0
        %2496 = vmatprep.subr.mxu0 0.0
        %2497 = vmatpush1.msra.mxu0 0.0
        %2498 = vmatprep.subr.mxu0 0.0
        %2499 = vmatpush1.msra.mxu0 0.0
        %2500 = vmatprep.subr.mxu0 0.0
        %2501 = vmatpush1.msra.mxu0 0.0
        %2502 = vmatprep.subr.mxu0 0.0
        %2503 = vmatpush1.msra.mxu0 0.0
        %2504 = vmatprep.subr.mxu0 0.0
        %2505 = vmatpush1.msra.mxu0 0.0
        %2506 = vmatprep.subr.mxu0 0.0
        %2507 = vmatpush1.msra.mxu0 0.0
        %2508 = vmatprep.subr.mxu0 0.0
        %2509 = vmatpush1.msra.mxu0 0.0
        %2510 = vmatprep.subr.mxu0 0.0
        %2511 = vmatpush1.msra.mxu0 0.0
        %2512 = vmatprep.subr.mxu0 0.0
        %2513 = vmatpush1.msra.mxu0 0.0
        %2514 = vmatprep.subr.mxu0 0.0
        %2515 = vmatpush1.msra.mxu0 0.0
        %2516 = vmatprep.subr.mxu0 0.0
        %2517 = vmatpush1.msra.mxu0 0.0
        %2518 = vmatprep.subr.mxu0 0.0
        %2519 = vmatpush1.msra.mxu0 0.0
        %2520 = vmatprep.subr.mxu0 0.0
        %2521 = vmatpush1.msra.mxu0 0.0
        %2522 = vmatprep.subr.mxu0 0.0
        %2523 = vmatpush1.msra.mxu0 0.0
        %2524 = vmatprep.subr.mxu0 0.0
        %2525 = vmatpush1.msra.mxu0 0.0
        %2526 = vmatprep.subr.mxu0 0.0
        %2527 = vmatpush1.msra.mxu0 0.0
        %2528 = vmatprep.subr.mxu0 0.0
        %2529 = vmatpush1.msra.mxu0 0.0
        %2530 = vmatprep.subr.mxu0 0.0
        %2531 = vmatpush1.msra.mxu0 0.0
        %2532 = vmatprep.subr.mxu0 0.0
        %2533 = vmatpush1.msra.mxu0 0.0
        %2534 = vmatprep.mubr.f32.mxu0 0.0
        %v2535 = vand.u32 %v1454, 4294901760
        %2536 = vmatmul.mubr.f32.gmra.mrb[0].mxu0 %v2535
        %v2537 = vpop.f32.mrb[0].mxu0
        %v2538 = vadd.f32 %v2458, %v2537
        %v2539 = vpop.f32.mrb[0].mxu0
        %v2540 = vadd.f32 %v2460, %v2539
        %2541 = vdwg.mxu0
        %v2542 = vxor.u32 %v1995, 2147483648
        %v2543 = vxor.u32 %v1997, 2147483648
        %v2544 = vxor.u32 %v2538, 2147483648
        %v2545 = vxor.u32 %v2540, 2147483648
        %v2546 = vmul.f32 %v2542, 1.442695
        %v2547 = vpow.pop %v2546
        %v2548 = vmul.f32 %v2543, 1.442695
        %v2549 = vpow.pop %v2548
        %v2550 = vmul.f32 %v2544, 1.442695
        %v2551 = vpow.pop %v2550
        %v2552 = vmul.f32 %v2545, 1.442695
        %v2553 = vpow.pop %v2552
        %v2554 = vadd.f32 %v2547, 1.0
        %v2555 = vadd.f32 %v2549, 1.0
        %v2556 = vadd.f32 %v2551, 1.0
        %v2557 = vadd.f32 %v2553, 1.0
        %v2558 = vrcp.pop %v2554
        %v2559 = vmul.f32 1.0, %v2558
        %v2560 = vrcp.pop %v2555
        %v2561 = vmul.f32 1.0, %v2560
        %v2562 = vrcp.pop %v2556
        %v2563 = vmul.f32 1.0, %v2562
        %v2564 = vrcp.pop %v2557
        %v2565 = vmul.f32 1.0, %v2564
        %vm2566 = vcmask 1041408
        %v2567 = vsel %vm2566, %v2559, 0.0
        %v2568 = vsel %vm2566, %v2561, 0.0
        %v2569 = vadd.f32 %v2567, %v2568
        %2570 = vadd.xlane.f32.xlu0 %v2569
        %v2571 = vpop.xlane.xlu0 %2570
        %v2572 = vsel %vm2566, %v2563, 0.0
        %v2573 = vsel %vm2566, %v2565, 0.0
        %v2574 = vadd.f32 %v2572, %v2573
        %2575 = vadd.xlane.f32.xlu0 %v2574
        %v2576 = vpop.xlane.xlu0 %2575
        %v2577 = vmul.f32 %v2571, 0.00390625
        %v2578 = vmul.f32 %v2576, 0.00390625
        %v2579 = vlaneseq
        %v2580 = vshrl.u32 %v2579, 7
        %v2581 = vsub.s32 0, %v2580
        %v2582 = vrot.slane %v2577, %v2581
        %v2583 = vlaneseq
        %v2584 = vshrl.u32 %v2583, 7
        %v2585 = vsub.s32 0, %v2584
        %v2586 = vrot.slane %v2578, %v2585
        %v2587 = vmul.f32 %v2582, %v329
        %v2588 = vmul.f32 %v2582, %v330
        %v2589 = vmul.f32 %v2582, %v331
        %v2590 = vmul.f32 %v2582, %v332
        %v2591 = vmul.f32 %v2582, %v333
        %v2592 = vmul.f32 %v2582, %v334
        %v2593 = vmul.f32 %v2582, %v335
        %v2594 = vmul.f32 %v2582, %v336
        %v2595 = vmul.f32 %v2586, %v337
        %v2596 = vmul.f32 %v2586, %v338
        %v2597 = vmul.f32 %v2586, %v339
        %v2598 = vmul.f32 %v2586, %v340
        %v2599 = vmul.f32 %v2586, %v341
        %v2600 = vmul.f32 %v2586, %v342
        %v2601 = vmul.f32 %v2586, %v343
        %v2602 = vmul.f32 %v2586, %v344
        %v2603 = vadd.f32 %v2587, %v2588
        %2604 = vadd.xlane.f32.xlu0 %v2603
        %v2605 = vpop.xlane.xlu0 %2604
        %v2606 = vadd.f32 %v2589, %v2590
        %2607 = vadd.xlane.f32.xlu0 %v2606
        %v2608 = vpop.xlane.xlu0 %2607
        %v2609 = vadd.f32 %v2591, %v2592
        %2610 = vadd.xlane.f32.xlu0 %v2609
        %v2611 = vpop.xlane.xlu0 %2610
        %v2612 = vadd.f32 %v2593, %v2594
        %2613 = vadd.xlane.f32.xlu0 %v2612
        %v2614 = vpop.xlane.xlu0 %2613
        %v2615 = vadd.f32 %v2595, %v2596
        %2616 = vadd.xlane.f32.xlu0 %v2615
        %v2617 = vpop.xlane.xlu0 %2616
        %v2618 = vadd.f32 %v2597, %v2598
        %2619 = vadd.xlane.f32.xlu0 %v2618
        %v2620 = vpop.xlane.xlu0 %2619
        %v2621 = vadd.f32 %v2599, %v2600
        %2622 = vadd.xlane.f32.xlu0 %v2621
        %v2623 = vpop.xlane.xlu0 %2622
        %v2624 = vadd.f32 %v2601, %v2602
        %2625 = vadd.xlane.f32.xlu0 %v2624
        %v2626 = vpop.xlane.xlu0 %2625
        %v2627 = vmul.f32 %v2605, 0.00390625
        %v2628 = vmul.f32 %v2608, 0.00390625
        %v2629 = vmul.f32 %v2611, 0.00390625
        %v2630 = vmul.f32 %v2614, 0.00390625
        %v2631 = vmul.f32 %v2617, 0.00390625
        %v2632 = vmul.f32 %v2620, 0.00390625
        %v2633 = vmul.f32 %v2623, 0.00390625
        %v2634 = vmul.f32 %v2626, 0.00390625
        %v2635 = vmax.f32 %v2587, %v2588
        %2636 = vmax.xlane.f32.xlu0 %v2635
        %v2637 = vpop.xlane.xlu0 %2636
        %v2638 = vmax.f32 %v2589, %v2590
        %2639 = vmax.xlane.f32.xlu0 %v2638
        %v2640 = vpop.xlane.xlu0 %2639
        %v2641 = vmax.f32 %v2591, %v2592
        %2642 = vmax.xlane.f32.xlu0 %v2641
        %v2643 = vpop.xlane.xlu0 %2642
        %v2644 = vmax.f32 %v2593, %v2594
        %2645 = vmax.xlane.f32.xlu0 %v2644
        %v2646 = vpop.xlane.xlu0 %2645
        %v2647 = vmax.f32 %v2595, %v2596
        %2648 = vmax.xlane.f32.xlu0 %v2647
        %v2649 = vpop.xlane.xlu0 %2648
        %v2650 = vmax.f32 %v2597, %v2598
        %2651 = vmax.xlane.f32.xlu0 %v2650
        %v2652 = vpop.xlane.xlu0 %2651
        %v2653 = vmax.f32 %v2599, %v2600
        %2654 = vmax.xlane.f32.xlu0 %v2653
        %v2655 = vpop.xlane.xlu0 %2654
        %v2656 = vmax.f32 %v2601, %v2602
        %2657 = vmax.xlane.f32.xlu0 %v2656
        %v2658 = vpop.xlane.xlu0 %2657
        %v2659 = vld [vmem:[%s4] sm:$0xff]
        %v2660 = vld [vmem:[%s4 + $0x8] sm:$0xff]
        %v2661 = vld [vmem:[%s4 + $0x10] sm:$0xff]
        %v2662 = vld [vmem:[%s4 + $0x18] sm:$0xff]
        %v2663 = vmul.f32 %v2659, %v2627
        %v2664 = vmul.f32 %v2660, %v2628
        %v2665 = vmul.f32 %v2661, %v2629
        %v2666 = vmul.f32 %v2662, %v2630
        %v2667 = vmul.f32 %v2659, %v2631
        %v2668 = vmul.f32 %v2660, %v2632
        %v2669 = vmul.f32 %v2661, %v2633
        %v2670 = vmul.f32 %v2662, %v2634
        %vm2671 = vcmask 15360
        %v2672 = vsel %vm2671, %v2663, 0.0
        %v2673 = vsel %vm2671, %v2664, 0.0
        %v2674 = vadd.f32 %v2672, %v2673
        %v2675 = vsel %vm2671, %v2665, 0.0
        %v2676 = vadd.f32 %v2674, %v2675
        %v2677 = vsel %vm2671, %v2666, 0.0
        %v2678 = vadd.f32 %v2676, %v2677
        %v2679 = vrot.slane %v2678, 4
        %v2680 = vadd.f32 %v2678, %v2679
        %v2681 = vrot.slane %v2680, 2
        %v2682 = vadd.f32 %v2680, %v2681
        %v2683 = vrot.slane %v2682, 1
        %v2684 = vadd.f32 %v2682, %v2683
        %v2685 = vsel %vm2671, %v2667, 0.0
        %v2686 = vsel %vm2671, %v2668, 0.0
        %v2687 = vadd.f32 %v2685, %v2686
        %v2688 = vsel %vm2671, %v2669, 0.0
        %v2689 = vadd.f32 %v2687, %v2688
        %v2690 = vsel %vm2671, %v2670, 0.0
        %v2691 = vadd.f32 %v2689, %v2690
        %v2692 = vrot.slane %v2691, 4
        %v2693 = vadd.f32 %v2691, %v2692
        %v2694 = vrot.slane %v2693, 2
        %v2695 = vadd.f32 %v2693, %v2694
        %v2696 = vrot.slane %v2695, 1
        %v2697 = vadd.f32 %v2695, %v2696
        %v2698 = vmax.f32 %v2684, 0.0
        %v2699 = vmax.f32 %v2697, 0.0
        %v2700 = vmul.f32 %v2659, %v2637
        %v2701 = vmul.f32 %v2660, %v2640
        %v2702 = vmul.f32 %v2661, %v2643
        %v2703 = vmul.f32 %v2662, %v2646
        %v2704 = vmul.f32 %v2659, %v2649
        %v2705 = vmul.f32 %v2660, %v2652
        %v2706 = vmul.f32 %v2661, %v2655
        %v2707 = vmul.f32 %v2662, %v2658
        %v2708 = vsel %vm2671, %v2700, 0.0
        %v2709 = vsel %vm2671, %v2701, 0.0
        %v2710 = vadd.f32 %v2708, %v2709
        %v2711 = vsel %vm2671, %v2702, 0.0
        %v2712 = vadd.f32 %v2710, %v2711
        %v2713 = vsel %vm2671, %v2703, 0.0
        %v2714 = vadd.f32 %v2712, %v2713
        %v2715 = vrot.slane %v2714, 4
        %v2716 = vadd.f32 %v2714, %v2715
        %v2717 = vrot.slane %v2716, 2
        %v2718 = vadd.f32 %v2716, %v2717
        %v2719 = vrot.slane %v2718, 1
        %v2720 = vadd.f32 %v2718, %v2719
        %v2721 = vsel %vm2671, %v2704, 0.0
        %v2722 = vsel %vm2671, %v2705, 0.0
        %v2723 = vadd.f32 %v2721, %v2722
        %v2724 = vsel %vm2671, %v2706, 0.0
        %v2725 = vadd.f32 %v2723, %v2724
        %v2726 = vsel %vm2671, %v2707, 0.0
        %v2727 = vadd.f32 %v2725, %v2726
        %v2728 = vrot.slane %v2727, 4
        %v2729 = vadd.f32 %v2727, %v2728
        %v2730 = vrot.slane %v2729, 2
        %v2731 = vadd.f32 %v2729, %v2730
        %v2732 = vrot.slane %v2731, 1
        %v2733 = vadd.f32 %v2731, %v2732
        %v2734 = vmax.f32 %v2720, 0.0
        %v2735 = vmax.f32 %v2733, 0.0
        %2738 = vrot.lane.b32.xlu0 %v2698, 2
        %v2739 = vpop.permute.xlu0 %2738
        %2740 = vrot.lane.b32.xlu0 %v2699, 2
        %v2741 = vpop.permute.xlu0 %2740
        %v2744 = vmul.f32 %v2659, %v2739
        %v2745 = vmul.f32 %v2660, %v2739
        %v2746 = vmul.f32 %v2661, %v2739
        %v2747 = vmul.f32 %v2662, %v2739
        %v2748 = vmul.f32 %v2659, %v2741
        %v2749 = vmul.f32 %v2660, %v2741
        %v2750 = vmul.f32 %v2661, %v2741
        %v2751 = vmul.f32 %v2662, %v2741
        %2760 = vrot.lane.b32.xlu0 %v2744, 126
        %v2761 = vpop.permute.xlu0 %2760
        %2762 = vrot.lane.b32.xlu0 %v2745, 126
        %v2763 = vpop.permute.xlu0 %2762
        %2764 = vrot.lane.b32.xlu0 %v2746, 126
        %v2765 = vpop.permute.xlu0 %2764
        %2766 = vrot.lane.b32.xlu0 %v2747, 126
        %v2767 = vpop.permute.xlu0 %2766
        %2768 = vrot.lane.b32.xlu0 %v2748, 126
        %v2769 = vpop.permute.xlu0 %2768
        %2770 = vrot.lane.b32.xlu0 %v2749, 126
        %v2771 = vpop.permute.xlu0 %2770
        %2772 = vrot.lane.b32.xlu0 %v2750, 126
        %v2773 = vpop.permute.xlu0 %2772
        %2774 = vrot.lane.b32.xlu0 %v2751, 126
        %v2775 = vpop.permute.xlu0 %2774
        %v2784 = vsel %vm2671, %v2761, 0.0
        %2785 = vadd.xlane.f32.xlu0 %v2784
        %v2786 = vpop.xlane.xlu0 %2785
        %v2787 = vsel %vm2671, %v2763, 0.0
        %2788 = vadd.xlane.f32.xlu0 %v2787
        %v2789 = vpop.xlane.xlu0 %2788
        %v2790 = vsel %vm2671, %v2765, 0.0
        %2791 = vadd.xlane.f32.xlu0 %v2790
        %v2792 = vpop.xlane.xlu0 %2791
        %v2793 = vsel %vm2671, %v2767, 0.0
        %2794 = vadd.xlane.f32.xlu0 %v2793
        %v2795 = vpop.xlane.xlu0 %2794
        %v2796 = vsel %vm2671, %v2769, 0.0
        %2797 = vadd.xlane.f32.xlu0 %v2796
        %v2798 = vpop.xlane.xlu0 %2797
        %v2799 = vsel %vm2671, %v2771, 0.0
        %2800 = vadd.xlane.f32.xlu0 %v2799
        %v2801 = vpop.xlane.xlu0 %2800
        %v2802 = vsel %vm2671, %v2773, 0.0
        %2803 = vadd.xlane.f32.xlu0 %v2802
        %v2804 = vpop.xlane.xlu0 %2803
        %v2805 = vsel %vm2671, %v2775, 0.0
        %2806 = vadd.xlane.f32.xlu0 %v2805
        %v2807 = vpop.xlane.xlu0 %2806
        %2810 = vrot.lane.b32.xlu0 %v2734, 2
        %v2811 = vpop.permute.xlu0 %2810
        %2812 = vrot.lane.b32.xlu0 %v2735, 2
        %v2813 = vpop.permute.xlu0 %2812
        %v2816 = vmul.f32 %v2659, %v2811
        %v2817 = vmul.f32 %v2660, %v2811
        %v2818 = vmul.f32 %v2661, %v2811
        %v2819 = vmul.f32 %v2662, %v2811
        %v2820 = vmul.f32 %v2659, %v2813
        %v2821 = vmul.f32 %v2660, %v2813
        %v2822 = vmul.f32 %v2661, %v2813
        %v2823 = vmul.f32 %v2662, %v2813
        %2832 = vrot.lane.b32.xlu0 %v2816, 126
        %v2833 = vpop.permute.xlu0 %2832
        %2834 = vrot.lane.b32.xlu0 %v2817, 126
        %v2835 = vpop.permute.xlu0 %2834
        %2836 = vrot.lane.b32.xlu0 %v2818, 126
        %v2837 = vpop.permute.xlu0 %2836
        %2838 = vrot.lane.b32.xlu0 %v2819, 126
        %v2839 = vpop.permute.xlu0 %2838
        %2840 = vrot.lane.b32.xlu0 %v2820, 126
        %v2841 = vpop.permute.xlu0 %2840
        %2842 = vrot.lane.b32.xlu0 %v2821, 126
        %v2843 = vpop.permute.xlu0 %2842
        %2844 = vrot.lane.b32.xlu0 %v2822, 126
        %v2845 = vpop.permute.xlu0 %2844
        %2846 = vrot.lane.b32.xlu0 %v2823, 126
        %v2847 = vpop.permute.xlu0 %2846
        %v2856 = vsel %vm2671, %v2833, 0.0
        %2857 = vadd.xlane.f32.xlu0 %v2856
        %v2858 = vpop.xlane.xlu0 %2857
        %v2859 = vsel %vm2671, %v2835, 0.0
        %2860 = vadd.xlane.f32.xlu0 %v2859
        %v2861 = vpop.xlane.xlu0 %2860
        %v2862 = vsel %vm2671, %v2837, 0.0
        %2863 = vadd.xlane.f32.xlu0 %v2862
        %v2864 = vpop.xlane.xlu0 %2863
        %v2865 = vsel %vm2671, %v2839, 0.0
        %2866 = vadd.xlane.f32.xlu0 %v2865
        %v2867 = vpop.xlane.xlu0 %2866
        %v2868 = vsel %vm2671, %v2841, 0.0
        %2869 = vadd.xlane.f32.xlu0 %v2868
        %v2870 = vpop.xlane.xlu0 %2869
        %v2871 = vsel %vm2671, %v2843, 0.0
        %2872 = vadd.xlane.f32.xlu0 %v2871
        %v2873 = vpop.xlane.xlu0 %2872
        %v2874 = vsel %vm2671, %v2845, 0.0
        %2875 = vadd.xlane.f32.xlu0 %v2874
        %v2876 = vpop.xlane.xlu0 %2875
        %v2877 = vsel %vm2671, %v2847, 0.0
        %2878 = vadd.xlane.f32.xlu0 %v2877
        %v2879 = vpop.xlane.xlu0 %2878
        %v2880 = vadd.f32 %v2786, %v2858
        %v2881 = vadd.f32 %v2789, %v2861
        %v2882 = vadd.f32 %v2792, %v2864
        %v2883 = vadd.f32 %v2795, %v2867
        %v2884 = vadd.f32 %v2798, %v2870
        %v2885 = vadd.f32 %v2801, %v2873
        %v2886 = vadd.f32 %v2804, %v2876
        %v2887 = vadd.f32 %v2807, %v2879
        %v2888 = vxor.u32 %v2880, 2147483648
        %v2889 = vxor.u32 %v2881, 2147483648
        %v2890 = vxor.u32 %v2882, 2147483648
        %v2891 = vxor.u32 %v2883, 2147483648
        %v2892 = vxor.u32 %v2884, 2147483648
        %v2893 = vxor.u32 %v2885, 2147483648
        %v2894 = vxor.u32 %v2886, 2147483648
        %v2895 = vxor.u32 %v2887, 2147483648
        %v2896 = vmul.f32 %v2888, 1.442695
        %v2897 = vpow.pop %v2896
        %v2898 = vmul.f32 %v2889, 1.442695
        %v2899 = vpow.pop %v2898
        %v2900 = vmul.f32 %v2890, 1.442695
        %v2901 = vpow.pop %v2900
        %v2902 = vmul.f32 %v2891, 1.442695
        %v2903 = vpow.pop %v2902
        %v2904 = vmul.f32 %v2892, 1.442695
        %v2905 = vpow.pop %v2904
        %v2906 = vmul.f32 %v2893, 1.442695
        %v2907 = vpow.pop %v2906
        %v2908 = vmul.f32 %v2894, 1.442695
        %v2909 = vpow.pop %v2908
        %v2910 = vmul.f32 %v2895, 1.442695
        %v2911 = vpow.pop %v2910
        %v2912 = vadd.f32 %v2897, 1.0
        %v2913 = vadd.f32 %v2899, 1.0
        %v2914 = vadd.f32 %v2901, 1.0
        %v2915 = vadd.f32 %v2903, 1.0
        %v2916 = vadd.f32 %v2905, 1.0
        %v2917 = vadd.f32 %v2907, 1.0
        %v2918 = vadd.f32 %v2909, 1.0
        %v2919 = vadd.f32 %v2911, 1.0
        %v2920 = vrcp.pop %v2912
        %v2921 = vmul.f32 1.0, %v2920
        %v2922 = vrcp.pop %v2913
        %v2923 = vmul.f32 1.0, %v2922
        %v2924 = vrcp.pop %v2914
        %v2925 = vmul.f32 1.0, %v2924
        %v2926 = vrcp.pop %v2915
        %v2927 = vmul.f32 1.0, %v2926
        %v2928 = vrcp.pop %v2916
        %v2929 = vmul.f32 1.0, %v2928
        %v2930 = vrcp.pop %v2917
        %v2931 = vmul.f32 1.0, %v2930
        %v2932 = vrcp.pop %v2918
        %v2933 = vmul.f32 1.0, %v2932
        %v2934 = vrcp.pop %v2919
        %v2935 = vmul.f32 1.0, %v2934
        %v2936 = vmul.f32 %v2921, %v2587
        %v2937 = vmul.f32 %v2921, %v2588
        %v2938 = vmul.f32 %v2923, %v2589
        %v2939 = vmul.f32 %v2923, %v2590
        %v2940 = vmul.f32 %v2925, %v2591
        %v2941 = vmul.f32 %v2925, %v2592
        %v2942 = vmul.f32 %v2927, %v2593
        %v2943 = vmul.f32 %v2927, %v2594
        %v2944 = vmul.f32 %v2929, %v2595
        %v2945 = vmul.f32 %v2929, %v2596
        %v2946 = vmul.f32 %v2931, %v2597
        %v2947 = vmul.f32 %v2931, %v2598
        %v2948 = vmul.f32 %v2933, %v2599
        %v2949 = vmul.f32 %v2933, %v2600
        %v2950 = vmul.f32 %v2935, %v2601
        %v2951 = vmul.f32 %v2935, %v2602
        %2952 = vst [vmem:[#allocation2] sm:$0xff] %v2936
        %2953 = vst [vmem:[#allocation2 + $0x8] sm:$0xff] %v2937
        %2954 = vst [vmem:[#allocation2 + $0x10] sm:$0xff] %v2938
        %2955 = vst [vmem:[#allocation2 + $0x18] sm:$0xff] %v2939
        %2956 = vst [vmem:[#allocation2 + $0x20] sm:$0xff] %v2940
        %2957 = vst [vmem:[#allocation2 + $0x28] sm:$0xff] %v2941
        %2958 = vst [vmem:[#allocation2 + $0x30] sm:$0xff] %v2942
        %2959 = vst [vmem:[#allocation2 + $0x38] sm:$0xff] %v2943
        %2960 = vst [vmem:[#allocation2 + $0x40] sm:$0xff] %v2944
        %2961 = vst [vmem:[#allocation2 + $0x48] sm:$0xff] %v2945
        %2962 = vst [vmem:[#allocation2 + $0x50] sm:$0xff] %v2946
        %2963 = vst [vmem:[#allocation2 + $0x58] sm:$0xff] %v2947
        %2964 = vst [vmem:[#allocation2 + $0x60] sm:$0xff] %v2948
        %2965 = vst [vmem:[#allocation2 + $0x68] sm:$0xff] %v2949
        %2966 = vst [vmem:[#allocation2 + $0x70] sm:$0xff] %v2950
        %2967 = vst [vmem:[#allocation2 + $0x78] sm:$0xff] %v2951
        %v2968 = vld [vmem:[#allocation2] sm:$0xff]
        %v2969 = vld [vmem:[#allocation2 + $0x8] sm:$0xff]
        %v2970 = vld [vmem:[#allocation2 + $0x10] sm:$0xff]
        %v2971 = vld [vmem:[#allocation2 + $0x18] sm:$0xff]
        %v2972 = vld [vmem:[#allocation2 + $0x20] sm:$0xff]
        %v2973 = vld [vmem:[#allocation2 + $0x28] sm:$0xff]
        %v2974 = vld [vmem:[#allocation2 + $0x30] sm:$0xff]
        %v2975 = vld [vmem:[#allocation2 + $0x38] sm:$0xff]
        %v2976 = vld [vmem:[#allocation2 + $0x40] sm:$0xff]
        %v2977 = vld [vmem:[#allocation2 + $0x48] sm:$0xff]
        %v2978 = vld [vmem:[#allocation2 + $0x50] sm:$0xff]
        %v2979 = vld [vmem:[#allocation2 + $0x58] sm:$0xff]
        %v2980 = vld [vmem:[#allocation2 + $0x60] sm:$0xff]
        %v2981 = vld [vmem:[#allocation2 + $0x68] sm:$0xff]
        %v2982 = vld [vmem:[#allocation2 + $0x70] sm:$0xff]
        %v2983 = vld [vmem:[#allocation2 + $0x78] sm:$0xff]
        %v2984 = vadd.f32 %v2968, %v2970
        %v2985 = vadd.f32 %v2984, %v2972
        %v2986 = vadd.f32 %v2985, %v2974
        %v2987 = vrot.slane %v2986, 4
        %v2988 = vadd.f32 %v2986, %v2987
        %v2989 = vrot.slane %v2988, 2
        %v2990 = vadd.f32 %v2988, %v2989
        %v2991 = vrot.slane %v2990, 1
        %v2992 = vadd.f32 %v2990, %v2991
        %v2993 = vadd.f32 %v2969, %v2971
        %v2994 = vadd.f32 %v2993, %v2973
        %v2995 = vadd.f32 %v2994, %v2975
        %v2996 = vrot.slane %v2995, 4
        %v2997 = vadd.f32 %v2995, %v2996
        %v2998 = vrot.slane %v2997, 2
        %v2999 = vadd.f32 %v2997, %v2998
        %v3000 = vrot.slane %v2999, 1
        %v3001 = vadd.f32 %v2999, %v3000
        %v3002 = vadd.f32 %v2976, %v2978
        %v3003 = vadd.f32 %v3002, %v2980
        %v3004 = vadd.f32 %v3003, %v2982
        %v3005 = vrot.slane %v3004, 4
        %v3006 = vadd.f32 %v3004, %v3005
        %v3007 = vrot.slane %v3006, 2
        %v3008 = vadd.f32 %v3006, %v3007
        %v3009 = vrot.slane %v3008, 1
        %v3010 = vadd.f32 %v3008, %v3009
        %v3011 = vadd.f32 %v2977, %v2979
        %v3012 = vadd.f32 %v3011, %v2981
        %v3013 = vadd.f32 %v3012, %v2983
        %v3014 = vrot.slane %v3013, 4
        %v3015 = vadd.f32 %v3013, %v3014
        %v3016 = vrot.slane %v3015, 2
        %v3017 = vadd.f32 %v3015, %v3016
        %v3018 = vrot.slane %v3017, 1
        %v3019 = vadd.f32 %v3017, %v3018
        %v3020 = vmul.f32 %v2992, 0.03125
        %v3021 = vmul.f32 %v3001, 0.03125
        %v3022 = vmul.f32 %v3010, 0.03125
        %v3023 = vmul.f32 %v3019, 0.03125
        %v3024 = vmax.f32 %v2968, %v2970
        %v3025 = vmax.f32 %v3024, %v2972
        %v3026 = vmax.f32 %v3025, %v2974
        %v3027 = vrot.slane %v3026, 4
        %v3028 = vmax.f32 %v3026, %v3027
        %v3029 = vrot.slane %v3028, 2
        %v3030 = vmax.f32 %v3028, %v3029
        %v3031 = vrot.slane %v3030, 1
        %v3032 = vmax.f32 %v3030, %v3031
        %v3033 = vmax.f32 %v2969, %v2971
        %v3034 = vmax.f32 %v3033, %v2973
        %v3035 = vmax.f32 %v3034, %v2975
        %v3036 = vrot.slane %v3035, 4
        %v3037 = vmax.f32 %v3035, %v3036
        %v3038 = vrot.slane %v3037, 2
        %v3039 = vmax.f32 %v3037, %v3038
        %v3040 = vrot.slane %v3039, 1
        %v3041 = vmax.f32 %v3039, %v3040
        %v3042 = vmax.f32 %v2976, %v2978
        %v3043 = vmax.f32 %v3042, %v2980
        %v3044 = vmax.f32 %v3043, %v2982
        %v3045 = vrot.slane %v3044, 4
        %v3046 = vmax.f32 %v3044, %v3045
        %v3047 = vrot.slane %v3046, 2
        %v3048 = vmax.f32 %v3046, %v3047
        %v3049 = vrot.slane %v3048, 1
        %v3050 = vmax.f32 %v3048, %v3049
        %v3051 = vmax.f32 %v2977, %v2979
        %v3052 = vmax.f32 %v3051, %v2981
        %v3053 = vmax.f32 %v3052, %v2983
        %v3054 = vrot.slane %v3053, 4
        %v3055 = vmax.f32 %v3053, %v3054
        %v3056 = vrot.slane %v3055, 2
        %v3057 = vmax.f32 %v3055, %v3056
        %v3058 = vrot.slane %v3057, 1
        %v3059 = vmax.f32 %v3057, %v3058
        %v3060 = vld [vmem:[%s5] sm:$0xff]
        %v3061 = vld [vmem:[%s5 + $0x8] sm:$0xff]
        %v3062 = vld [vmem:[%s5 + $0x10] sm:$0x1]
        %v3063 = vld [vmem:[%s5 + $0x18] sm:$0x1]
        %v3072 = vrot.slane %v3022, 7
        %vm3073 = vcmask 1041409
        %v3074 = vsel %vm3073, %v3072, %v3020
        %v3075 = vrot.slane %v3023, 7
        %v3076 = vsel %vm3073, %v3075, %v3021
        %v3077 = vrot.slane %v3050, 7
        %v3078 = vsel %vm3073, %v3077, %v3032
        %v3079 = vrot.slane %v3059, 7
        %v3080 = vsel %vm3073, %v3079, %v3041
        %3085 = vrot.lane.b32.xlu0 %v3074, 17
        %v3086 = vpop.permute.xlu0 %3085
        %3087 = vrot.lane.b32.xlu0 %v3078, 17
        %v3088 = vpop.permute.xlu0 %3087
        %3089 = vrot.lane.b32.xlu0 %v3076, 17
        %v3090 = vpop.permute.xlu0 %3089
        %3091 = vrot.lane.b32.xlu0 %v3080, 17
        %v3092 = vpop.permute.xlu0 %3091
        %v3093 = vlaneseq
        %v3094 = vand.u32 %v3093, 127
        %vm3095 = vcmp.lt.s32.totalorder %v3094, 17
        %v3096 = vsel %vm3095, %v3086, %v3090
        %v3097 = vsel %vm3095, %v3088, %v3092
        %v3098 = vsel %vm3095, %v3090, %v3086
        %v3099 = vsel %vm3095, %v3092, %v3088
        %s3100 = sld [smem:[#allocation3]]
        %v3101 = vstv %s3100
        %v3102 = vmul.f32 %v3101, %v3098
        %v3103 = vmul.f32 %v3101, %v3096
        %s3104 = sld [smem:[#allocation3 + $0x9]]
        %v3105 = vstv %s3104
        %v3106 = vmul.f32 %v3105, %v3099
        %v3107 = vmul.f32 %v3105, %v3097
        %v3108 = vadd.f32 %v3102, %v3106
        %v3109 = vadd.f32 %v3103, %v3107
        %v3110 = vlaneseq
        %v3111 = vshrl.u32 %v3110, 7
        %v3112 = vsub.s32 0, %v3111
        %v3113 = vrot.slane %v3060, %v3112
        %v3114 = vlaneseq
        %v3115 = vshrl.u32 %v3114, 7
        %v3116 = vsub.s32 0, %v3115
        %v3117 = vrot.slane %v3061, %v3116
        %v3118 = vmul.f32 %v3108, %v3113
        %v3119 = vmul.f32 %v3109, %v3117
        %v3120 = vadd.f32 %v3118, 0.0
        %v3121 = vadd.f32 %v3119, 0.0
        %3122 = vrot.lane.b32.xlu0 %v3074, 16
        %v3123 = vpop.permute.xlu0 %3122
        %3124 = vrot.lane.b32.xlu0 %v3078, 16
        %v3125 = vpop.permute.xlu0 %3124
        %3126 = vrot.lane.b32.xlu0 %v3076, 16
        %v3127 = vpop.permute.xlu0 %3126
        %3128 = vrot.lane.b32.xlu0 %v3080, 16
        %v3129 = vpop.permute.xlu0 %3128
        %vm3130 = vcmp.lt.s32.totalorder %v3094, 16
        %v3131 = vsel %vm3130, %v3123, %v3127
        %v3132 = vsel %vm3130, %v3125, %v3129
        %v3133 = vsel %vm3130, %v3127, %v3123
        %v3134 = vsel %vm3130, %v3129, %v3125
        %s3135 = sld [smem:[#allocation3 + $0x1]]
        %v3136 = vstv %s3135
        %v3137 = vmul.f32 %v3136, %v3133
        %v3138 = vmul.f32 %v3136, %v3131
        %s3139 = sld [smem:[#allocation3 + $0xa]]
        %v3140 = vstv %s3139
        %v3141 = vmul.f32 %v3140, %v3134
        %v3142 = vmul.f32 %v3140, %v3132
        %v3143 = vadd.f32 %v3137, %v3141
        %v3144 = vadd.f32 %v3138, %v3142
        %v3145 = vlaneseq
        %v3146 = vshrl.u32 %v3145, 7
        %v3147 = vsub.s32 1, %v3146
        %v3148 = vrot.slane %v3060, %v3147
        %v3149 = vlaneseq
        %v3150 = vshrl.u32 %v3149, 7
        %v3151 = vsub.s32 1, %v3150
        %v3152 = vrot.slane %v3061, %v3151
        %v3153 = vmul.f32 %v3143, %v3148
        %v3154 = vmul.f32 %v3144, %v3152
        %v3155 = vadd.f32 %v3120, %v3153
        %v3156 = vadd.f32 %v3121, %v3154
        %3157 = vrot.lane.b32.xlu0 %v3074, 15
        %v3158 = vpop.permute.xlu0 %3157
        %3159 = vrot.lane.b32.xlu0 %v3078, 15
        %v3160 = vpop.permute.xlu0 %3159
        %3161 = vrot.lane.b32.xlu0 %v3076, 15
        %v3162 = vpop.permute.xlu0 %3161
        %3163 = vrot.lane.b32.xlu0 %v3080, 15
        %v3164 = vpop.permute.xlu0 %3163
        %vm3165 = vcmp.lt.s32.totalorder %v3094, 15
        %v3166 = vsel %vm3165, %v3158, %v3162
        %v3167 = vsel %vm3165, %v3160, %v3164
        %v3168 = vsel %vm3165, %v3162, %v3158
        %v3169 = vsel %vm3165, %v3164, %v3160
        %s3170 = sld [smem:[#allocation3 + $0x2]]
        %v3171 = vstv %s3170
        %v3172 = vmul.f32 %v3171, %v3168
        %v3173 = vmul.f32 %v3171, %v3166
        %s3174 = sld [smem:[#allocation3 + $0xb]]
        %v3175 = vstv %s3174
        %v3176 = vmul.f32 %v3175, %v3169
        %v3177 = vmul.f32 %v3175, %v3167
        %v3178 = vadd.f32 %v3172, %v3176
        %v3179 = vadd.f32 %v3173, %v3177
        %v3180 = vlaneseq
        %v3181 = vshrl.u32 %v3180, 7
        %v3182 = vsub.s32 2, %v3181
        %v3183 = vrot.slane %v3060, %v3182
        %v3184 = vlaneseq
        %v3185 = vshrl.u32 %v3184, 7
        %v3186 = vsub.s32 2, %v3185
        %v3187 = vrot.slane %v3061, %v3186
        %v3188 = vmul.f32 %v3178, %v3183
        %v3189 = vmul.f32 %v3179, %v3187
        %v3190 = vadd.f32 %v3155, %v3188
        %v3191 = vadd.f32 %v3156, %v3189
        %3192 = vrot.lane.b32.xlu0 %v3074, 1
        %v3193 = vpop.permute.xlu0 %3192
        %3194 = vrot.lane.b32.xlu0 %v3078, 1
        %v3195 = vpop.permute.xlu0 %3194
        %3196 = vrot.lane.b32.xlu0 %v3076, 1
        %v3197 = vpop.permute.xlu0 %3196
        %3198 = vrot.lane.b32.xlu0 %v3080, 1
        %v3199 = vpop.permute.xlu0 %3198
        %vm3200 = vcmp.lt.s32.totalorder %v3094, 1
        %v3201 = vsel %vm3200, %v3193, %v3197
        %v3202 = vsel %vm3200, %v3195, %v3199
        %v3203 = vsel %vm3200, %v3197, %v3193
        %v3204 = vsel %vm3200, %v3199, %v3195
        %s3205 = sld [smem:[#allocation3 + $0x3]]
        %v3206 = vstv %s3205
        %v3207 = vmul.f32 %v3206, %v3203
        %v3208 = vmul.f32 %v3206, %v3201
        %s3209 = sld [smem:[#allocation3 + $0xc]]
        %v3210 = vstv %s3209
        %v3211 = vmul.f32 %v3210, %v3204
        %v3212 = vmul.f32 %v3210, %v3202
        %v3213 = vadd.f32 %v3207, %v3211
        %v3214 = vadd.f32 %v3208, %v3212
        %v3215 = vlaneseq
        %v3216 = vshrl.u32 %v3215, 7
        %v3217 = vsub.s32 3, %v3216
        %v3218 = vrot.slane %v3060, %v3217
        %v3219 = vlaneseq
        %v3220 = vshrl.u32 %v3219, 7
        %v3221 = vsub.s32 3, %v3220
        %v3222 = vrot.slane %v3061, %v3221
        %v3223 = vmul.f32 %v3213, %v3218
        %v3224 = vmul.f32 %v3214, %v3222
        %v3225 = vadd.f32 %v3190, %v3223
        %v3226 = vadd.f32 %v3191, %v3224
        %s3227 = sld [smem:[#allocation3 + $0x4]]
        %v3228 = vstv %s3227
        %v3229 = vmul.f32 %v3228, %v3020
        %v3230 = vmul.f32 %v3228, %v3021
        %v3231 = vmul.f32 %v3228, %v3022
        %v3232 = vmul.f32 %v3228, %v3023
        %s3233 = sld [smem:[#allocation3 + $0xd]]
        %v3234 = vstv %s3233
        %v3235 = vmul.f32 %v3234, %v3032
        %v3236 = vmul.f32 %v3234, %v3041
        %v3237 = vmul.f32 %v3234, %v3050
        %v3238 = vmul.f32 %v3234, %v3059
        %v3239 = vadd.f32 %v3229, %v3235
        %v3240 = vadd.f32 %v3230, %v3236
        %v3241 = vadd.f32 %v3231, %v3237
        %v3242 = vadd.f32 %v3232, %v3238
        %v3247 = vrot.slane %v3241, 7
        %v3248 = vsel %vm3073, %v3247, %v3239
        %v3249 = vrot.slane %v3242, 7
        %v3250 = vsel %vm3073, %v3249, %v3240
        %v3253 = vadd.f32 %v3225, %v3248
        %v3254 = vadd.f32 %v3226, %v3250
        %3255 = vrot.lane.b32.xlu0 %v3074, 127
        %v3256 = vpop.permute.xlu0 %3255
        %3257 = vrot.lane.b32.xlu0 %v3078, 127
        %v3258 = vpop.permute.xlu0 %3257
        %3259 = vrot.lane.b32.xlu0 %v3076, 127
        %v3260 = vpop.permute.xlu0 %3259
        %3261 = vrot.lane.b32.xlu0 %v3080, 127
        %v3262 = vpop.permute.xlu0 %3261
        %vm3263 = vcmp.lt.s32.totalorder %v3094, 127
        %v3264 = vsel %vm3263, %v3256, %v3260
        %v3265 = vsel %vm3263, %v3258, %v3262
        %v3266 = vsel %vm3263, %v3260, %v3256
        %v3267 = vsel %vm3263, %v3262, %v3258
        %s3268 = sld [smem:[#allocation3 + $0x5]]
        %v3269 = vstv %s3268
        %v3270 = vmul.f32 %v3269, %v3264
        %v3271 = vmul.f32 %v3269, %v3266
        %s3272 = sld [smem:[#allocation3 + $0xe]]
        %v3273 = vstv %s3272
        %v3274 = vmul.f32 %v3273, %v3265
        %v3275 = vmul.f32 %v3273, %v3267
        %v3276 = vadd.f32 %v3270, %v3274
        %v3277 = vadd.f32 %v3271, %v3275
        %v3278 = vlaneseq
        %v3279 = vshrl.u32 %v3278, 7
        %v3280 = vsub.s32 5, %v3279
        %v3281 = vrot.slane %v3060, %v3280
        %v3282 = vlaneseq
        %v3283 = vshrl.u32 %v3282, 7
        %v3284 = vsub.s32 5, %v3283
        %v3285 = vrot.slane %v3061, %v3284
        %v3286 = vmul.f32 %v3276, %v3281
        %v3287 = vmul.f32 %v3277, %v3285
        %v3288 = vadd.f32 %v3253, %v3286
        %v3289 = vadd.f32 %v3254, %v3287
        %3290 = vrot.lane.b32.xlu0 %v3074, 113
        %v3291 = vpop.permute.xlu0 %3290
        %3292 = vrot.lane.b32.xlu0 %v3078, 113
        %v3293 = vpop.permute.xlu0 %3292
        %3294 = vrot.lane.b32.xlu0 %v3076, 113
        %v3295 = vpop.permute.xlu0 %3294
        %3296 = vrot.lane.b32.xlu0 %v3080, 113
        %v3297 = vpop.permute.xlu0 %3296
        %vm3298 = vcmp.lt.s32.totalorder %v3094, 113
        %v3299 = vsel %vm3298, %v3291, %v3295
        %v3300 = vsel %vm3298, %v3293, %v3297
        %v3301 = vsel %vm3298, %v3295, %v3291
        %v3302 = vsel %vm3298, %v3297, %v3293
        %s3303 = sld [smem:[#allocation3 + $0x6]]
        %v3304 = vstv %s3303
        %v3305 = vmul.f32 %v3304, %v3299
        %v3306 = vmul.f32 %v3304, %v3301
        %s3307 = sld [smem:[#allocation3 + $0xf]]
        %v3308 = vstv %s3307
        %v3309 = vmul.f32 %v3308, %v3300
        %v3310 = vmul.f32 %v3308, %v3302
        %v3311 = vadd.f32 %v3305, %v3309
        %v3312 = vadd.f32 %v3306, %v3310
        %v3313 = vlaneseq
        %v3314 = vshrl.u32 %v3313, 7
        %v3315 = vsub.s32 6, %v3314
        %v3316 = vrot.slane %v3060, %v3315
        %v3317 = vlaneseq
        %v3318 = vshrl.u32 %v3317, 7
        %v3319 = vsub.s32 6, %v3318
        %v3320 = vrot.slane %v3061, %v3319
        %v3321 = vmul.f32 %v3311, %v3316
        %v3322 = vmul.f32 %v3312, %v3320
        %v3323 = vadd.f32 %v3288, %v3321
        %v3324 = vadd.f32 %v3289, %v3322
        %3325 = vrot.lane.b32.xlu0 %v3074, 112
        %v3326 = vpop.permute.xlu0 %3325
        %3327 = vrot.lane.b32.xlu0 %v3078, 112
        %v3328 = vpop.permute.xlu0 %3327
        %3329 = vrot.lane.b32.xlu0 %v3076, 112
        %v3330 = vpop.permute.xlu0 %3329
        %3331 = vrot.lane.b32.xlu0 %v3080, 112
        %v3332 = vpop.permute.xlu0 %3331
        %vm3333 = vcmp.lt.s32.totalorder %v3094, 112
        %v3334 = vsel %vm3333, %v3326, %v3330
        %v3335 = vsel %vm3333, %v3328, %v3332
        %v3336 = vsel %vm3333, %v3330, %v3326
        %v3337 = vsel %vm3333, %v3332, %v3328
        %s3338 = sld [smem:[#allocation3 + $0x7]]
        %v3339 = vstv %s3338
        %v3340 = vmul.f32 %v3339, %v3334
        %v3341 = vmul.f32 %v3339, %v3336
        %s3342 = sld [smem:[#allocation3 + $0x10]]
        %v3343 = vstv %s3342
        %v3344 = vmul.f32 %v3343, %v3335
        %v3345 = vmul.f32 %v3343, %v3337
        %v3346 = vadd.f32 %v3340, %v3344
        %v3347 = vadd.f32 %v3341, %v3345
        %v3348 = vlaneseq
        %v3349 = vshrl.u32 %v3348, 7
        %v3350 = vsub.s32 7, %v3349
        %v3351 = vrot.slane %v3060, %v3350
        %v3352 = vlaneseq
        %v3353 = vshrl.u32 %v3352, 7
        %v3354 = vsub.s32 7, %v3353
        %v3355 = vrot.slane %v3061, %v3354
        %v3356 = vmul.f32 %v3346, %v3351
        %v3357 = vmul.f32 %v3347, %v3355
        %v3358 = vadd.f32 %v3323, %v3356
        %v3359 = vadd.f32 %v3324, %v3357
        %3360 = vrot.lane.b32.xlu0 %v3074, 111
        %v3361 = vpop.permute.xlu0 %3360
        %3362 = vrot.lane.b32.xlu0 %v3078, 111
        %v3363 = vpop.permute.xlu0 %3362
        %3364 = vrot.lane.b32.xlu0 %v3076, 111
        %v3365 = vpop.permute.xlu0 %3364
        %3366 = vrot.lane.b32.xlu0 %v3080, 111
        %v3367 = vpop.permute.xlu0 %3366
        %vm3368 = vcmp.lt.s32.totalorder %v3094, 111
        %v3369 = vsel %vm3368, %v3361, %v3365
        %v3370 = vsel %vm3368, %v3363, %v3367
        %v3371 = vsel %vm3368, %v3365, %v3361
        %v3372 = vsel %vm3368, %v3367, %v3363
        %s3373 = sld [smem:[#allocation3 + $0x8]]
        %v3374 = vstv %s3373
        %v3375 = vmul.f32 %v3374, %v3369
        %v3376 = vmul.f32 %v3374, %v3371
        %s3377 = sld [smem:[#allocation3 + $0x11]]
        %v3378 = vstv %s3377
        %v3379 = vmul.f32 %v3378, %v3370
        %v3380 = vmul.f32 %v3378, %v3372
        %v3381 = vadd.f32 %v3375, %v3379
        %v3382 = vadd.f32 %v3376, %v3380
        %v3383 = vlaneseq
        %v3384 = vshrl.u32 %v3383, 7
        %v3385 = vsub.s32 0, %v3384
        %v3386 = vrot.slane %v3062, %v3385
        %v3387 = vlaneseq
        %v3388 = vshrl.u32 %v3387, 7
        %v3389 = vsub.s32 0, %v3388
        %v3390 = vrot.slane %v3063, %v3389
        %v3391 = vmul.f32 %v3381, %v3386
        %v3392 = vmul.f32 %v3382, %v3390
        %v3393 = vadd.f32 %v3358, %v3391
        %v3394 = vadd.f32 %v3359, %v3392
        %v3395 = vxor.u32 %v3393, 2147483648
        %v3396 = vxor.u32 %v3394, 2147483648
        %v3397 = vmul.f32 %v3395, 1.442695
        %v3398 = vpow.pop %v3397
        %v3399 = vmul.f32 %v3396, 1.442695
        %v3400 = vpow.pop %v3399
        %v3401 = vadd.f32 %v3398, 1.0
        %v3402 = vadd.f32 %v3400, 1.0
        %v3403 = vrcp.pop %v3401
        %v3404 = vmul.f32 1.0, %v3403
        %v3405 = vrcp.pop %v3402
        %v3406 = vmul.f32 1.0, %v3405
        %v3409 = vcombine.low %v3404, %v3406
        %v3411 = vunpack.c.l.s4 1966171168
        %v3412 = vunpack.c.0.s8 %v3411
        %v3413 = vlaneseq
        %v3414 = vshrl.u32 %v3413, 7
        %v3415 = vsub.s32 %v3412, %v3414
        %v3416 = vrot.slane %v3409, %v3415
        %v3417 = vcombine.high %v3416, %v3416
        %v3419 = vunpack.c.l.s4 1966171168
        %v3420 = vunpack.c.0.s8 %v3419
        %v3421 = vlaneseq
        %v3422 = vshrl.u32 %v3421, 7
        %v3423 = vsub.s32 %v3420, %v3422
        %v3424 = vrot.slane %v3416, %v3423
        %v3426 = vunpack.c.l.s4 1966171168
        %v3427 = vunpack.c.0.s8 %v3426
        %v3428 = vlaneseq
        %v3429 = vshrl.u32 %v3428, 7
        %v3430 = vsub.s32 %v3427, %v3429
        %v3431 = vrot.slane %v3417, %v3430
        %v3432 = vlaneseq
        %v3433 = vshrl.u32 %v3432, 7
        %v3434 = vsub.s32 0, %v3433
        %v3435 = vrot.slane %v3424, %v3434
        %v3436 = vlaneseq
        %v3437 = vshrl.u32 %v3436, 7
        %v3438 = vsub.s32 1, %v3437
        %v3439 = vrot.slane %v3424, %v3438
        %v3440 = vlaneseq
        %v3441 = vshrl.u32 %v3440, 7
        %v3442 = vsub.s32 0, %v3441
        %v3443 = vrot.slane %v3431, %v3442
        %v3444 = vlaneseq
        %v3445 = vshrl.u32 %v3444, 7
        %v3446 = vsub.s32 1, %v3445
        %v3447 = vrot.slane %v3431, %v3446
        %v3452 = vmul.f32 %v3435, %v2968
        %v3453 = vmul.f32 %v3439, %v2969
        %v3454 = vmul.f32 %v3435, %v2970
        %v3455 = vmul.f32 %v3439, %v2971
        %v3456 = vmul.f32 %v3435, %v2972
        %v3457 = vmul.f32 %v3439, %v2973
        %v3458 = vmul.f32 %v3435, %v2974
        %v3459 = vmul.f32 %v3439, %v2975
        %v3460 = vmul.f32 %v3443, %v2976
        %v3461 = vmul.f32 %v3447, %v2977
        %v3462 = vmul.f32 %v3443, %v2978
        %v3463 = vmul.f32 %v3447, %v2979
        %v3464 = vmul.f32 %v3443, %v2980
        %v3465 = vmul.f32 %v3447, %v2981
        %v3466 = vmul.f32 %v3443, %v2982
        %v3467 = vmul.f32 %v3447, %v2983
        %v3468 = vld [vmem:[%s291] sm:$0xff]
        %v3469 = vld [vmem:[%s291 + $0x8] sm:$0xff]
        %v3470 = vld [vmem:[%s291 + $0x10] sm:$0xff]
        %v3471 = vld [vmem:[%s291 + $0x18] sm:$0xff]
        %v3472 = vld [vmem:[%s291 + $0x20] sm:$0xff]
        %v3473 = vld [vmem:[%s291 + $0x28] sm:$0xff]
        %v3474 = vld [vmem:[%s291 + $0x30] sm:$0xff]
        %v3475 = vld [vmem:[%s291 + $0x38] sm:$0xff]
        %v3476 = vld [vmem:[%s291 + $0x40] sm:$0xff]
        %v3477 = vld [vmem:[%s291 + $0x48] sm:$0xff]
        %v3478 = vld [vmem:[%s291 + $0x50] sm:$0xff]
        %v3479 = vld [vmem:[%s291 + $0x58] sm:$0xff]
        %v3480 = vld [vmem:[%s291 + $0x60] sm:$0xff]
        %v3481 = vld [vmem:[%s291 + $0x68] sm:$0xff]
        %v3482 = vld [vmem:[%s291 + $0x70] sm:$0xff]
        %v3483 = vld [vmem:[%s291 + $0x78] sm:$0xff]
        %v3484 = vlaneseq
        %v3485 = vshrl.u32 %v3484, 7
        %v3486 = vsub.s32 1, %v3485
        %v3487 = vrot.slane %v2577, %v3486
        %v3488 = vlaneseq
        %v3489 = vshrl.u32 %v3488, 7
        %v3490 = vsub.s32 1, %v3489
        %v3491 = vrot.slane %v2578, %v3490
        %v3492 = vmul.f32 %v3487, %v3468
        %v3493 = vmul.f32 %v3487, %v3469
        %v3494 = vmul.f32 %v3487, %v3470
        %v3495 = vmul.f32 %v3487, %v3471
        %v3496 = vmul.f32 %v3487, %v3472
        %v3497 = vmul.f32 %v3487, %v3473
        %v3498 = vmul.f32 %v3487, %v3474
        %v3499 = vmul.f32 %v3487, %v3475
        %v3500 = vmul.f32 %v3491, %v3476
        %v3501 = vmul.f32 %v3491, %v3477
        %v3502 = vmul.f32 %v3491, %v3478
        %v3503 = vmul.f32 %v3491, %v3479
        %v3504 = vmul.f32 %v3491, %v3480
        %v3505 = vmul.f32 %v3491, %v3481
        %v3506 = vmul.f32 %v3491, %v3482
        %v3507 = vmul.f32 %v3491, %v3483
        %v3508 = vadd.f32 %v3452, %v3492
        %v3509 = vadd.f32 %v3453, %v3493
        %v3510 = vadd.f32 %v3454, %v3494
        %v3511 = vadd.f32 %v3455, %v3495
        %v3512 = vadd.f32 %v3456, %v3496
        %v3513 = vadd.f32 %v3457, %v3497
        %v3514 = vadd.f32 %v3458, %v3498
        %v3515 = vadd.f32 %v3459, %v3499
        %v3516 = vadd.f32 %v3460, %v3500
        %v3517 = vadd.f32 %v3461, %v3501
        %v3518 = vadd.f32 %v3462, %v3502
        %v3519 = vadd.f32 %v3463, %v3503
        %v3520 = vadd.f32 %v3464, %v3504
        %v3521 = vadd.f32 %v3465, %v3505
        %v3522 = vadd.f32 %v3466, %v3506
        %v3523 = vadd.f32 %v3467, %v3507
        %3524 = vst [vmem:[%s325] sm:$0xff] %v3508
        %3525 = vst [vmem:[%s325 + $0x8] sm:$0xff] %v3509
        %3526 = vst [vmem:[%s325 + $0x10] sm:$0xff] %v3510
        %3527 = vst [vmem:[%s325 + $0x18] sm:$0xff] %v3511
        %3528 = vst [vmem:[%s325 + $0x20] sm:$0xff] %v3512
        %3529 = vst [vmem:[%s325 + $0x28] sm:$0xff] %v3513
        %3530 = vst [vmem:[%s325 + $0x30] sm:$0xff] %v3514
        %3531 = vst [vmem:[%s325 + $0x38] sm:$0xff] %v3515
        %3532 = vst [vmem:[%s325 + $0x40] sm:$0xff] %v3516
        %3533 = vst [vmem:[%s325 + $0x48] sm:$0xff] %v3517
        %3534 = vst [vmem:[%s325 + $0x50] sm:$0xff] %v3518
        %3535 = vst [vmem:[%s325 + $0x58] sm:$0xff] %v3519
        %3536 = vst [vmem:[%s325 + $0x60] sm:$0xff] %v3520
        %3537 = vst [vmem:[%s325 + $0x68] sm:$0xff] %v3521
        %3538 = vst [vmem:[%s325 + $0x70] sm:$0xff] %v3522
        %3539 = vst [vmem:[%s325 + $0x78] sm:$0xff] %v3523
        %s3540 = sand.u32 %s171, 1
        %s3541 = scalar_lea.sflag [#allocation5], %s3540
        %s3542 = sand.u32 %s171, 1
        %s3543 = smul.addr %s3542, 128
        %s3544 = scalar_lea.vmem [#allocation10], %s3543
        // Predicated region
        $region57: #{tpu_custom_call.1} parent=43 // pred_check
          %p3545 = pneg %p181
        $region58: #{tpu_custom_call.1} parent=43 // pred_check_branch
          %3547 = sbr.rel (%p3545) target = $region60
        $region59: #{tpu_custom_call.1} parent=43 // pred_region
          %s3548 = smul.u32 2, %s27
          %s3550 = ssub.s32 2048, 2048
          %3551 = vsyncadd %s3541, %s3550
          %s3552 = smul.addr %s3548, 8
          %s3553 = smul.addr %s3552, 128
          %s3554 = scalar_lea.hbm %s6, %s3553
          %s3555 = sshll.u32 %s3544, 4
          %s3556 = int_to_ptr.vmem [resolvable:$true] %s3555
          %3561 = dma.vmem_to_hbm [thread:$0]  %s3556, 2048, %s3554, %s3541, 256, 256, 16
        $region60: #{tpu_custom_call.1} parent=43 // pred_fallthru
          _
      $region44: #{tpu_custom_call.1} parent=5 // pred_fallthru
        _
      %p3562 = scmp.le.s32.totalorder 2, %s22
      // Predicated region
      $region61: #{tpu_custom_call.1} parent=5 // pred_check
        %p3563 = pneg %p3562
      $region62: #{tpu_custom_call.1} parent=5 // pred_check_branch
        %3565 = sbr.rel (%p3563) target = $region64
      $region63: #{tpu_custom_call.1} parent=5 // pred_region
        %s3566 = ssub.s32 %s22, 2
        // Predicated region
        $region65: #{tpu_custom_call.1} parent=63 // pred_check
          %p3567 = pneg %p187
        $region66: #{tpu_custom_call.1} parent=63 // pred_check_branch
          %3569 = sbr.rel (%p3567) target = $region68
        $region67: #{tpu_custom_call.1} parent=63 // pred_region
          %s3570 = sand.u32 %s172, 1
          %s3571 = scalar_lea.sflag [#allocation5], %s3570
          %s3572 = sand.u32 %s172, 1
          %s3573 = smul.addr %s3572, 128
          %s3574 = scalar_lea.vmem [#allocation10], %s3573
          %3575 = dma.done %s3571, 2048
        $region68: #{tpu_custom_call.1} parent=63 // pred_fallthru
          _
      $region64: #{tpu_custom_call.1} parent=5 // pred_fallthru
        _
    $region6: #{tpu_custom_call.1} parent=1 // loop_footer
      %s26 = sadd.s32 1, %s22
    $region7: #{tpu_custom_call.1} parent=1 // loop_footer_branch
      %21 = sbr.rel target = $region3
    $region8: #{tpu_custom_call.1} parent=1 // loop_exit
      _
    %3576 = vsyncpa [#allocation4], 1
    %s3577 = scalar_lea.sflag [#allocation4], 1
    %3578 = vsyncpa %s3577, 1
    %3579 = vsyncpa [#allocation9], 1
    %s3580 = scalar_lea.sflag [#allocation9], 1
    %3581 = vsyncpa %s3580, 1
    %3582 = vsyncpa [#allocation5], 1
    %s3583 = scalar_lea.sflag [#allocation5], 1
    %3584 = vsyncpa %s3583, 1
    %3585 = vsyncpa [#allocation6], 1
    %s3586 = scalar_lea.sflag [#allocation6], 1
    %3587 = vsyncpa %s3586, 1

</llo_original>
